<compile_context>
chip_gen: v7x
topology: tpu7x:2x2x1
jax: 0.10.0
libtpu: 0.0.40
codegen_flags: <defaults>
</compile_context>

<pallas_src>
import functools

import jax
import jax.numpy as jnp
from jax.experimental import pallas as pl
from jax.experimental.pallas import tpu as pltpu


def _round_up(x, m):
    return (x + m - 1) // m * m


def _shuffle_kernel(x_ref, o_ref, *, groups, cpg):
    # x_ref / o_ref: (1, C, T) VMEM blocks.  out[c_out] = in[(c_out % groups)*cpg
    # + c_out // groups], matching torch.view/transpose/view semantics.
    for c_out in range(groups * cpg):
        c_in = (c_out % groups) * cpg + (c_out // groups)
        o_ref[0, c_out:c_out + 1, :] = x_ref[0, c_in:c_in + 1, :]


def channel_shuffle_pallas(x, groups=4):
    """NCHW channel shuffle, identical to the PyTorch module's forward."""
    B, C, H, W = x.shape
    assert C % groups == 0
    cpg = C // groups
    HW = H * W

    xf = x.reshape(B, C, HW)
    HWp = _round_up(HW, 128)                 # lane-dense last dim
    if HWp != HW:
        xf = jnp.pad(xf, ((0, 0), (0, 0), (0, HWp - HW)))

    # Largest spatial tile (multiple of 128 dividing HWp) up to 2048 lanes.
    T = 128
    for cand in (2048, 1024, 512, 256, 128):
        if HWp % cand == 0:
            T = cand
            break

    kernel = functools.partial(_shuffle_kernel, groups=groups, cpg=cpg)
    out = pl.pallas_call(
        kernel,
        out_shape=jax.ShapeDtypeStruct((B, C, HWp), xf.dtype),
        grid=(B, HWp // T),
        in_specs=[pl.BlockSpec((1, C, T), lambda b, j: (b, 0, j))],
        out_specs=pl.BlockSpec((1, C, T), lambda b, j: (b, 0, j)),
        compiler_params=pltpu.CompilerParams(
            dimension_semantics=("parallel", "parallel")),
    )(xf)

    if HWp != HW:
        out = out[:, :, :HW]
    return out.reshape(B, C, H, W)


def channel_shuffle_ref(x, groups=4):
    # Pure-JAX reference mirroring the PyTorch view/transpose/view.
    B, C, H, W = x.shape
    cpg = C // groups
    return (x.reshape(B, groups, cpg, H, W)
             .transpose(0, 2, 1, 3, 4)
             .reshape(B, C, H, W))


if __name__ == "__main__":
    key = jax.random.PRNGKey(0)
    # Shapes consistent with the module's use in ca_net_dct.py: the DCT feature
    # map (B, 192, 8, 8) is shuffled with groups=4.
    x = jax.random.normal(key, (2, 192, 8, 8), jnp.float32)

    shuffle = jax.jit(functools.partial(channel_shuffle_pallas, groups=4))
    out = shuffle(x)
    jax.block_until_ready(out)

    ref = channel_shuffle_ref(x, groups=4)
    assert out.shape == ref.shape
    assert bool(jnp.all(out == ref)), "channel_shuffle mismatch vs reference"
    print("KERNEL_OK")
</pallas_src>

<mosaic_0001>
module attributes {stable_mosaic.version = 11 : i64} {
  func.func @_shuffle_kernel(%arg0: i32, %arg1: i32, %arg2: memref<1x192x128xf32, #tpu.memory_space<vmem>>, %arg3: memref<1x192x128xf32, #tpu.memory_space<vmem>>) attributes {dimension_semantics = [#tpu.dimension_semantics<parallel>, #tpu.dimension_semantics<parallel>], iteration_bounds = array<i64: 2, 1>, scalar_prefetch = 0 : i64, scratch_operands = 0 : i64, tpu.core_type = #tpu.core_type<tc>, window_params = [{transform_indices = @transform_0, window_bounds = array<i64: 1, 192, 128>}, {transform_indices = @transform_1, window_bounds = array<i64: 1, 192, 128>}]} {
    %c0 = arith.constant 0 : index
    %c0_0 = arith.constant 0 : index
    %c0_1 = arith.constant 0 : index
    %0 = vector.load %arg2[%c0, %c0_0, %c0_1] : memref<1x192x128xf32, #tpu.memory_space<vmem>>, vector<1x1x128xf32>
    %1 = vector.shape_cast %0 : vector<1x1x128xf32> to vector<1x128xf32>
    %c0_2 = arith.constant 0 : index
    %c0_3 = arith.constant 0 : index
    %c0_4 = arith.constant 0 : index
    %2 = vector.load %arg3[%c0_2, %c0_3, %c0_4] : memref<1x192x128xf32, #tpu.memory_space<vmem>>, vector<1x1x128xf32>
    %3 = vector.shape_cast %2 : vector<1x1x128xf32> to vector<1x128xf32>
    %4 = vector.shape_cast %1 : vector<1x128xf32> to vector<1x1x128xf32>
    tpu.vector_store %arg3[%c0_2, %c0_3, %c0_4], %4 {strides = array<i32>} : memref<1x192x128xf32, #tpu.memory_space<vmem>>, vector<1x1x128xf32>,
    %c0_5 = arith.constant 0 : index
    %c48 = arith.constant 48 : index
    %c0_6 = arith.constant 0 : index
    %5 = vector.load %arg2[%c0_5, %c48, %c0_6] : memref<1x192x128xf32, #tpu.memory_space<vmem>>, vector<1x1x128xf32>
    %6 = vector.shape_cast %5 : vector<1x1x128xf32> to vector<1x128xf32>
    %c0_7 = arith.constant 0 : index
    %c1 = arith.constant 1 : index
    %c0_8 = arith.constant 0 : index
    %7 = vector.load %arg3[%c0_7, %c1, %c0_8] : memref<1x192x128xf32, #tpu.memory_space<vmem>>, vector<1x1x128xf32>
    %8 = vector.shape_cast %7 : vector<1x1x128xf32> to vector<1x128xf32>
    %9 = vector.shape_cast %6 : vector<1x128xf32> to vector<1x1x128xf32>
    tpu.vector_store %arg3[%c0_7, %c1, %c0_8], %9 {strides = array<i32>} : memref<1x192x128xf32, #tpu.memory_space<vmem>>, vector<1x1x128xf32>,
    %c0_9 = arith.constant 0 : index
    %c96 = arith.constant 96 : index
    %c0_10 = arith.constant 0 : index
    %10 = vector.load %arg2[%c0_9, %c96, %c0_10] : memref<1x192x128xf32, #tpu.memory_space<vmem>>, vector<1x1x128xf32>
    %11 = vector.shape_cast %10 : vector<1x1x128xf32> to vector<1x128xf32>
    %c0_11 = arith.constant 0 : index
    %c2 = arith.constant 2 : index
    %c0_12 = arith.constant 0 : index
    %12 = vector.load %arg3[%c0_11, %c2, %c0_12] : memref<1x192x128xf32, #tpu.memory_space<vmem>>, vector<1x1x128xf32>
    %13 = vector.shape_cast %12 : vector<1x1x128xf32> to vector<1x128xf32>
    %14 = vector.shape_cast %11 : vector<1x128xf32> to vector<1x1x128xf32>
    tpu.vector_store %arg3[%c0_11, %c2, %c0_12], %14 {strides = array<i32>} : memref<1x192x128xf32, #tpu.memory_space<vmem>>, vector<1x1x128xf32>,
    %c0_13 = arith.constant 0 : index
    %c144 = arith.constant 144 : index
    %c0_14 = arith.constant 0 : index
    %15 = vector.load %arg2[%c0_13, %c144, %c0_14] : memref<1x192x128xf32, #tpu.memory_space<vmem>>, vector<1x1x128xf32>
    %16 = vector.shape_cast %15 : vector<1x1x128xf32> to vector<1x128xf32>
    %c0_15 = arith.constant 0 : index
    %c3 = arith.constant 3 : index
    %c0_16 = arith.constant 0 : index
    %17 = vector.load %arg3[%c0_15, %c3, %c0_16] : memref<1x192x128xf32, #tpu.memory_space<vmem>>, vector<1x1x128xf32>
    %18 = vector.shape_cast %17 : vector<1x1x128xf32> to vector<1x128xf32>
    %19 = vector.shape_cast %16 : vector<1x128xf32> to vector<1x1x128xf32>
    tpu.vector_store %arg3[%c0_15, %c3, %c0_16], %19 {strides = array<i32>} : memref<1x192x128xf32, #tpu.memory_space<vmem>>, vector<1x1x128xf32>,
    %c0_17 = arith.constant 0 : index
    %c1_18 = arith.constant 1 : index
    %c0_19 = arith.constant 0 : index
    %20 = vector.load %arg2[%c0_17, %c1_18, %c0_19] : memref<1x192x128xf32, #tpu.memory_space<vmem>>, vector<1x1x128xf32>
    %21 = vector.shape_cast %20 : vector<1x1x128xf32> to vector<1x128xf32>
    %c0_20 = arith.constant 0 : index
    %c4 = arith.constant 4 : index
    %c0_21 = arith.constant 0 : index
    %22 = vector.load %arg3[%c0_20, %c4, %c0_21] : memref<1x192x128xf32, #tpu.memory_space<vmem>>, vector<1x1x128xf32>
    %23 = vector.shape_cast %22 : vector<1x1x128xf32> to vector<1x128xf32>
    %24 = vector.shape_cast %21 : vector<1x128xf32> to vector<1x1x128xf32>
    tpu.vector_store %arg3[%c0_20, %c4, %c0_21], %24 {strides = array<i32>} : memref<1x192x128xf32, #tpu.memory_space<vmem>>, vector<1x1x128xf32>,
    %c0_22 = arith.constant 0 : index
    %c49 = arith.constant 49 : index
    %c0_23 = arith.constant 0 : index
    %25 = vector.load %arg2[%c0_22, %c49, %c0_23] : memref<1x192x128xf32, #tpu.memory_space<vmem>>, vector<1x1x128xf32>
    %26 = vector.shape_cast %25 : vector<1x1x128xf32> to vector<1x128xf32>
    %c0_24 = arith.constant 0 : index
    %c5 = arith.constant 5 : index
    %c0_25 = arith.constant 0 : index
    %27 = vector.load %arg3[%c0_24, %c5, %c0_25] : memref<1x192x128xf32, #tpu.memory_space<vmem>>, vector<1x1x128xf32>
    %28 = vector.shape_cast %27 : vector<1x1x128xf32> to vector<1x128xf32>
    %29 = vector.shape_cast %26 : vector<1x128xf32> to vector<1x1x128xf32>
    tpu.vector_store %arg3[%c0_24, %c5, %c0_25], %29 {strides = array<i32>} : memref<1x192x128xf32, #tpu.memory_space<vmem>>, vector<1x1x128xf32>,
    %c0_26 = arith.constant 0 : index
    %c97 = arith.constant 97 : index
    %c0_27 = arith.constant 0 : index
    %30 = vector.load %arg2[%c0_26, %c97, %c0_27] : memref<1x192x128xf32, #tpu.memory_space<vmem>>, vector<1x1x128xf32>
    %31 = vector.shape_cast %30 : vector<1x1x128xf32> to vector<1x128xf32>
    %c0_28 = arith.constant 0 : index
    %c6 = arith.constant 6 : index
    %c0_29 = arith.constant 0 : index
    %32 = vector.load %arg3[%c0_28, %c6, %c0_29] : memref<1x192x128xf32, #tpu.memory_space<vmem>>, vector<1x1x128xf32>
    %33 = vector.shape_cast %32 : vector<1x1x128xf32> to vector<1x128xf32>
    %34 = vector.shape_cast %31 : vector<1x128xf32> to vector<1x1x128xf32>
    tpu.vector_store %arg3[%c0_28, %c6, %c0_29], %34 {strides = array<i32>} : memref<1x192x128xf32, #tpu.memory_space<vmem>>, vector<1x1x128xf32>,
    %c0_30 = arith.constant 0 : index
    %c145 = arith.constant 145 : index
    %c0_31 = arith.constant 0 : index
    %35 = vector.load %arg2[%c0_30, %c145, %c0_31] : memref<1x192x128xf32, #tpu.memory_space<vmem>>, vector<1x1x128xf32>
    %36 = vector.shape_cast %35 : vector<1x1x128xf32> to vector<1x128xf32>
    %c0_32 = arith.constant 0 : index
    %c7 = arith.constant 7 : index
    %c0_33 = arith.constant 0 : index
    %37 = vector.load %arg3[%c0_32, %c7, %c0_33] : memref<1x192x128xf32, #tpu.memory_space<vmem>>, vector<1x1x128xf32>
    %38 = vector.shape_cast %37 : vector<1x1x128xf32> to vector<1x128xf32>
    %39 = vector.shape_cast %36 : vector<1x128xf32> to vector<1x1x128xf32>
    tpu.vector_store %arg3[%c0_32, %c7, %c0_33], %39 {strides = array<i32>} : memref<1x192x128xf32, #tpu.memory_space<vmem>>, vector<1x1x128xf32>,
    %c0_34 = arith.constant 0 : index
    %c2_35 = arith.constant 2 : index
    %c0_36 = arith.constant 0 : index
    %40 = vector.load %arg2[%c0_34, %c2_35, %c0_36] : memref<1x192x128xf32, #tpu.memory_space<vmem>>, vector<1x1x128xf32>
    %41 = vector.shape_cast %40 : vector<1x1x128xf32> to vector<1x128xf32>
    %c0_37 = arith.constant 0 : index
    %c8 = arith.constant 8 : index
    %c0_38 = arith.constant 0 : index
    %42 = vector.load %arg3[%c0_37, %c8, %c0_38] : memref<1x192x128xf32, #tpu.memory_space<vmem>>, vector<1x1x128xf32>
    %43 = vector.shape_cast %42 : vector<1x1x128xf32> to vector<1x128xf32>
    %44 = vector.shape_cast %41 : vector<1x128xf32> to vector<1x1x128xf32>
    tpu.vector_store %arg3[%c0_37, %c8, %c0_38], %44 {strides = array<i32>} : memref<1x192x128xf32, #tpu.memory_space<vmem>>, vector<1x1x128xf32>,
    %c0_39 = arith.constant 0 : index
    %c50 = arith.constant 50 : index
    %c0_40 = arith.constant 0 : index
    %45 = vector.load %arg2[%c0_39, %c50, %c0_40] : memref<1x192x128xf32, #tpu.memory_space<vmem>>, vector<1x1x128xf32>
    %46 = vector.shape_cast %45 : vector<1x1x128xf32> to vector<1x128xf32>
    %c0_41 = arith.constant 0 : index
    %c9 = arith.constant 9 : index
    %c0_42 = arith.constant 0 : index
    %47 = vector.load %arg3[%c0_41, %c9, %c0_42] : memref<1x192x128xf32, #tpu.memory_space<vmem>>, vector<1x1x128xf32>
    %48 = vector.shape_cast %47 : vector<1x1x128xf32> to vector<1x128xf32>
    %49 = vector.shape_cast %46 : vector<1x128xf32> to vector<1x1x128xf32>
    tpu.vector_store %arg3[%c0_41, %c9, %c0_42], %49 {strides = array<i32>} : memref<1x192x128xf32, #tpu.memory_space<vmem>>, vector<1x1x128xf32>,
    %c0_43 = arith.constant 0 : index
    %c98 = arith.constant 98 : index
    %c0_44 = arith.constant 0 : index
    %50 = vector.load %arg2[%c0_43, %c98, %c0_44] : memref<1x192x128xf32, #tpu.memory_space<vmem>>, vector<1x1x128xf32>
    %51 = vector.shape_cast %50 : vector<1x1x128xf32> to vector<1x128xf32>
    %c0_45 = arith.constant 0 : index
    %c10 = arith.constant 10 : index
    %c0_46 = arith.constant 0 : index
    %52 = vector.load %arg3[%c0_45, %c10, %c0_46] : memref<1x192x128xf32, #tpu.memory_space<vmem>>, vector<1x1x128xf32>
    %53 = vector.shape_cast %52 : vector<1x1x128xf32> to vector<1x128xf32>
    %54 = vector.shape_cast %51 : vector<1x128xf32> to vector<1x1x128xf32>
    tpu.vector_store %arg3[%c0_45, %c10, %c0_46], %54 {strides = array<i32>} : memref<1x192x128xf32, #tpu.memory_space<vmem>>, vector<1x1x128xf32>,
    %c0_47 = arith.constant 0 : index
    %c146 = arith.constant 146 : index
    %c0_48 = arith.constant 0 : index
    %55 = vector.load %arg2[%c0_47, %c146, %c0_48] : memref<1x192x128xf32, #tpu.memory_space<vmem>>, vector<1x1x128xf32>
    %56 = vector.shape_cast %55 : vector<1x1x128xf32> to vector<1x128xf32>
    %c0_49 = arith.constant 0 : index
    %c11 = arith.constant 11 : index
    %c0_50 = arith.constant 0 : index
    %57 = vector.load %arg3[%c0_49, %c11, %c0_50] : memref<1x192x128xf32, #tpu.memory_space<vmem>>, vector<1x1x128xf32>
    %58 = vector.shape_cast %57 : vector<1x1x128xf32> to vector<1x128xf32>
    %59 = vector.shape_cast %56 : vector<1x128xf32> to vector<1x1x128xf32>
    tpu.vector_store %arg3[%c0_49, %c11, %c0_50], %59 {strides = array<i32>} : memref<1x192x128xf32, #tpu.memory_space<vmem>>, vector<1x1x128xf32>,
    %c0_51 = arith.constant 0 : index
    %c3_52 = arith.constant 3 : index
    %c0_53 = arith.constant 0 : index
    %60 = vector.load %arg2[%c0_51, %c3_52, %c0_53] : memref<1x192x128xf32, #tpu.memory_space<vmem>>, vector<1x1x128xf32>
    %61 = vector.shape_cast %60 : vector<1x1x128xf32> to vector<1x128xf32>
    %c0_54 = arith.constant 0 : index
    %c12 = arith.constant 12 : index
    %c0_55 = arith.constant 0 : index
    %62 = vector.load %arg3[%c0_54, %c12, %c0_55] : memref<1x192x128xf32, #tpu.memory_space<vmem>>, vector<1x1x128xf32>
    %63 = vector.shape_cast %62 : vector<1x1x128xf32> to vector<1x128xf32>
    %64 = vector.shape_cast %61 : vector<1x128xf32> to vector<1x1x128xf32>
    tpu.vector_store %arg3[%c0_54, %c12, %c0_55], %64 {strides = array<i32>} : memref<1x192x128xf32, #tpu.memory_space<vmem>>, vector<1x1x128xf32>,
    %c0_56 = arith.constant 0 : index
    %c51 = arith.constant 51 : index
    %c0_57 = arith.constant 0 : index
    %65 = vector.load %arg2[%c0_56, %c51, %c0_57] : memref<1x192x128xf32, #tpu.memory_space<vmem>>, vector<1x1x128xf32>
    %66 = vector.shape_cast %65 : vector<1x1x128xf32> to vector<1x128xf32>
    %c0_58 = arith.constant 0 : index
    %c13 = arith.constant 13 : index
    %c0_59 = arith.constant 0 : index
    %67 = vector.load %arg3[%c0_58, %c13, %c0_59] : memref<1x192x128xf32, #tpu.memory_space<vmem>>, vector<1x1x128xf32>
    %68 = vector.shape_cast %67 : vector<1x1x128xf32> to vector<1x128xf32>
    %69 = vector.shape_cast %66 : vector<1x128xf32> to vector<1x1x128xf32>
    tpu.vector_store %arg3[%c0_58, %c13, %c0_59], %69 {strides = array<i32>} : memref<1x192x128xf32, #tpu.memory_space<vmem>>, vector<1x1x128xf32>,
    %c0_60 = arith.constant 0 : index
    %c99 = arith.constant 99 : index
    %c0_61 = arith.constant 0 : index
    %70 = vector.load %arg2[%c0_60, %c99, %c0_61] : memref<1x192x128xf32, #tpu.memory_space<vmem>>, vector<1x1x128xf32>
    %71 = vector.shape_cast %70 : vector<1x1x128xf32> to vector<1x128xf32>
    %c0_62 = arith.constant 0 : index
    %c14 = arith.constant 14 : index
    %c0_63 = arith.constant 0 : index
    %72 = vector.load %arg3[%c0_62, %c14, %c0_63] : memref<1x192x128xf32, #tpu.memory_space<vmem>>, vector<1x1x128xf32>
    %73 = vector.shape_cast %72 : vector<1x1x128xf32> to vector<1x128xf32>
    %74 = vector.shape_cast %71 : vector<1x128xf32> to vector<1x1x128xf32>
    tpu.vector_store %arg3[%c0_62, %c14, %c0_63], %74 {strides = array<i32>} : memref<1x192x128xf32, #tpu.memory_space<vmem>>, vector<1x1x128xf32>,
    %c0_64 = arith.constant 0 : index
    %c147 = arith.constant 147 : index
    %c0_65 = arith.constant 0 : index
    %75 = vector.load %arg2[%c0_64, %c147, %c0_65] : memref<1x192x128xf32, #tpu.memory_space<vmem>>, vector<1x1x128xf32>
    %76 = vector.shape_cast %75 : vector<1x1x128xf32> to vector<1x128xf32>
    %c0_66 = arith.constant 0 : index
    %c15 = arith.constant 15 : index
    %c0_67 = arith.constant 0 : index
    %77 = vector.load %arg3[%c0_66, %c15, %c0_67] : memref<1x192x128xf32, #tpu.memory_space<vmem>>, vector<1x1x128xf32>
    %78 = vector.shape_cast %77 : vector<1x1x128xf32> to vector<1x128xf32>
    %79 = vector.shape_cast %76 : vector<1x128xf32> to vector<1x1x128xf32>
    tpu.vector_store %arg3[%c0_66, %c15, %c0_67], %79 {strides = array<i32>} : memref<1x192x128xf32, #tpu.memory_space<vmem>>, vector<1x1x128xf32>,
    %c0_68 = arith.constant 0 : index
    %c4_69 = arith.constant 4 : index
    %c0_70 = arith.constant 0 : index
    %80 = vector.load %arg2[%c0_68, %c4_69, %c0_70] : memref<1x192x128xf32, #tpu.memory_space<vmem>>, vector<1x1x128xf32>
    %81 = vector.shape_cast %80 : vector<1x1x128xf32> to vector<1x128xf32>
    %c0_71 = arith.constant 0 : index
    %c16 = arith.constant 16 : index
    %c0_72 = arith.constant 0 : index
    %82 = vector.load %arg3[%c0_71, %c16, %c0_72] : memref<1x192x128xf32, #tpu.memory_space<vmem>>, vector<1x1x128xf32>
    %83 = vector.shape_cast %82 : vector<1x1x128xf32> to vector<1x128xf32>
    %84 = vector.shape_cast %81 : vector<1x128xf32> to vector<1x1x128xf32>
    tpu.vector_store %arg3[%c0_71, %c16, %c0_72], %84 {strides = array<i32>} : memref<1x192x128xf32, #tpu.memory_space<vmem>>, vector<1x1x128xf32>,
    %c0_73 = arith.constant 0 : index
    %c52 = arith.constant 52 : index
    %c0_74 = arith.constant 0 : index
    %85 = vector.load %arg2[%c0_73, %c52, %c0_74] : memref<1x192x128xf32, #tpu.memory_space<vmem>>, vector<1x1x128xf32>
    %86 = vector.shape_cast %85 : vector<1x1x128xf32> to vector<1x128xf32>
    %c0_75 = arith.constant 0 : index
    %c17 = arith.constant 17 : index
    %c0_76 = arith.constant 0 : index
    %87 = vector.load %arg3[%c0_75, %c17, %c0_76] : memref<1x192x128xf32, #tpu.memory_space<vmem>>, vector<1x1x128xf32>
    %88 = vector.shape_cast %87 : vector<1x1x128xf32> to vector<1x128xf32>
    %89 = vector.shape_cast %86 : vector<1x128xf32> to vector<1x1x128xf32>
    tpu.vector_store %arg3[%c0_75, %c17, %c0_76], %89 {strides = array<i32>} : memref<1x192x128xf32, #tpu.memory_space<vmem>>, vector<1x1x128xf32>,
    %c0_77 = arith.constant 0 : index
    %c100 = arith.constant 100 : index
    %c0_78 = arith.constant 0 : index
    %90 = vector.load %arg2[%c0_77, %c100, %c0_78] : memref<1x192x128xf32, #tpu.memory_space<vmem>>, vector<1x1x128xf32>
    %91 = vector.shape_cast %90 : vector<1x1x128xf32> to vector<1x128xf32>
    %c0_79 = arith.constant 0 : index
    %c18 = arith.constant 18 : index
    %c0_80 = arith.constant 0 : index
    %92 = vector.load %arg3[%c0_79, %c18, %c0_80] : memref<1x192x128xf32, #tpu.memory_space<vmem>>, vector<1x1x128xf32>
    %93 = vector.shape_cast %92 : vector<1x1x128xf32> to vector<1x128xf32>
    %94 = vector.shape_cast %91 : vector<1x128xf32> to vector<1x1x128xf32>
    tpu.vector_store %arg3[%c0_79, %c18, %c0_80], %94 {strides = array<i32>} : memref<1x192x128xf32, #tpu.memory_space<vmem>>, vector<1x1x128xf32>,
    %c0_81 = arith.constant 0 : index
    %c148 = arith.constant 148 : index
    %c0_82 = arith.constant 0 : index
    %95 = vector.load %arg2[%c0_81, %c148, %c0_82] : memref<1x192x128xf32, #tpu.memory_space<vmem>>, vector<1x1x128xf32>
    %96 = vector.shape_cast %95 : vector<1x1x128xf32> to vector<1x128xf32>
    %c0_83 = arith.constant 0 : index
    %c19 = arith.constant 19 : index
    %c0_84 = arith.constant 0 : index
    %97 = vector.load %arg3[%c0_83, %c19, %c0_84] : memref<1x192x128xf32, #tpu.memory_space<vmem>>, vector<1x1x128xf32>
    %98 = vector.shape_cast %97 : vector<1x1x128xf32> to vector<1x128xf32>
    %99 = vector.shape_cast %96 : vector<1x128xf32> to vector<1x1x128xf32>
    tpu.vector_store %arg3[%c0_83, %c19, %c0_84], %99 {strides = array<i32>} : memref<1x192x128xf32, #tpu.memory_space<vmem>>, vector<1x1x128xf32>,
    %c0_85 = arith.constant 0 : index
    %c5_86 = arith.constant 5 : index
    %c0_87 = arith.constant 0 : index
    %100 = vector.load %arg2[%c0_85, %c5_86, %c0_87] : memref<1x192x128xf32, #tpu.memory_space<vmem>>, vector<1x1x128xf32>
    %101 = vector.shape_cast %100 : vector<1x1x128xf32> to vector<1x128xf32>
    %c0_88 = arith.constant 0 : index
    %c20 = arith.constant 20 : index
    %c0_89 = arith.constant 0 : index
    %102 = vector.load %arg3[%c0_88, %c20, %c0_89] : memref<1x192x128xf32, #tpu.memory_space<vmem>>, vector<1x1x128xf32>
    %103 = vector.shape_cast %102 : vector<1x1x128xf32> to vector<1x128xf32>
    %104 = vector.shape_cast %101 : vector<1x128xf32> to vector<1x1x128xf32>
    tpu.vector_store %arg3[%c0_88, %c20, %c0_89], %104 {strides = array<i32>} : memref<1x192x128xf32, #tpu.memory_space<vmem>>, vector<1x1x128xf32>,
    %c0_90 = arith.constant 0 : index
    %c53 = arith.constant 53 : index
    %c0_91 = arith.constant 0 : index
    %105 = vector.load %arg2[%c0_90, %c53, %c0_91] : memref<1x192x128xf32, #tpu.memory_space<vmem>>, vector<1x1x128xf32>
    %106 = vector.shape_cast %105 : vector<1x1x128xf32> to vector<1x128xf32>
    %c0_92 = arith.constant 0 : index
    %c21 = arith.constant 21 : index
    %c0_93 = arith.constant 0 : index
    %107 = vector.load %arg3[%c0_92, %c21, %c0_93] : memref<1x192x128xf32, #tpu.memory_space<vmem>>, vector<1x1x128xf32>
    %108 = vector.shape_cast %107 : vector<1x1x128xf32> to vector<1x128xf32>
    %109 = vector.shape_cast %106 : vector<1x128xf32> to vector<1x1x128xf32>
    tpu.vector_store %arg3[%c0_92, %c21, %c0_93], %109 {strides = array<i32>} : memref<1x192x128xf32, #tpu.memory_space<vmem>>, vector<1x1x128xf32>,
    %c0_94 = arith.constant 0 : index
    %c101 = arith.constant 101 : index
    %c0_95 = arith.constant 0 : index
    %110 = vector.load %arg2[%c0_94, %c101, %c0_95] : memref<1x192x128xf32, #tpu.memory_space<vmem>>, vector<1x1x128xf32>
    %111 = vector.shape_cast %110 : vector<1x1x128xf32> to vector<1x128xf32>
    %c0_96 = arith.constant 0 : index
    %c22 = arith.constant 22 : index
    %c0_97 = arith.constant 0 : index
    %112 = vector.load %arg3[%c0_96, %c22, %c0_97] : memref<1x192x128xf32, #tpu.memory_space<vmem>>, vector<1x1x128xf32>
    %113 = vector.shape_cast %112 : vector<1x1x128xf32> to vector<1x128xf32>
    %114 = vector.shape_cast %111 : vector<1x128xf32> to vector<1x1x128xf32>
    tpu.vector_store %arg3[%c0_96, %c22, %c0_97], %114 {strides = array<i32>} : memref<1x192x128xf32, #tpu.memory_space<vmem>>, vector<1x1x128xf32>,
    %c0_98 = arith.constant 0 : index
    %c149 = arith.constant 149 : index
    %c0_99 = arith.constant 0 : index
    %115 = vector.load %arg2[%c0_98, %c149, %c0_99] : memref<1x192x128xf32, #tpu.memory_space<vmem>>, vector<1x1x128xf32>
    %116 = vector.shape_cast %115 : vector<1x1x128xf32> to vector<1x128xf32>
    %c0_100 = arith.constant 0 : index
    %c23 = arith.constant 23 : index
    %c0_101 = arith.constant 0 : index
    %117 = vector.load %arg3[%c0_100, %c23, %c0_101] : memref<1x192x128xf32, #tpu.memory_space<vmem>>, vector<1x1x128xf32>
    %118 = vector.shape_cast %117 : vector<1x1x128xf32> to vector<1x128xf32>
    %119 = vector.shape_cast %116 : vector<1x128xf32> to vector<1x1x128xf32>
    tpu.vector_store %arg3[%c0_100, %c23, %c0_101], %119 {strides = array<i32>} : memref<1x192x128xf32, #tpu.memory_space<vmem>>, vector<1x1x128xf32>,
    %c0_102 = arith.constant 0 : index
    %c6_103 = arith.constant 6 : index
    %c0_104 = arith.constant 0 : index
    %120 = vector.load %arg2[%c0_102, %c6_103, %c0_104] : memref<1x192x128xf32, #tpu.memory_space<vmem>>, vector<1x1x128xf32>
    %121 = vector.shape_cast %120 : vector<1x1x128xf32> to vector<1x128xf32>
    %c0_105 = arith.constant 0 : index
    %c24 = arith.constant 24 : index
    %c0_106 = arith.constant 0 : index
    %122 = vector.load %arg3[%c0_105, %c24, %c0_106] : memref<1x192x128xf32, #tpu.memory_space<vmem>>, vector<1x1x128xf32>
    %123 = vector.shape_cast %122 : vector<1x1x128xf32> to vector<1x128xf32>
    %124 = vector.shape_cast %121 : vector<1x128xf32> to vector<1x1x128xf32>
    tpu.vector_store %arg3[%c0_105, %c24, %c0_106], %124 {strides = array<i32>} : memref<1x192x128xf32, #tpu.memory_space<vmem>>, vector<1x1x128xf32>,
    %c0_107 = arith.constant 0 : index
    %c54 = arith.constant 54 : index
    %c0_108 = arith.constant 0 : index
    %125 = vector.load %arg2[%c0_107, %c54, %c0_108] : memref<1x192x128xf32, #tpu.memory_space<vmem>>, vector<1x1x128xf32>
    %126 = vector.shape_cast %125 : vector<1x1x128xf32> to vector<1x128xf32>
    %c0_109 = arith.constant 0 : index
    %c25 = arith.constant 25 : index
    %c0_110 = arith.constant 0 : index
    %127 = vector.load %arg3[%c0_109, %c25, %c0_110] : memref<1x192x128xf32, #tpu.memory_space<vmem>>, vector<1x1x128xf32>
    %128 = vector.shape_cast %127 : vector<1x1x128xf32> to vector<1x128xf32>
    %129 = vector.shape_cast %126 : vector<1x128xf32> to vector<1x1x128xf32>
    tpu.vector_store %arg3[%c0_109, %c25, %c0_110], %129 {strides = array<i32>} : memref<1x192x128xf32, #tpu.memory_space<vmem>>, vector<1x1x128xf32>,
    %c0_111 = arith.constant 0 : index
    %c102 = arith.constant 102 : index
    %c0_112 = arith.constant 0 : index
    %130 = vector.load %arg2[%c0_111, %c102, %c0_112] : memref<1x192x128xf32, #tpu.memory_space<vmem>>, vector<1x1x128xf32>
    %131 = vector.shape_cast %130 : vector<1x1x128xf32> to vector<1x128xf32>
    %c0_113 = arith.constant 0 : index
    %c26 = arith.constant 26 : index
    %c0_114 = arith.constant 0 : index
    %132 = vector.load %arg3[%c0_113, %c26, %c0_114] : memref<1x192x128xf32, #tpu.memory_space<vmem>>, vector<1x1x128xf32>
    %133 = vector.shape_cast %132 : vector<1x1x128xf32> to vector<1x128xf32>
    %134 = vector.shape_cast %131 : vector<1x128xf32> to vector<1x1x128xf32>
    tpu.vector_store %arg3[%c0_113, %c26, %c0_114], %134 {strides = array<i32>} : memref<1x192x128xf32, #tpu.memory_space<vmem>>, vector<1x1x128xf32>,
    %c0_115 = arith.constant 0 : index
    %c150 = arith.constant 150 : index
    %c0_116 = arith.constant 0 : index
    %135 = vector.load %arg2[%c0_115, %c150, %c0_116] : memref<1x192x128xf32, #tpu.memory_space<vmem>>, vector<1x1x128xf32>
    %136 = vector.shape_cast %135 : vector<1x1x128xf32> to vector<1x128xf32>
    %c0_117 = arith.constant 0 : index
    %c27 = arith.constant 27 : index
    %c0_118 = arith.constant 0 : index
    %137 = vector.load %arg3[%c0_117, %c27, %c0_118] : memref<1x192x128xf32, #tpu.memory_space<vmem>>, vector<1x1x128xf32>
    %138 = vector.shape_cast %137 : vector<1x1x128xf32> to vector<1x128xf32>
    %139 = vector.shape_cast %136 : vector<1x128xf32> to vector<1x1x128xf32>
    tpu.vector_store %arg3[%c0_117, %c27, %c0_118], %139 {strides = array<i32>} : memref<1x192x128xf32, #tpu.memory_space<vmem>>, vector<1x1x128xf32>,
    %c0_119 = arith.constant 0 : index
    %c7_120 = arith.constant 7 : index
    %c0_121 = arith.constant 0 : index
    %140 = vector.load %arg2[%c0_119, %c7_120, %c0_121] : memref<1x192x128xf32, #tpu.memory_space<vmem>>, vector<1x1x128xf32>
    %141 = vector.shape_cast %140 : vector<1x1x128xf32> to vector<1x128xf32>
    %c0_122 = arith.constant 0 : index
    %c28 = arith.constant 28 : index
    %c0_123 = arith.constant 0 : index
    %142 = vector.load %arg3[%c0_122, %c28, %c0_123] : memref<1x192x128xf32, #tpu.memory_space<vmem>>, vector<1x1x128xf32>
    %143 = vector.shape_cast %142 : vector<1x1x128xf32> to vector<1x128xf32>
    %144 = vector.shape_cast %141 : vector<1x128xf32> to vector<1x1x128xf32>
    tpu.vector_store %arg3[%c0_122, %c28, %c0_123], %144 {strides = array<i32>} : memref<1x192x128xf32, #tpu.memory_space<vmem>>, vector<1x1x128xf32>,
    %c0_124 = arith.constant 0 : index
    %c55 = arith.constant 55 : index
    %c0_125 = arith.constant 0 : index
    %145 = vector.load %arg2[%c0_124, %c55, %c0_125] : memref<1x192x128xf32, #tpu.memory_space<vmem>>, vector<1x1x128xf32>
    %146 = vector.shape_cast %145 : vector<1x1x128xf32> to vector<1x128xf32>
    %c0_126 = arith.constant 0 : index
    %c29 = arith.constant 29 : index
    %c0_127 = arith.constant 0 : index
    %147 = vector.load %arg3[%c0_126, %c29, %c0_127] : memref<1x192x128xf32, #tpu.memory_space<vmem>>, vector<1x1x128xf32>
    %148 = vector.shape_cast %147 : vector<1x1x128xf32> to vector<1x128xf32>
    %149 = vector.shape_cast %146 : vector<1x128xf32> to vector<1x1x128xf32>
    tpu.vector_store %arg3[%c0_126, %c29, %c0_127], %149 {strides = array<i32>} : memref<1x192x128xf32, #tpu.memory_space<vmem>>, vector<1x1x128xf32>,
    %c0_128 = arith.constant 0 : index
    %c103 = arith.constant 103 : index
    %c0_129 = arith.constant 0 : index
    %150 = vector.load %arg2[%c0_128, %c103, %c0_129] : memref<1x192x128xf32, #tpu.memory_space<vmem>>, vector<1x1x128xf32>
    %151 = vector.shape_cast %150 : vector<1x1x128xf32> to vector<1x128xf32>
    %c0_130 = arith.constant 0 : index
    %c30 = arith.constant 30 : index
    %c0_131 = arith.constant 0 : index
    %152 = vector.load %arg3[%c0_130, %c30, %c0_131] : memref<1x192x128xf32, #tpu.memory_space<vmem>>, vector<1x1x128xf32>
    %153 = vector.shape_cast %152 : vector<1x1x128xf32> to vector<1x128xf32>
    %154 = vector.shape_cast %151 : vector<1x128xf32> to vector<1x1x128xf32>
    tpu.vector_store %arg3[%c0_130, %c30, %c0_131], %154 {strides = array<i32>} : memref<1x192x128xf32, #tpu.memory_space<vmem>>, vector<1x1x128xf32>,
    %c0_132 = arith.constant 0 : index
    %c151 = arith.constant 151 : index
    %c0_133 = arith.constant 0 : index
    %155 = vector.load %arg2[%c0_132, %c151, %c0_133] : memref<1x192x128xf32, #tpu.memory_space<vmem>>, vector<1x1x128xf32>
    %156 = vector.shape_cast %155 : vector<1x1x128xf32> to vector<1x128xf32>
    %c0_134 = arith.constant 0 : index
    %c31 = arith.constant 31 : index
    %c0_135 = arith.constant 0 : index
    %157 = vector.load %arg3[%c0_134, %c31, %c0_135] : memref<1x192x128xf32, #tpu.memory_space<vmem>>, vector<1x1x128xf32>
    %158 = vector.shape_cast %157 : vector<1x1x128xf32> to vector<1x128xf32>
    %159 = vector.shape_cast %156 : vector<1x128xf32> to vector<1x1x128xf32>
    tpu.vector_store %arg3[%c0_134, %c31, %c0_135], %159 {strides = array<i32>} : memref<1x192x128xf32, #tpu.memory_space<vmem>>, vector<1x1x128xf32>,
    %c0_136 = arith.constant 0 : index
    %c8_137 = arith.constant 8 : index
    %c0_138 = arith.constant 0 : index
    %160 = vector.load %arg2[%c0_136, %c8_137, %c0_138] : memref<1x192x128xf32, #tpu.memory_space<vmem>>, vector<1x1x128xf32>
    %161 = vector.shape_cast %160 : vector<1x1x128xf32> to vector<1x128xf32>
    %c0_139 = arith.constant 0 : index
    %c32 = arith.constant 32 : index
    %c0_140 = arith.constant 0 : index
    %162 = vector.load %arg3[%c0_139, %c32, %c0_140] : memref<1x192x128xf32, #tpu.memory_space<vmem>>, vector<1x1x128xf32>
    %163 = vector.shape_cast %162 : vector<1x1x128xf32> to vector<1x128xf32>
    %164 = vector.shape_cast %161 : vector<1x128xf32> to vector<1x1x128xf32>
    tpu.vector_store %arg3[%c0_139, %c32, %c0_140], %164 {strides = array<i32>} : memref<1x192x128xf32, #tpu.memory_space<vmem>>, vector<1x1x128xf32>,
    %c0_141 = arith.constant 0 : index
    %c56 = arith.constant 56 : index
    %c0_142 = arith.constant 0 : index
    %165 = vector.load %arg2[%c0_141, %c56, %c0_142] : memref<1x192x128xf32, #tpu.memory_space<vmem>>, vector<1x1x128xf32>
    %166 = vector.shape_cast %165 : vector<1x1x128xf32> to vector<1x128xf32>
    %c0_143 = arith.constant 0 : index
    %c33 = arith.constant 33 : index
    %c0_144 = arith.constant 0 : index
    %167 = vector.load %arg3[%c0_143, %c33, %c0_144] : memref<1x192x128xf32, #tpu.memory_space<vmem>>, vector<1x1x128xf32>
    %168 = vector.shape_cast %167 : vector<1x1x128xf32> to vector<1x128xf32>
    %169 = vector.shape_cast %166 : vector<1x128xf32> to vector<1x1x128xf32>
    tpu.vector_store %arg3[%c0_143, %c33, %c0_144], %169 {strides = array<i32>} : memref<1x192x128xf32, #tpu.memory_space<vmem>>, vector<1x1x128xf32>,
    %c0_145 = arith.constant 0 : index
    %c104 = arith.constant 104 : index
    %c0_146 = arith.constant 0 : index
    %170 = vector.load %arg2[%c0_145, %c104, %c0_146] : memref<1x192x128xf32, #tpu.memory_space<vmem>>, vector<1x1x128xf32>
    %171 = vector.shape_cast %170 : vector<1x1x128xf32> to vector<1x128xf32>
    %c0_147 = arith.constant 0 : index
    %c34 = arith.constant 34 : index
    %c0_148 = arith.constant 0 : index
    %172 = vector.load %arg3[%c0_147, %c34, %c0_148] : memref<1x192x128xf32, #tpu.memory_space<vmem>>, vector<1x1x128xf32>
    %173 = vector.shape_cast %172 : vector<1x1x128xf32> to vector<1x128xf32>
    %174 = vector.shape_cast %171 : vector<1x128xf32> to vector<1x1x128xf32>
    tpu.vector_store %arg3[%c0_147, %c34, %c0_148], %174 {strides = array<i32>} : memref<1x192x128xf32, #tpu.memory_space<vmem>>, vector<1x1x128xf32>,
    %c0_149 = arith.constant 0 : index
    %c152 = arith.constant 152 : index
    %c0_150 = arith.constant 0 : index
    %175 = vector.load %arg2[%c0_149, %c152, %c0_150] : memref<1x192x128xf32, #tpu.memory_space<vmem>>, vector<1x1x128xf32>
    %176 = vector.shape_cast %175 : vector<1x1x128xf32> to vector<1x128xf32>
    %c0_151 = arith.constant 0 : index
    %c35 = arith.constant 35 : index
    %c0_152 = arith.constant 0 : index
    %177 = vector.load %arg3[%c0_151, %c35, %c0_152] : memref<1x192x128xf32, #tpu.memory_space<vmem>>, vector<1x1x128xf32>
    %178 = vector.shape_cast %177 : vector<1x1x128xf32> to vector<1x128xf32>
    %179 = vector.shape_cast %176 : vector<1x128xf32> to vector<1x1x128xf32>
    tpu.vector_store %arg3[%c0_151, %c35, %c0_152], %179 {strides = array<i32>} : memref<1x192x128xf32, #tpu.memory_space<vmem>>, vector<1x1x128xf32>,
    %c0_153 = arith.constant 0 : index
    %c9_154 = arith.constant 9 : index
    %c0_155 = arith.constant 0 : index
    %180 = vector.load %arg2[%c0_153, %c9_154, %c0_155] : memref<1x192x128xf32, #tpu.memory_space<vmem>>, vector<1x1x128xf32>
    %181 = vector.shape_cast %180 : vector<1x1x128xf32> to vector<1x128xf32>
    %c0_156 = arith.constant 0 : index
    %c36 = arith.constant 36 : index
    %c0_157 = arith.constant 0 : index
    %182 = vector.load %arg3[%c0_156, %c36, %c0_157] : memref<1x192x128xf32, #tpu.memory_space<vmem>>, vector<1x1x128xf32>
    %183 = vector.shape_cast %182 : vector<1x1x128xf32> to vector<1x128xf32>
    %184 = vector.shape_cast %181 : vector<1x128xf32> to vector<1x1x128xf32>
    tpu.vector_store %arg3[%c0_156, %c36, %c0_157], %184 {strides = array<i32>} : memref<1x192x128xf32, #tpu.memory_space<vmem>>, vector<1x1x128xf32>,
    %c0_158 = arith.constant 0 : index
    %c57 = arith.constant 57 : index
    %c0_159 = arith.constant 0 : index
    %185 = vector.load %arg2[%c0_158, %c57, %c0_159] : memref<1x192x128xf32, #tpu.memory_space<vmem>>, vector<1x1x128xf32>
    %186 = vector.shape_cast %185 : vector<1x1x128xf32> to vector<1x128xf32>
    %c0_160 = arith.constant 0 : index
    %c37 = arith.constant 37 : index
    %c0_161 = arith.constant 0 : index
    %187 = vector.load %arg3[%c0_160, %c37, %c0_161] : memref<1x192x128xf32, #tpu.memory_space<vmem>>, vector<1x1x128xf32>
    %188 = vector.shape_cast %187 : vector<1x1x128xf32> to vector<1x128xf32>
    %189 = vector.shape_cast %186 : vector<1x128xf32> to vector<1x1x128xf32>
    tpu.vector_store %arg3[%c0_160, %c37, %c0_161], %189 {strides = array<i32>} : memref<1x192x128xf32, #tpu.memory_space<vmem>>, vector<1x1x128xf32>,
    %c0_162 = arith.constant 0 : index
    %c105 = arith.constant 105 : index
    %c0_163 = arith.constant 0 : index
    %190 = vector.load %arg2[%c0_162, %c105, %c0_163] : memref<1x192x128xf32, #tpu.memory_space<vmem>>, vector<1x1x128xf32>
    %191 = vector.shape_cast %190 : vector<1x1x128xf32> to vector<1x128xf32>
    %c0_164 = arith.constant 0 : index
    %c38 = arith.constant 38 : index
    %c0_165 = arith.constant 0 : index
    %192 = vector.load %arg3[%c0_164, %c38, %c0_165] : memref<1x192x128xf32, #tpu.memory_space<vmem>>, vector<1x1x128xf32>
    %193 = vector.shape_cast %192 : vector<1x1x128xf32> to vector<1x128xf32>
    %194 = vector.shape_cast %191 : vector<1x128xf32> to vector<1x1x128xf32>
    tpu.vector_store %arg3[%c0_164, %c38, %c0_165], %194 {strides = array<i32>} : memref<1x192x128xf32, #tpu.memory_space<vmem>>, vector<1x1x128xf32>,
    %c0_166 = arith.constant 0 : index
    %c153 = arith.constant 153 : index
    %c0_167 = arith.constant 0 : index
    %195 = vector.load %arg2[%c0_166, %c153, %c0_167] : memref<1x192x128xf32, #tpu.memory_space<vmem>>, vector<1x1x128xf32>
    %196 = vector.shape_cast %195 : vector<1x1x128xf32> to vector<1x128xf32>
    %c0_168 = arith.constant 0 : index
    %c39 = arith.constant 39 : index
    %c0_169 = arith.constant 0 : index
    %197 = vector.load %arg3[%c0_168, %c39, %c0_169] : memref<1x192x128xf32, #tpu.memory_space<vmem>>, vector<1x1x128xf32>
    %198 = vector.shape_cast %197 : vector<1x1x128xf32> to vector<1x128xf32>
    %199 = vector.shape_cast %196 : vector<1x128xf32> to vector<1x1x128xf32>
    tpu.vector_store %arg3[%c0_168, %c39, %c0_169], %199 {strides = array<i32>} : memref<1x192x128xf32, #tpu.memory_space<vmem>>, vector<1x1x128xf32>,
    %c0_170 = arith.constant 0 : index
    %c10_171 = arith.constant 10 : index
    %c0_172 = arith.constant 0 : index
    %200 = vector.load %arg2[%c0_170, %c10_171, %c0_172] : memref<1x192x128xf32, #tpu.memory_space<vmem>>, vector<1x1x128xf32>
    %201 = vector.shape_cast %200 : vector<1x1x128xf32> to vector<1x128xf32>
    %c0_173 = arith.constant 0 : index
    %c40 = arith.constant 40 : index
    %c0_174 = arith.constant 0 : index
    %202 = vector.load %arg3[%c0_173, %c40, %c0_174] : memref<1x192x128xf32, #tpu.memory_space<vmem>>, vector<1x1x128xf32>
    %203 = vector.shape_cast %202 : vector<1x1x128xf32> to vector<1x128xf32>
    %204 = vector.shape_cast %201 : vector<1x128xf32> to vector<1x1x128xf32>
    tpu.vector_store %arg3[%c0_173, %c40, %c0_174], %204 {strides = array<i32>} : memref<1x192x128xf32, #tpu.memory_space<vmem>>, vector<1x1x128xf32>,
    %c0_175 = arith.constant 0 : index
    %c58 = arith.constant 58 : index
    %c0_176 = arith.constant 0 : index
    %205 = vector.load %arg2[%c0_175, %c58, %c0_176] : memref<1x192x128xf32, #tpu.memory_space<vmem>>, vector<1x1x128xf32>
    %206 = vector.shape_cast %205 : vector<1x1x128xf32> to vector<1x128xf32>
    %c0_177 = arith.constant 0 : index
    %c41 = arith.constant 41 : index
    %c0_178 = arith.constant 0 : index
    %207 = vector.load %arg3[%c0_177, %c41, %c0_178] : memref<1x192x128xf32, #tpu.memory_space<vmem>>, vector<1x1x128xf32>
    %208 = vector.shape_cast %207 : vector<1x1x128xf32> to vector<1x128xf32>
    %209 = vector.shape_cast %206 : vector<1x128xf32> to vector<1x1x128xf32>
    tpu.vector_store %arg3[%c0_177, %c41, %c0_178], %209 {strides = array<i32>} : memref<1x192x128xf32, #tpu.memory_space<vmem>>, vector<1x1x128xf32>,
    %c0_179 = arith.constant 0 : index
    %c106 = arith.constant 106 : index
    %c0_180 = arith.constant 0 : index
    %210 = vector.load %arg2[%c0_179, %c106, %c0_180] : memref<1x192x128xf32, #tpu.memory_space<vmem>>, vector<1x1x128xf32>
    %211 = vector.shape_cast %210 : vector<1x1x128xf32> to vector<1x128xf32>
    %c0_181 = arith.constant 0 : index
    %c42 = arith.constant 42 : index
    %c0_182 = arith.constant 0 : index
    %212 = vector.load %arg3[%c0_181, %c42, %c0_182] : memref<1x192x128xf32, #tpu.memory_space<vmem>>, vector<1x1x128xf32>
    %213 = vector.shape_cast %212 : vector<1x1x128xf32> to vector<1x128xf32>
    %214 = vector.shape_cast %211 : vector<1x128xf32> to vector<1x1x128xf32>
    tpu.vector_store %arg3[%c0_181, %c42, %c0_182], %214 {strides = array<i32>} : memref<1x192x128xf32, #tpu.memory_space<vmem>>, vector<1x1x128xf32>,
    %c0_183 = arith.constant 0 : index
    %c154 = arith.constant 154 : index
    %c0_184 = arith.constant 0 : index
    %215 = vector.load %arg2[%c0_183, %c154, %c0_184] : memref<1x192x128xf32, #tpu.memory_space<vmem>>, vector<1x1x128xf32>
    %216 = vector.shape_cast %215 : vector<1x1x128xf32> to vector<1x128xf32>
    %c0_185 = arith.constant 0 : index
    %c43 = arith.constant 43 : index
    %c0_186 = arith.constant 0 : index
    %217 = vector.load %arg3[%c0_185, %c43, %c0_186] : memref<1x192x128xf32, #tpu.memory_space<vmem>>, vector<1x1x128xf32>
    %218 = vector.shape_cast %217 : vector<1x1x128xf32> to vector<1x128xf32>
    %219 = vector.shape_cast %216 : vector<1x128xf32> to vector<1x1x128xf32>
    tpu.vector_store %arg3[%c0_185, %c43, %c0_186], %219 {strides = array<i32>} : memref<1x192x128xf32, #tpu.memory_space<vmem>>, vector<1x1x128xf32>,
    %c0_187 = arith.constant 0 : index
    %c11_188 = arith.constant 11 : index
    %c0_189 = arith.constant 0 : index
    %220 = vector.load %arg2[%c0_187, %c11_188, %c0_189] : memref<1x192x128xf32, #tpu.memory_space<vmem>>, vector<1x1x128xf32>
    %221 = vector.shape_cast %220 : vector<1x1x128xf32> to vector<1x128xf32>
    %c0_190 = arith.constant 0 : index
    %c44 = arith.constant 44 : index
    %c0_191 = arith.constant 0 : index
    %222 = vector.load %arg3[%c0_190, %c44, %c0_191] : memref<1x192x128xf32, #tpu.memory_space<vmem>>, vector<1x1x128xf32>
    %223 = vector.shape_cast %222 : vector<1x1x128xf32> to vector<1x128xf32>
    %224 = vector.shape_cast %221 : vector<1x128xf32> to vector<1x1x128xf32>
    tpu.vector_store %arg3[%c0_190, %c44, %c0_191], %224 {strides = array<i32>} : memref<1x192x128xf32, #tpu.memory_space<vmem>>, vector<1x1x128xf32>,
    %c0_192 = arith.constant 0 : index
    %c59 = arith.constant 59 : index
    %c0_193 = arith.constant 0 : index
    %225 = vector.load %arg2[%c0_192, %c59, %c0_193] : memref<1x192x128xf32, #tpu.memory_space<vmem>>, vector<1x1x128xf32>
    %226 = vector.shape_cast %225 : vector<1x1x128xf32> to vector<1x128xf32>
    %c0_194 = arith.constant 0 : index
    %c45 = arith.constant 45 : index
    %c0_195 = arith.constant 0 : index
    %227 = vector.load %arg3[%c0_194, %c45, %c0_195] : memref<1x192x128xf32, #tpu.memory_space<vmem>>, vector<1x1x128xf32>
    %228 = vector.shape_cast %227 : vector<1x1x128xf32> to vector<1x128xf32>
    %229 = vector.shape_cast %226 : vector<1x128xf32> to vector<1x1x128xf32>
    tpu.vector_store %arg3[%c0_194, %c45, %c0_195], %229 {strides = array<i32>} : memref<1x192x128xf32, #tpu.memory_space<vmem>>, vector<1x1x128xf32>,
    %c0_196 = arith.constant 0 : index
    %c107 = arith.constant 107 : index
    %c0_197 = arith.constant 0 : index
    %230 = vector.load %arg2[%c0_196, %c107, %c0_197] : memref<1x192x128xf32, #tpu.memory_space<vmem>>, vector<1x1x128xf32>
    %231 = vector.shape_cast %230 : vector<1x1x128xf32> to vector<1x128xf32>
    %c0_198 = arith.constant 0 : index
    %c46 = arith.constant 46 : index
    %c0_199 = arith.constant 0 : index
    %232 = vector.load %arg3[%c0_198, %c46, %c0_199] : memref<1x192x128xf32, #tpu.memory_space<vmem>>, vector<1x1x128xf32>
    %233 = vector.shape_cast %232 : vector<1x1x128xf32> to vector<1x128xf32>
    %234 = vector.shape_cast %231 : vector<1x128xf32> to vector<1x1x128xf32>
    tpu.vector_store %arg3[%c0_198, %c46, %c0_199], %234 {strides = array<i32>} : memref<1x192x128xf32, #tpu.memory_space<vmem>>, vector<1x1x128xf32>,
    %c0_200 = arith.constant 0 : index
    %c155 = arith.constant 155 : index
    %c0_201 = arith.constant 0 : index
    %235 = vector.load %arg2[%c0_200, %c155, %c0_201] : memref<1x192x128xf32, #tpu.memory_space<vmem>>, vector<1x1x128xf32>
    %236 = vector.shape_cast %235 : vector<1x1x128xf32> to vector<1x128xf32>
    %c0_202 = arith.constant 0 : index
    %c47 = arith.constant 47 : index
    %c0_203 = arith.constant 0 : index
    %237 = vector.load %arg3[%c0_202, %c47, %c0_203] : memref<1x192x128xf32, #tpu.memory_space<vmem>>, vector<1x1x128xf32>
    %238 = vector.shape_cast %237 : vector<1x1x128xf32> to vector<1x128xf32>
    %239 = vector.shape_cast %236 : vector<1x128xf32> to vector<1x1x128xf32>
    tpu.vector_store %arg3[%c0_202, %c47, %c0_203], %239 {strides = array<i32>} : memref<1x192x128xf32, #tpu.memory_space<vmem>>, vector<1x1x128xf32>,
    %c0_204 = arith.constant 0 : index
    %c12_205 = arith.constant 12 : index
    %c0_206 = arith.constant 0 : index
    %240 = vector.load %arg2[%c0_204, %c12_205, %c0_206] : memref<1x192x128xf32, #tpu.memory_space<vmem>>, vector<1x1x128xf32>
    %241 = vector.shape_cast %240 : vector<1x1x128xf32> to vector<1x128xf32>
    %c0_207 = arith.constant 0 : index
    %c48_208 = arith.constant 48 : index
    %c0_209 = arith.constant 0 : index
    %242 = vector.load %arg3[%c0_207, %c48_208, %c0_209] : memref<1x192x128xf32, #tpu.memory_space<vmem>>, vector<1x1x128xf32>
    %243 = vector.shape_cast %242 : vector<1x1x128xf32> to vector<1x128xf32>
    %244 = vector.shape_cast %241 : vector<1x128xf32> to vector<1x1x128xf32>
    tpu.vector_store %arg3[%c0_207, %c48_208, %c0_209], %244 {strides = array<i32>} : memref<1x192x128xf32, #tpu.memory_space<vmem>>, vector<1x1x128xf32>,
    %c0_210 = arith.constant 0 : index
    %c60 = arith.constant 60 : index
    %c0_211 = arith.constant 0 : index
    %245 = vector.load %arg2[%c0_210, %c60, %c0_211] : memref<1x192x128xf32, #tpu.memory_space<vmem>>, vector<1x1x128xf32>
    %246 = vector.shape_cast %245 : vector<1x1x128xf32> to vector<1x128xf32>
    %c0_212 = arith.constant 0 : index
    %c49_213 = arith.constant 49 : index
    %c0_214 = arith.constant 0 : index
    %247 = vector.load %arg3[%c0_212, %c49_213, %c0_214] : memref<1x192x128xf32, #tpu.memory_space<vmem>>, vector<1x1x128xf32>
    %248 = vector.shape_cast %247 : vector<1x1x128xf32> to vector<1x128xf32>
    %249 = vector.shape_cast %246 : vector<1x128xf32> to vector<1x1x128xf32>
    tpu.vector_store %arg3[%c0_212, %c49_213, %c0_214], %249 {strides = array<i32>} : memref<1x192x128xf32, #tpu.memory_space<vmem>>, vector<1x1x128xf32>,
    %c0_215 = arith.constant 0 : index
    %c108 = arith.constant 108 : index
    %c0_216 = arith.constant 0 : index
    %250 = vector.load %arg2[%c0_215, %c108, %c0_216] : memref<1x192x128xf32, #tpu.memory_space<vmem>>, vector<1x1x128xf32>
    %251 = vector.shape_cast %250 : vector<1x1x128xf32> to vector<1x128xf32>
    %c0_217 = arith.constant 0 : index
    %c50_218 = arith.constant 50 : index
    %c0_219 = arith.constant 0 : index
    %252 = vector.load %arg3[%c0_217, %c50_218, %c0_219] : memref<1x192x128xf32, #tpu.memory_space<vmem>>, vector<1x1x128xf32>
    %253 = vector.shape_cast %252 : vector<1x1x128xf32> to vector<1x128xf32>
    %254 = vector.shape_cast %251 : vector<1x128xf32> to vector<1x1x128xf32>
    tpu.vector_store %arg3[%c0_217, %c50_218, %c0_219], %254 {strides = array<i32>} : memref<1x192x128xf32, #tpu.memory_space<vmem>>, vector<1x1x128xf32>,
    %c0_220 = arith.constant 0 : index
    %c156 = arith.constant 156 : index
    %c0_221 = arith.constant 0 : index
    %255 = vector.load %arg2[%c0_220, %c156, %c0_221] : memref<1x192x128xf32, #tpu.memory_space<vmem>>, vector<1x1x128xf32>
    %256 = vector.shape_cast %255 : vector<1x1x128xf32> to vector<1x128xf32>
    %c0_222 = arith.constant 0 : index
    %c51_223 = arith.constant 51 : index
    %c0_224 = arith.constant 0 : index
    %257 = vector.load %arg3[%c0_222, %c51_223, %c0_224] : memref<1x192x128xf32, #tpu.memory_space<vmem>>, vector<1x1x128xf32>
    %258 = vector.shape_cast %257 : vector<1x1x128xf32> to vector<1x128xf32>
    %259 = vector.shape_cast %256 : vector<1x128xf32> to vector<1x1x128xf32>
    tpu.vector_store %arg3[%c0_222, %c51_223, %c0_224], %259 {strides = array<i32>} : memref<1x192x128xf32, #tpu.memory_space<vmem>>, vector<1x1x128xf32>,
    %c0_225 = arith.constant 0 : index
    %c13_226 = arith.constant 13 : index
    %c0_227 = arith.constant 0 : index
    %260 = vector.load %arg2[%c0_225, %c13_226, %c0_227] : memref<1x192x128xf32, #tpu.memory_space<vmem>>, vector<1x1x128xf32>
    %261 = vector.shape_cast %260 : vector<1x1x128xf32> to vector<1x128xf32>
    %c0_228 = arith.constant 0 : index
    %c52_229 = arith.constant 52 : index
    %c0_230 = arith.constant 0 : index
    %262 = vector.load %arg3[%c0_228, %c52_229, %c0_230] : memref<1x192x128xf32, #tpu.memory_space<vmem>>, vector<1x1x128xf32>
    %263 = vector.shape_cast %262 : vector<1x1x128xf32> to vector<1x128xf32>
    %264 = vector.shape_cast %261 : vector<1x128xf32> to vector<1x1x128xf32>
    tpu.vector_store %arg3[%c0_228, %c52_229, %c0_230], %264 {strides = array<i32>} : memref<1x192x128xf32, #tpu.memory_space<vmem>>, vector<1x1x128xf32>,
    %c0_231 = arith.constant 0 : index
    %c61 = arith.constant 61 : index
    %c0_232 = arith.constant 0 : index
    %265 = vector.load %arg2[%c0_231, %c61, %c0_232] : memref<1x192x128xf32, #tpu.memory_space<vmem>>, vector<1x1x128xf32>
    %266 = vector.shape_cast %265 : vector<1x1x128xf32> to vector<1x128xf32>
    %c0_233 = arith.constant 0 : index
    %c53_234 = arith.constant 53 : index
    %c0_235 = arith.constant 0 : index
    %267 = vector.load %arg3[%c0_233, %c53_234, %c0_235] : memref<1x192x128xf32, #tpu.memory_space<vmem>>, vector<1x1x128xf32>
    %268 = vector.shape_cast %267 : vector<1x1x128xf32> to vector<1x128xf32>
    %269 = vector.shape_cast %266 : vector<1x128xf32> to vector<1x1x128xf32>
    tpu.vector_store %arg3[%c0_233, %c53_234, %c0_235], %269 {strides = array<i32>} : memref<1x192x128xf32, #tpu.memory_space<vmem>>, vector<1x1x128xf32>,
    %c0_236 = arith.constant 0 : index
    %c109 = arith.constant 109 : index
    %c0_237 = arith.constant 0 : index
    %270 = vector.load %arg2[%c0_236, %c109, %c0_237] : memref<1x192x128xf32, #tpu.memory_space<vmem>>, vector<1x1x128xf32>
    %271 = vector.shape_cast %270 : vector<1x1x128xf32> to vector<1x128xf32>
    %c0_238 = arith.constant 0 : index
    %c54_239 = arith.constant 54 : index
    %c0_240 = arith.constant 0 : index
    %272 = vector.load %arg3[%c0_238, %c54_239, %c0_240] : memref<1x192x128xf32, #tpu.memory_space<vmem>>, vector<1x1x128xf32>
    %273 = vector.shape_cast %272 : vector<1x1x128xf32> to vector<1x128xf32>
    %274 = vector.shape_cast %271 : vector<1x128xf32> to vector<1x1x128xf32>
    tpu.vector_store %arg3[%c0_238, %c54_239, %c0_240], %274 {strides = array<i32>} : memref<1x192x128xf32, #tpu.memory_space<vmem>>, vector<1x1x128xf32>,
    %c0_241 = arith.constant 0 : index
    %c157 = arith.constant 157 : index
    %c0_242 = arith.constant 0 : index
    %275 = vector.load %arg2[%c0_241, %c157, %c0_242] : memref<1x192x128xf32, #tpu.memory_space<vmem>>, vector<1x1x128xf32>
    %276 = vector.shape_cast %275 : vector<1x1x128xf32> to vector<1x128xf32>
    %c0_243 = arith.constant 0 : index
    %c55_244 = arith.constant 55 : index
    %c0_245 = arith.constant 0 : index
    %277 = vector.load %arg3[%c0_243, %c55_244, %c0_245] : memref<1x192x128xf32, #tpu.memory_space<vmem>>, vector<1x1x128xf32>
    %278 = vector.shape_cast %277 : vector<1x1x128xf32> to vector<1x128xf32>
    %279 = vector.shape_cast %276 : vector<1x128xf32> to vector<1x1x128xf32>
    tpu.vector_store %arg3[%c0_243, %c55_244, %c0_245], %279 {strides = array<i32>} : memref<1x192x128xf32, #tpu.memory_space<vmem>>, vector<1x1x128xf32>,
    %c0_246 = arith.constant 0 : index
    %c14_247 = arith.constant 14 : index
    %c0_248 = arith.constant 0 : index
    %280 = vector.load %arg2[%c0_246, %c14_247, %c0_248] : memref<1x192x128xf32, #tpu.memory_space<vmem>>, vector<1x1x128xf32>
    %281 = vector.shape_cast %280 : vector<1x1x128xf32> to vector<1x128xf32>
    %c0_249 = arith.constant 0 : index
    %c56_250 = arith.constant 56 : index
    %c0_251 = arith.constant 0 : index
    %282 = vector.load %arg3[%c0_249, %c56_250, %c0_251] : memref<1x192x128xf32, #tpu.memory_space<vmem>>, vector<1x1x128xf32>
    %283 = vector.shape_cast %282 : vector<1x1x128xf32> to vector<1x128xf32>
    %284 = vector.shape_cast %281 : vector<1x128xf32> to vector<1x1x128xf32>
    tpu.vector_store %arg3[%c0_249, %c56_250, %c0_251], %284 {strides = array<i32>} : memref<1x192x128xf32, #tpu.memory_space<vmem>>, vector<1x1x128xf32>,
    %c0_252 = arith.constant 0 : index
    %c62 = arith.constant 62 : index
    %c0_253 = arith.constant 0 : index
    %285 = vector.load %arg2[%c0_252, %c62, %c0_253] : memref<1x192x128xf32, #tpu.memory_space<vmem>>, vector<1x1x128xf32>
    %286 = vector.shape_cast %285 : vector<1x1x128xf32> to vector<1x128xf32>
    %c0_254 = arith.constant 0 : index
    %c57_255 = arith.constant 57 : index
    %c0_256 = arith.constant 0 : index
    %287 = vector.load %arg3[%c0_254, %c57_255, %c0_256] : memref<1x192x128xf32, #tpu.memory_space<vmem>>, vector<1x1x128xf32>
    %288 = vector.shape_cast %287 : vector<1x1x128xf32> to vector<1x128xf32>
    %289 = vector.shape_cast %286 : vector<1x128xf32> to vector<1x1x128xf32>
    tpu.vector_store %arg3[%c0_254, %c57_255, %c0_256], %289 {strides = array<i32>} : memref<1x192x128xf32, #tpu.memory_space<vmem>>, vector<1x1x128xf32>,
    %c0_257 = arith.constant 0 : index
    %c110 = arith.constant 110 : index
    %c0_258 = arith.constant 0 : index
    %290 = vector.load %arg2[%c0_257, %c110, %c0_258] : memref<1x192x128xf32, #tpu.memory_space<vmem>>, vector<1x1x128xf32>
    %291 = vector.shape_cast %290 : vector<1x1x128xf32> to vector<1x128xf32>
    %c0_259 = arith.constant 0 : index
    %c58_260 = arith.constant 58 : index
    %c0_261 = arith.constant 0 : index
    %292 = vector.load %arg3[%c0_259, %c58_260, %c0_261] : memref<1x192x128xf32, #tpu.memory_space<vmem>>, vector<1x1x128xf32>
    %293 = vector.shape_cast %292 : vector<1x1x128xf32> to vector<1x128xf32>
    %294 = vector.shape_cast %291 : vector<1x128xf32> to vector<1x1x128xf32>
    tpu.vector_store %arg3[%c0_259, %c58_260, %c0_261], %294 {strides = array<i32>} : memref<1x192x128xf32, #tpu.memory_space<vmem>>, vector<1x1x128xf32>,
    %c0_262 = arith.constant 0 : index
    %c158 = arith.constant 158 : index
    %c0_263 = arith.constant 0 : index
    %295 = vector.load %arg2[%c0_262, %c158, %c0_263] : memref<1x192x128xf32, #tpu.memory_space<vmem>>, vector<1x1x128xf32>
    %296 = vector.shape_cast %295 : vector<1x1x128xf32> to vector<1x128xf32>
    %c0_264 = arith.constant 0 : index
    %c59_265 = arith.constant 59 : index
    %c0_266 = arith.constant 0 : index
    %297 = vector.load %arg3[%c0_264, %c59_265, %c0_266] : memref<1x192x128xf32, #tpu.memory_space<vmem>>, vector<1x1x128xf32>
    %298 = vector.shape_cast %297 : vector<1x1x128xf32> to vector<1x128xf32>
    %299 = vector.shape_cast %296 : vector<1x128xf32> to vector<1x1x128xf32>
    tpu.vector_store %arg3[%c0_264, %c59_265, %c0_266], %299 {strides = array<i32>} : memref<1x192x128xf32, #tpu.memory_space<vmem>>, vector<1x1x128xf32>,
    %c0_267 = arith.constant 0 : index
    %c15_268 = arith.constant 15 : index
    %c0_269 = arith.constant 0 : index
    %300 = vector.load %arg2[%c0_267, %c15_268, %c0_269] : memref<1x192x128xf32, #tpu.memory_space<vmem>>, vector<1x1x128xf32>
    %301 = vector.shape_cast %300 : vector<1x1x128xf32> to vector<1x128xf32>
    %c0_270 = arith.constant 0 : index
    %c60_271 = arith.constant 60 : index
    %c0_272 = arith.constant 0 : index
    %302 = vector.load %arg3[%c0_270, %c60_271, %c0_272] : memref<1x192x128xf32, #tpu.memory_space<vmem>>, vector<1x1x128xf32>
    %303 = vector.shape_cast %302 : vector<1x1x128xf32> to vector<1x128xf32>
    %304 = vector.shape_cast %301 : vector<1x128xf32> to vector<1x1x128xf32>
    tpu.vector_store %arg3[%c0_270, %c60_271, %c0_272], %304 {strides = array<i32>} : memref<1x192x128xf32, #tpu.memory_space<vmem>>, vector<1x1x128xf32>,
    %c0_273 = arith.constant 0 : index
    %c63 = arith.constant 63 : index
    %c0_274 = arith.constant 0 : index
    %305 = vector.load %arg2[%c0_273, %c63, %c0_274] : memref<1x192x128xf32, #tpu.memory_space<vmem>>, vector<1x1x128xf32>
    %306 = vector.shape_cast %305 : vector<1x1x128xf32> to vector<1x128xf32>
    %c0_275 = arith.constant 0 : index
    %c61_276 = arith.constant 61 : index
    %c0_277 = arith.constant 0 : index
    %307 = vector.load %arg3[%c0_275, %c61_276, %c0_277] : memref<1x192x128xf32, #tpu.memory_space<vmem>>, vector<1x1x128xf32>
    %308 = vector.shape_cast %307 : vector<1x1x128xf32> to vector<1x128xf32>
    %309 = vector.shape_cast %306 : vector<1x128xf32> to vector<1x1x128xf32>
    tpu.vector_store %arg3[%c0_275, %c61_276, %c0_277], %309 {strides = array<i32>} : memref<1x192x128xf32, #tpu.memory_space<vmem>>, vector<1x1x128xf32>,
    %c0_278 = arith.constant 0 : index
    %c111 = arith.constant 111 : index
    %c0_279 = arith.constant 0 : index
    %310 = vector.load %arg2[%c0_278, %c111, %c0_279] : memref<1x192x128xf32, #tpu.memory_space<vmem>>, vector<1x1x128xf32>
    %311 = vector.shape_cast %310 : vector<1x1x128xf32> to vector<1x128xf32>
    %c0_280 = arith.constant 0 : index
    %c62_281 = arith.constant 62 : index
    %c0_282 = arith.constant 0 : index
    %312 = vector.load %arg3[%c0_280, %c62_281, %c0_282] : memref<1x192x128xf32, #tpu.memory_space<vmem>>, vector<1x1x128xf32>
    %313 = vector.shape_cast %312 : vector<1x1x128xf32> to vector<1x128xf32>
    %314 = vector.shape_cast %311 : vector<1x128xf32> to vector<1x1x128xf32>
    tpu.vector_store %arg3[%c0_280, %c62_281, %c0_282], %314 {strides = array<i32>} : memref<1x192x128xf32, #tpu.memory_space<vmem>>, vector<1x1x128xf32>,
    %c0_283 = arith.constant 0 : index
    %c159 = arith.constant 159 : index
    %c0_284 = arith.constant 0 : index
    %315 = vector.load %arg2[%c0_283, %c159, %c0_284] : memref<1x192x128xf32, #tpu.memory_space<vmem>>, vector<1x1x128xf32>
    %316 = vector.shape_cast %315 : vector<1x1x128xf32> to vector<1x128xf32>
    %c0_285 = arith.constant 0 : index
    %c63_286 = arith.constant 63 : index
    %c0_287 = arith.constant 0 : index
    %317 = vector.load %arg3[%c0_285, %c63_286, %c0_287] : memref<1x192x128xf32, #tpu.memory_space<vmem>>, vector<1x1x128xf32>
    %318 = vector.shape_cast %317 : vector<1x1x128xf32> to vector<1x128xf32>
    %319 = vector.shape_cast %316 : vector<1x128xf32> to vector<1x1x128xf32>
    tpu.vector_store %arg3[%c0_285, %c63_286, %c0_287], %319 {strides = array<i32>} : memref<1x192x128xf32, #tpu.memory_space<vmem>>, vector<1x1x128xf32>,
    %c0_288 = arith.constant 0 : index
    %c16_289 = arith.constant 16 : index
    %c0_290 = arith.constant 0 : index
    %320 = vector.load %arg2[%c0_288, %c16_289, %c0_290] : memref<1x192x128xf32, #tpu.memory_space<vmem>>, vector<1x1x128xf32>
    %321 = vector.shape_cast %320 : vector<1x1x128xf32> to vector<1x128xf32>
    %c0_291 = arith.constant 0 : index
    %c64 = arith.constant 64 : index
    %c0_292 = arith.constant 0 : index
    %322 = vector.load %arg3[%c0_291, %c64, %c0_292] : memref<1x192x128xf32, #tpu.memory_space<vmem>>, vector<1x1x128xf32>
    %323 = vector.shape_cast %322 : vector<1x1x128xf32> to vector<1x128xf32>
    %324 = vector.shape_cast %321 : vector<1x128xf32> to vector<1x1x128xf32>
    tpu.vector_store %arg3[%c0_291, %c64, %c0_292], %324 {strides = array<i32>} : memref<1x192x128xf32, #tpu.memory_space<vmem>>, vector<1x1x128xf32>,
    %c0_293 = arith.constant 0 : index
    %c64_294 = arith.constant 64 : index
    %c0_295 = arith.constant 0 : index
    %325 = vector.load %arg2[%c0_293, %c64_294, %c0_295] : memref<1x192x128xf32, #tpu.memory_space<vmem>>, vector<1x1x128xf32>
    %326 = vector.shape_cast %325 : vector<1x1x128xf32> to vector<1x128xf32>
    %c0_296 = arith.constant 0 : index
    %c65 = arith.constant 65 : index
    %c0_297 = arith.constant 0 : index
    %327 = vector.load %arg3[%c0_296, %c65, %c0_297] : memref<1x192x128xf32, #tpu.memory_space<vmem>>, vector<1x1x128xf32>
    %328 = vector.shape_cast %327 : vector<1x1x128xf32> to vector<1x128xf32>
    %329 = vector.shape_cast %326 : vector<1x128xf32> to vector<1x1x128xf32>
    tpu.vector_store %arg3[%c0_296, %c65, %c0_297], %329 {strides = array<i32>} : memref<1x192x128xf32, #tpu.memory_space<vmem>>, vector<1x1x128xf32>,
    %c0_298 = arith.constant 0 : index
    %c112 = arith.constant 112 : index
    %c0_299 = arith.constant 0 : index
    %330 = vector.load %arg2[%c0_298, %c112, %c0_299] : memref<1x192x128xf32, #tpu.memory_space<vmem>>, vector<1x1x128xf32>
    %331 = vector.shape_cast %330 : vector<1x1x128xf32> to vector<1x128xf32>
    %c0_300 = arith.constant 0 : index
    %c66 = arith.constant 66 : index
    %c0_301 = arith.constant 0 : index
    %332 = vector.load %arg3[%c0_300, %c66, %c0_301] : memref<1x192x128xf32, #tpu.memory_space<vmem>>, vector<1x1x128xf32>
    %333 = vector.shape_cast %332 : vector<1x1x128xf32> to vector<1x128xf32>
    %334 = vector.shape_cast %331 : vector<1x128xf32> to vector<1x1x128xf32>
    tpu.vector_store %arg3[%c0_300, %c66, %c0_301], %334 {strides = array<i32>} : memref<1x192x128xf32, #tpu.memory_space<vmem>>, vector<1x1x128xf32>,
    %c0_302 = arith.constant 0 : index
    %c160 = arith.constant 160 : index
    %c0_303 = arith.constant 0 : index
    %335 = vector.load %arg2[%c0_302, %c160, %c0_303] : memref<1x192x128xf32, #tpu.memory_space<vmem>>, vector<1x1x128xf32>
    %336 = vector.shape_cast %335 : vector<1x1x128xf32> to vector<1x128xf32>
    %c0_304 = arith.constant 0 : index
    %c67 = arith.constant 67 : index
    %c0_305 = arith.constant 0 : index
    %337 = vector.load %arg3[%c0_304, %c67, %c0_305] : memref<1x192x128xf32, #tpu.memory_space<vmem>>, vector<1x1x128xf32>
    %338 = vector.shape_cast %337 : vector<1x1x128xf32> to vector<1x128xf32>
    %339 = vector.shape_cast %336 : vector<1x128xf32> to vector<1x1x128xf32>
    tpu.vector_store %arg3[%c0_304, %c67, %c0_305], %339 {strides = array<i32>} : memref<1x192x128xf32, #tpu.memory_space<vmem>>, vector<1x1x128xf32>,
    %c0_306 = arith.constant 0 : index
    %c17_307 = arith.constant 17 : index
    %c0_308 = arith.constant 0 : index
    %340 = vector.load %arg2[%c0_306, %c17_307, %c0_308] : memref<1x192x128xf32, #tpu.memory_space<vmem>>, vector<1x1x128xf32>
    %341 = vector.shape_cast %340 : vector<1x1x128xf32> to vector<1x128xf32>
    %c0_309 = arith.constant 0 : index
    %c68 = arith.constant 68 : index
    %c0_310 = arith.constant 0 : index
    %342 = vector.load %arg3[%c0_309, %c68, %c0_310] : memref<1x192x128xf32, #tpu.memory_space<vmem>>, vector<1x1x128xf32>
    %343 = vector.shape_cast %342 : vector<1x1x128xf32> to vector<1x128xf32>
    %344 = vector.shape_cast %341 : vector<1x128xf32> to vector<1x1x128xf32>
    tpu.vector_store %arg3[%c0_309, %c68, %c0_310], %344 {strides = array<i32>} : memref<1x192x128xf32, #tpu.memory_space<vmem>>, vector<1x1x128xf32>,
    %c0_311 = arith.constant 0 : index
    %c65_312 = arith.constant 65 : index
    %c0_313 = arith.constant 0 : index
    %345 = vector.load %arg2[%c0_311, %c65_312, %c0_313] : memref<1x192x128xf32, #tpu.memory_space<vmem>>, vector<1x1x128xf32>
    %346 = vector.shape_cast %345 : vector<1x1x128xf32> to vector<1x128xf32>
    %c0_314 = arith.constant 0 : index
    %c69 = arith.constant 69 : index
    %c0_315 = arith.constant 0 : index
    %347 = vector.load %arg3[%c0_314, %c69, %c0_315] : memref<1x192x128xf32, #tpu.memory_space<vmem>>, vector<1x1x128xf32>
    %348 = vector.shape_cast %347 : vector<1x1x128xf32> to vector<1x128xf32>
    %349 = vector.shape_cast %346 : vector<1x128xf32> to vector<1x1x128xf32>
    tpu.vector_store %arg3[%c0_314, %c69, %c0_315], %349 {strides = array<i32>} : memref<1x192x128xf32, #tpu.memory_space<vmem>>, vector<1x1x128xf32>,
    %c0_316 = arith.constant 0 : index
    %c113 = arith.constant 113 : index
    %c0_317 = arith.constant 0 : index
    %350 = vector.load %arg2[%c0_316, %c113, %c0_317] : memref<1x192x128xf32, #tpu.memory_space<vmem>>, vector<1x1x128xf32>
    %351 = vector.shape_cast %350 : vector<1x1x128xf32> to vector<1x128xf32>
    %c0_318 = arith.constant 0 : index
    %c70 = arith.constant 70 : index
    %c0_319 = arith.constant 0 : index
    %352 = vector.load %arg3[%c0_318, %c70, %c0_319] : memref<1x192x128xf32, #tpu.memory_space<vmem>>, vector<1x1x128xf32>
    %353 = vector.shape_cast %352 : vector<1x1x128xf32> to vector<1x128xf32>
    %354 = vector.shape_cast %351 : vector<1x128xf32> to vector<1x1x128xf32>
    tpu.vector_store %arg3[%c0_318, %c70, %c0_319], %354 {strides = array<i32>} : memref<1x192x128xf32, #tpu.memory_space<vmem>>, vector<1x1x128xf32>,
    %c0_320 = arith.constant 0 : index
    %c161 = arith.constant 161 : index
    %c0_321 = arith.constant 0 : index
    %355 = vector.load %arg2[%c0_320, %c161, %c0_321] : memref<1x192x128xf32, #tpu.memory_space<vmem>>, vector<1x1x128xf32>
    %356 = vector.shape_cast %355 : vector<1x1x128xf32> to vector<1x128xf32>
    %c0_322 = arith.constant 0 : index
    %c71 = arith.constant 71 : index
    %c0_323 = arith.constant 0 : index
    %357 = vector.load %arg3[%c0_322, %c71, %c0_323] : memref<1x192x128xf32, #tpu.memory_space<vmem>>, vector<1x1x128xf32>
    %358 = vector.shape_cast %357 : vector<1x1x128xf32> to vector<1x128xf32>
    %359 = vector.shape_cast %356 : vector<1x128xf32> to vector<1x1x128xf32>
    tpu.vector_store %arg3[%c0_322, %c71, %c0_323], %359 {strides = array<i32>} : memref<1x192x128xf32, #tpu.memory_space<vmem>>, vector<1x1x128xf32>,
    %c0_324 = arith.constant 0 : index
    %c18_325 = arith.constant 18 : index
    %c0_326 = arith.constant 0 : index
    %360 = vector.load %arg2[%c0_324, %c18_325, %c0_326] : memref<1x192x128xf32, #tpu.memory_space<vmem>>, vector<1x1x128xf32>
    %361 = vector.shape_cast %360 : vector<1x1x128xf32> to vector<1x128xf32>
    %c0_327 = arith.constant 0 : index
    %c72 = arith.constant 72 : index
    %c0_328 = arith.constant 0 : index
    %362 = vector.load %arg3[%c0_327, %c72, %c0_328] : memref<1x192x128xf32, #tpu.memory_space<vmem>>, vector<1x1x128xf32>
    %363 = vector.shape_cast %362 : vector<1x1x128xf32> to vector<1x128xf32>
    %364 = vector.shape_cast %361 : vector<1x128xf32> to vector<1x1x128xf32>
    tpu.vector_store %arg3[%c0_327, %c72, %c0_328], %364 {strides = array<i32>} : memref<1x192x128xf32, #tpu.memory_space<vmem>>, vector<1x1x128xf32>,
    %c0_329 = arith.constant 0 : index
    %c66_330 = arith.constant 66 : index
    %c0_331 = arith.constant 0 : index
    %365 = vector.load %arg2[%c0_329, %c66_330, %c0_331] : memref<1x192x128xf32, #tpu.memory_space<vmem>>, vector<1x1x128xf32>
    %366 = vector.shape_cast %365 : vector<1x1x128xf32> to vector<1x128xf32>
    %c0_332 = arith.constant 0 : index
    %c73 = arith.constant 73 : index
    %c0_333 = arith.constant 0 : index
    %367 = vector.load %arg3[%c0_332, %c73, %c0_333] : memref<1x192x128xf32, #tpu.memory_space<vmem>>, vector<1x1x128xf32>
    %368 = vector.shape_cast %367 : vector<1x1x128xf32> to vector<1x128xf32>
    %369 = vector.shape_cast %366 : vector<1x128xf32> to vector<1x1x128xf32>
    tpu.vector_store %arg3[%c0_332, %c73, %c0_333], %369 {strides = array<i32>} : memref<1x192x128xf32, #tpu.memory_space<vmem>>, vector<1x1x128xf32>,
    %c0_334 = arith.constant 0 : index
    %c114 = arith.constant 114 : index
    %c0_335 = arith.constant 0 : index
    %370 = vector.load %arg2[%c0_334, %c114, %c0_335] : memref<1x192x128xf32, #tpu.memory_space<vmem>>, vector<1x1x128xf32>
    %371 = vector.shape_cast %370 : vector<1x1x128xf32> to vector<1x128xf32>
    %c0_336 = arith.constant 0 : index
    %c74 = arith.constant 74 : index
    %c0_337 = arith.constant 0 : index
    %372 = vector.load %arg3[%c0_336, %c74, %c0_337] : memref<1x192x128xf32, #tpu.memory_space<vmem>>, vector<1x1x128xf32>
    %373 = vector.shape_cast %372 : vector<1x1x128xf32> to vector<1x128xf32>
    %374 = vector.shape_cast %371 : vector<1x128xf32> to vector<1x1x128xf32>
    tpu.vector_store %arg3[%c0_336, %c74, %c0_337], %374 {strides = array<i32>} : memref<1x192x128xf32, #tpu.memory_space<vmem>>, vector<1x1x128xf32>,
    %c0_338 = arith.constant 0 : index
    %c162 = arith.constant 162 : index
    %c0_339 = arith.constant 0 : index
    %375 = vector.load %arg2[%c0_338, %c162, %c0_339] : memref<1x192x128xf32, #tpu.memory_space<vmem>>, vector<1x1x128xf32>
    %376 = vector.shape_cast %375 : vector<1x1x128xf32> to vector<1x128xf32>
    %c0_340 = arith.constant 0 : index
    %c75 = arith.constant 75 : index
    %c0_341 = arith.constant 0 : index
    %377 = vector.load %arg3[%c0_340, %c75, %c0_341] : memref<1x192x128xf32, #tpu.memory_space<vmem>>, vector<1x1x128xf32>
    %378 = vector.shape_cast %377 : vector<1x1x128xf32> to vector<1x128xf32>
    %379 = vector.shape_cast %376 : vector<1x128xf32> to vector<1x1x128xf32>
    tpu.vector_store %arg3[%c0_340, %c75, %c0_341], %379 {strides = array<i32>} : memref<1x192x128xf32, #tpu.memory_space<vmem>>, vector<1x1x128xf32>,
    %c0_342 = arith.constant 0 : index
    %c19_343 = arith.constant 19 : index
    %c0_344 = arith.constant 0 : index
    %380 = vector.load %arg2[%c0_342, %c19_343, %c0_344] : memref<1x192x128xf32, #tpu.memory_space<vmem>>, vector<1x1x128xf32>
    %381 = vector.shape_cast %380 : vector<1x1x128xf32> to vector<1x128xf32>
    %c0_345 = arith.constant 0 : index
    %c76 = arith.constant 76 : index
    %c0_346 = arith.constant 0 : index
    %382 = vector.load %arg3[%c0_345, %c76, %c0_346] : memref<1x192x128xf32, #tpu.memory_space<vmem>>, vector<1x1x128xf32>
    %383 = vector.shape_cast %382 : vector<1x1x128xf32> to vector<1x128xf32>
    %384 = vector.shape_cast %381 : vector<1x128xf32> to vector<1x1x128xf32>
    tpu.vector_store %arg3[%c0_345, %c76, %c0_346], %384 {strides = array<i32>} : memref<1x192x128xf32, #tpu.memory_space<vmem>>, vector<1x1x128xf32>,
    %c0_347 = arith.constant 0 : index
    %c67_348 = arith.constant 67 : index
    %c0_349 = arith.constant 0 : index
    %385 = vector.load %arg2[%c0_347, %c67_348, %c0_349] : memref<1x192x128xf32, #tpu.memory_space<vmem>>, vector<1x1x128xf32>
    %386 = vector.shape_cast %385 : vector<1x1x128xf32> to vector<1x128xf32>
    %c0_350 = arith.constant 0 : index
    %c77 = arith.constant 77 : index
    %c0_351 = arith.constant 0 : index
    %387 = vector.load %arg3[%c0_350, %c77, %c0_351] : memref<1x192x128xf32, #tpu.memory_space<vmem>>, vector<1x1x128xf32>
    %388 = vector.shape_cast %387 : vector<1x1x128xf32> to vector<1x128xf32>
    %389 = vector.shape_cast %386 : vector<1x128xf32> to vector<1x1x128xf32>
    tpu.vector_store %arg3[%c0_350, %c77, %c0_351], %389 {strides = array<i32>} : memref<1x192x128xf32, #tpu.memory_space<vmem>>, vector<1x1x128xf32>,
    %c0_352 = arith.constant 0 : index
    %c115 = arith.constant 115 : index
    %c0_353 = arith.constant 0 : index
    %390 = vector.load %arg2[%c0_352, %c115, %c0_353] : memref<1x192x128xf32, #tpu.memory_space<vmem>>, vector<1x1x128xf32>
    %391 = vector.shape_cast %390 : vector<1x1x128xf32> to vector<1x128xf32>
    %c0_354 = arith.constant 0 : index
    %c78 = arith.constant 78 : index
    %c0_355 = arith.constant 0 : index
    %392 = vector.load %arg3[%c0_354, %c78, %c0_355] : memref<1x192x128xf32, #tpu.memory_space<vmem>>, vector<1x1x128xf32>
    %393 = vector.shape_cast %392 : vector<1x1x128xf32> to vector<1x128xf32>
    %394 = vector.shape_cast %391 : vector<1x128xf32> to vector<1x1x128xf32>
    tpu.vector_store %arg3[%c0_354, %c78, %c0_355], %394 {strides = array<i32>} : memref<1x192x128xf32, #tpu.memory_space<vmem>>, vector<1x1x128xf32>,
    %c0_356 = arith.constant 0 : index
    %c163 = arith.constant 163 : index
    %c0_357 = arith.constant 0 : index
    %395 = vector.load %arg2[%c0_356, %c163, %c0_357] : memref<1x192x128xf32, #tpu.memory_space<vmem>>, vector<1x1x128xf32>
    %396 = vector.shape_cast %395 : vector<1x1x128xf32> to vector<1x128xf32>
    %c0_358 = arith.constant 0 : index
    %c79 = arith.constant 79 : index
    %c0_359 = arith.constant 0 : index
    %397 = vector.load %arg3[%c0_358, %c79, %c0_359] : memref<1x192x128xf32, #tpu.memory_space<vmem>>, vector<1x1x128xf32>
    %398 = vector.shape_cast %397 : vector<1x1x128xf32> to vector<1x128xf32>
    %399 = vector.shape_cast %396 : vector<1x128xf32> to vector<1x1x128xf32>
    tpu.vector_store %arg3[%c0_358, %c79, %c0_359], %399 {strides = array<i32>} : memref<1x192x128xf32, #tpu.memory_space<vmem>>, vector<1x1x128xf32>,
    %c0_360 = arith.constant 0 : index
    %c20_361 = arith.constant 20 : index
    %c0_362 = arith.constant 0 : index
    %400 = vector.load %arg2[%c0_360, %c20_361, %c0_362] : memref<1x192x128xf32, #tpu.memory_space<vmem>>, vector<1x1x128xf32>
    %401 = vector.shape_cast %400 : vector<1x1x128xf32> to vector<1x128xf32>
    %c0_363 = arith.constant 0 : index
    %c80 = arith.constant 80 : index
    %c0_364 = arith.constant 0 : index
    %402 = vector.load %arg3[%c0_363, %c80, %c0_364] : memref<1x192x128xf32, #tpu.memory_space<vmem>>, vector<1x1x128xf32>
    %403 = vector.shape_cast %402 : vector<1x1x128xf32> to vector<1x128xf32>
    %404 = vector.shape_cast %401 : vector<1x128xf32> to vector<1x1x128xf32>
    tpu.vector_store %arg3[%c0_363, %c80, %c0_364], %404 {strides = array<i32>} : memref<1x192x128xf32, #tpu.memory_space<vmem>>, vector<1x1x128xf32>,
    %c0_365 = arith.constant 0 : index
    %c68_366 = arith.constant 68 : index
    %c0_367 = arith.constant 0 : index
    %405 = vector.load %arg2[%c0_365, %c68_366, %c0_367] : memref<1x192x128xf32, #tpu.memory_space<vmem>>, vector<1x1x128xf32>
    %406 = vector.shape_cast %405 : vector<1x1x128xf32> to vector<1x128xf32>
    %c0_368 = arith.constant 0 : index
    %c81 = arith.constant 81 : index
    %c0_369 = arith.constant 0 : index
    %407 = vector.load %arg3[%c0_368, %c81, %c0_369] : memref<1x192x128xf32, #tpu.memory_space<vmem>>, vector<1x1x128xf32>
    %408 = vector.shape_cast %407 : vector<1x1x128xf32> to vector<1x128xf32>
    %409 = vector.shape_cast %406 : vector<1x128xf32> to vector<1x1x128xf32>
    tpu.vector_store %arg3[%c0_368, %c81, %c0_369], %409 {strides = array<i32>} : memref<1x192x128xf32, #tpu.memory_space<vmem>>, vector<1x1x128xf32>,
    %c0_370 = arith.constant 0 : index
    %c116 = arith.constant 116 : index
    %c0_371 = arith.constant 0 : index
    %410 = vector.load %arg2[%c0_370, %c116, %c0_371] : memref<1x192x128xf32, #tpu.memory_space<vmem>>, vector<1x1x128xf32>
    %411 = vector.shape_cast %410 : vector<1x1x128xf32> to vector<1x128xf32>
    %c0_372 = arith.constant 0 : index
    %c82 = arith.constant 82 : index
    %c0_373 = arith.constant 0 : index
    %412 = vector.load %arg3[%c0_372, %c82, %c0_373] : memref<1x192x128xf32, #tpu.memory_space<vmem>>, vector<1x1x128xf32>
    %413 = vector.shape_cast %412 : vector<1x1x128xf32> to vector<1x128xf32>
    %414 = vector.shape_cast %411 : vector<1x128xf32> to vector<1x1x128xf32>
    tpu.vector_store %arg3[%c0_372, %c82, %c0_373], %414 {strides = array<i32>} : memref<1x192x128xf32, #tpu.memory_space<vmem>>, vector<1x1x128xf32>,
    %c0_374 = arith.constant 0 : index
    %c164 = arith.constant 164 : index
    %c0_375 = arith.constant 0 : index
    %415 = vector.load %arg2[%c0_374, %c164, %c0_375] : memref<1x192x128xf32, #tpu.memory_space<vmem>>, vector<1x1x128xf32>
    %416 = vector.shape_cast %415 : vector<1x1x128xf32> to vector<1x128xf32>
    %c0_376 = arith.constant 0 : index
    %c83 = arith.constant 83 : index
    %c0_377 = arith.constant 0 : index
    %417 = vector.load %arg3[%c0_376, %c83, %c0_377] : memref<1x192x128xf32, #tpu.memory_space<vmem>>, vector<1x1x128xf32>
    %418 = vector.shape_cast %417 : vector<1x1x128xf32> to vector<1x128xf32>
    %419 = vector.shape_cast %416 : vector<1x128xf32> to vector<1x1x128xf32>
    tpu.vector_store %arg3[%c0_376, %c83, %c0_377], %419 {strides = array<i32>} : memref<1x192x128xf32, #tpu.memory_space<vmem>>, vector<1x1x128xf32>,
    %c0_378 = arith.constant 0 : index
    %c21_379 = arith.constant 21 : index
    %c0_380 = arith.constant 0 : index
    %420 = vector.load %arg2[%c0_378, %c21_379, %c0_380] : memref<1x192x128xf32, #tpu.memory_space<vmem>>, vector<1x1x128xf32>
    %421 = vector.shape_cast %420 : vector<1x1x128xf32> to vector<1x128xf32>
    %c0_381 = arith.constant 0 : index
    %c84 = arith.constant 84 : index
    %c0_382 = arith.constant 0 : index
    %422 = vector.load %arg3[%c0_381, %c84, %c0_382] : memref<1x192x128xf32, #tpu.memory_space<vmem>>, vector<1x1x128xf32>
    %423 = vector.shape_cast %422 : vector<1x1x128xf32> to vector<1x128xf32>
    %424 = vector.shape_cast %421 : vector<1x128xf32> to vector<1x1x128xf32>
    tpu.vector_store %arg3[%c0_381, %c84, %c0_382], %424 {strides = array<i32>} : memref<1x192x128xf32, #tpu.memory_space<vmem>>, vector<1x1x128xf32>,
    %c0_383 = arith.constant 0 : index
    %c69_384 = arith.constant 69 : index
    %c0_385 = arith.constant 0 : index
    %425 = vector.load %arg2[%c0_383, %c69_384, %c0_385] : memref<1x192x128xf32, #tpu.memory_space<vmem>>, vector<1x1x128xf32>
    %426 = vector.shape_cast %425 : vector<1x1x128xf32> to vector<1x128xf32>
    %c0_386 = arith.constant 0 : index
    %c85 = arith.constant 85 : index
    %c0_387 = arith.constant 0 : index
    %427 = vector.load %arg3[%c0_386, %c85, %c0_387] : memref<1x192x128xf32, #tpu.memory_space<vmem>>, vector<1x1x128xf32>
    %428 = vector.shape_cast %427 : vector<1x1x128xf32> to vector<1x128xf32>
    %429 = vector.shape_cast %426 : vector<1x128xf32> to vector<1x1x128xf32>
    tpu.vector_store %arg3[%c0_386, %c85, %c0_387], %429 {strides = array<i32>} : memref<1x192x128xf32, #tpu.memory_space<vmem>>, vector<1x1x128xf32>,
    %c0_388 = arith.constant 0 : index
    %c117 = arith.constant 117 : index
    %c0_389 = arith.constant 0 : index
    %430 = vector.load %arg2[%c0_388, %c117, %c0_389] : memref<1x192x128xf32, #tpu.memory_space<vmem>>, vector<1x1x128xf32>
    %431 = vector.shape_cast %430 : vector<1x1x128xf32> to vector<1x128xf32>
    %c0_390 = arith.constant 0 : index
    %c86 = arith.constant 86 : index
    %c0_391 = arith.constant 0 : index
    %432 = vector.load %arg3[%c0_390, %c86, %c0_391] : memref<1x192x128xf32, #tpu.memory_space<vmem>>, vector<1x1x128xf32>
    %433 = vector.shape_cast %432 : vector<1x1x128xf32> to vector<1x128xf32>
    %434 = vector.shape_cast %431 : vector<1x128xf32> to vector<1x1x128xf32>
    tpu.vector_store %arg3[%c0_390, %c86, %c0_391], %434 {strides = array<i32>} : memref<1x192x128xf32, #tpu.memory_space<vmem>>, vector<1x1x128xf32>,
    %c0_392 = arith.constant 0 : index
    %c165 = arith.constant 165 : index
    %c0_393 = arith.constant 0 : index
    %435 = vector.load %arg2[%c0_392, %c165, %c0_393] : memref<1x192x128xf32, #tpu.memory_space<vmem>>, vector<1x1x128xf32>
    %436 = vector.shape_cast %435 : vector<1x1x128xf32> to vector<1x128xf32>
    %c0_394 = arith.constant 0 : index
    %c87 = arith.constant 87 : index
    %c0_395 = arith.constant 0 : index
    %437 = vector.load %arg3[%c0_394, %c87, %c0_395] : memref<1x192x128xf32, #tpu.memory_space<vmem>>, vector<1x1x128xf32>
    %438 = vector.shape_cast %437 : vector<1x1x128xf32> to vector<1x128xf32>
    %439 = vector.shape_cast %436 : vector<1x128xf32> to vector<1x1x128xf32>
    tpu.vector_store %arg3[%c0_394, %c87, %c0_395], %439 {strides = array<i32>} : memref<1x192x128xf32, #tpu.memory_space<vmem>>, vector<1x1x128xf32>,
    %c0_396 = arith.constant 0 : index
    %c22_397 = arith.constant 22 : index
    %c0_398 = arith.constant 0 : index
    %440 = vector.load %arg2[%c0_396, %c22_397, %c0_398] : memref<1x192x128xf32, #tpu.memory_space<vmem>>, vector<1x1x128xf32>
    %441 = vector.shape_cast %440 : vector<1x1x128xf32> to vector<1x128xf32>
    %c0_399 = arith.constant 0 : index
    %c88 = arith.constant 88 : index
    %c0_400 = arith.constant 0 : index
    %442 = vector.load %arg3[%c0_399, %c88, %c0_400] : memref<1x192x128xf32, #tpu.memory_space<vmem>>, vector<1x1x128xf32>
    %443 = vector.shape_cast %442 : vector<1x1x128xf32> to vector<1x128xf32>
    %444 = vector.shape_cast %441 : vector<1x128xf32> to vector<1x1x128xf32>
    tpu.vector_store %arg3[%c0_399, %c88, %c0_400], %444 {strides = array<i32>} : memref<1x192x128xf32, #tpu.memory_space<vmem>>, vector<1x1x128xf32>,
    %c0_401 = arith.constant 0 : index
    %c70_402 = arith.constant 70 : index
    %c0_403 = arith.constant 0 : index
    %445 = vector.load %arg2[%c0_401, %c70_402, %c0_403] : memref<1x192x128xf32, #tpu.memory_space<vmem>>, vector<1x1x128xf32>
    %446 = vector.shape_cast %445 : vector<1x1x128xf32> to vector<1x128xf32>
    %c0_404 = arith.constant 0 : index
    %c89 = arith.constant 89 : index
    %c0_405 = arith.constant 0 : index
    %447 = vector.load %arg3[%c0_404, %c89, %c0_405] : memref<1x192x128xf32, #tpu.memory_space<vmem>>, vector<1x1x128xf32>
    %448 = vector.shape_cast %447 : vector<1x1x128xf32> to vector<1x128xf32>
    %449 = vector.shape_cast %446 : vector<1x128xf32> to vector<1x1x128xf32>
    tpu.vector_store %arg3[%c0_404, %c89, %c0_405], %449 {strides = array<i32>} : memref<1x192x128xf32, #tpu.memory_space<vmem>>, vector<1x1x128xf32>,
    %c0_406 = arith.constant 0 : index
    %c118 = arith.constant 118 : index
    %c0_407 = arith.constant 0 : index
    %450 = vector.load %arg2[%c0_406, %c118, %c0_407] : memref<1x192x128xf32, #tpu.memory_space<vmem>>, vector<1x1x128xf32>
    %451 = vector.shape_cast %450 : vector<1x1x128xf32> to vector<1x128xf32>
    %c0_408 = arith.constant 0 : index
    %c90 = arith.constant 90 : index
    %c0_409 = arith.constant 0 : index
    %452 = vector.load %arg3[%c0_408, %c90, %c0_409] : memref<1x192x128xf32, #tpu.memory_space<vmem>>, vector<1x1x128xf32>
    %453 = vector.shape_cast %452 : vector<1x1x128xf32> to vector<1x128xf32>
    %454 = vector.shape_cast %451 : vector<1x128xf32> to vector<1x1x128xf32>
    tpu.vector_store %arg3[%c0_408, %c90, %c0_409], %454 {strides = array<i32>} : memref<1x192x128xf32, #tpu.memory_space<vmem>>, vector<1x1x128xf32>,
    %c0_410 = arith.constant 0 : index
    %c166 = arith.constant 166 : index
    %c0_411 = arith.constant 0 : index
    %455 = vector.load %arg2[%c0_410, %c166, %c0_411] : memref<1x192x128xf32, #tpu.memory_space<vmem>>, vector<1x1x128xf32>
    %456 = vector.shape_cast %455 : vector<1x1x128xf32> to vector<1x128xf32>
    %c0_412 = arith.constant 0 : index
    %c91 = arith.constant 91 : index
    %c0_413 = arith.constant 0 : index
    %457 = vector.load %arg3[%c0_412, %c91, %c0_413] : memref<1x192x128xf32, #tpu.memory_space<vmem>>, vector<1x1x128xf32>
    %458 = vector.shape_cast %457 : vector<1x1x128xf32> to vector<1x128xf32>
    %459 = vector.shape_cast %456 : vector<1x128xf32> to vector<1x1x128xf32>
    tpu.vector_store %arg3[%c0_412, %c91, %c0_413], %459 {strides = array<i32>} : memref<1x192x128xf32, #tpu.memory_space<vmem>>, vector<1x1x128xf32>,
    %c0_414 = arith.constant 0 : index
    %c23_415 = arith.constant 23 : index
    %c0_416 = arith.constant 0 : index
    %460 = vector.load %arg2[%c0_414, %c23_415, %c0_416] : memref<1x192x128xf32, #tpu.memory_space<vmem>>, vector<1x1x128xf32>
    %461 = vector.shape_cast %460 : vector<1x1x128xf32> to vector<1x128xf32>
    %c0_417 = arith.constant 0 : index
    %c92 = arith.constant 92 : index
    %c0_418 = arith.constant 0 : index
    %462 = vector.load %arg3[%c0_417, %c92, %c0_418] : memref<1x192x128xf32, #tpu.memory_space<vmem>>, vector<1x1x128xf32>
    %463 = vector.shape_cast %462 : vector<1x1x128xf32> to vector<1x128xf32>
    %464 = vector.shape_cast %461 : vector<1x128xf32> to vector<1x1x128xf32>
    tpu.vector_store %arg3[%c0_417, %c92, %c0_418], %464 {strides = array<i32>} : memref<1x192x128xf32, #tpu.memory_space<vmem>>, vector<1x1x128xf32>,
    %c0_419 = arith.constant 0 : index
    %c71_420 = arith.constant 71 : index
    %c0_421 = arith.constant 0 : index
    %465 = vector.load %arg2[%c0_419, %c71_420, %c0_421] : memref<1x192x128xf32, #tpu.memory_space<vmem>>, vector<1x1x128xf32>
    %466 = vector.shape_cast %465 : vector<1x1x128xf32> to vector<1x128xf32>
    %c0_422 = arith.constant 0 : index
    %c93 = arith.constant 93 : index
    %c0_423 = arith.constant 0 : index
    %467 = vector.load %arg3[%c0_422, %c93, %c0_423] : memref<1x192x128xf32, #tpu.memory_space<vmem>>, vector<1x1x128xf32>
    %468 = vector.shape_cast %467 : vector<1x1x128xf32> to vector<1x128xf32>
    %469 = vector.shape_cast %466 : vector<1x128xf32> to vector<1x1x128xf32>
    tpu.vector_store %arg3[%c0_422, %c93, %c0_423], %469 {strides = array<i32>} : memref<1x192x128xf32, #tpu.memory_space<vmem>>, vector<1x1x128xf32>,
    %c0_424 = arith.constant 0 : index
    %c119 = arith.constant 119 : index
    %c0_425 = arith.constant 0 : index
    %470 = vector.load %arg2[%c0_424, %c119, %c0_425] : memref<1x192x128xf32, #tpu.memory_space<vmem>>, vector<1x1x128xf32>
    %471 = vector.shape_cast %470 : vector<1x1x128xf32> to vector<1x128xf32>
    %c0_426 = arith.constant 0 : index
    %c94 = arith.constant 94 : index
    %c0_427 = arith.constant 0 : index
    %472 = vector.load %arg3[%c0_426, %c94, %c0_427] : memref<1x192x128xf32, #tpu.memory_space<vmem>>, vector<1x1x128xf32>
    %473 = vector.shape_cast %472 : vector<1x1x128xf32> to vector<1x128xf32>
    %474 = vector.shape_cast %471 : vector<1x128xf32> to vector<1x1x128xf32>
    tpu.vector_store %arg3[%c0_426, %c94, %c0_427], %474 {strides = array<i32>} : memref<1x192x128xf32, #tpu.memory_space<vmem>>, vector<1x1x128xf32>,
    %c0_428 = arith.constant 0 : index
    %c167 = arith.constant 167 : index
    %c0_429 = arith.constant 0 : index
    %475 = vector.load %arg2[%c0_428, %c167, %c0_429] : memref<1x192x128xf32, #tpu.memory_space<vmem>>, vector<1x1x128xf32>
    %476 = vector.shape_cast %475 : vector<1x1x128xf32> to vector<1x128xf32>
    %c0_430 = arith.constant 0 : index
    %c95 = arith.constant 95 : index
    %c0_431 = arith.constant 0 : index
    %477 = vector.load %arg3[%c0_430, %c95, %c0_431] : memref<1x192x128xf32, #tpu.memory_space<vmem>>, vector<1x1x128xf32>
    %478 = vector.shape_cast %477 : vector<1x1x128xf32> to vector<1x128xf32>
    %479 = vector.shape_cast %476 : vector<1x128xf32> to vector<1x1x128xf32>
    tpu.vector_store %arg3[%c0_430, %c95, %c0_431], %479 {strides = array<i32>} : memref<1x192x128xf32, #tpu.memory_space<vmem>>, vector<1x1x128xf32>,
    %c0_432 = arith.constant 0 : index
    %c24_433 = arith.constant 24 : index
    %c0_434 = arith.constant 0 : index
    %480 = vector.load %arg2[%c0_432, %c24_433, %c0_434] : memref<1x192x128xf32, #tpu.memory_space<vmem>>, vector<1x1x128xf32>
    %481 = vector.shape_cast %480 : vector<1x1x128xf32> to vector<1x128xf32>
    %c0_435 = arith.constant 0 : index
    %c96_436 = arith.constant 96 : index
    %c0_437 = arith.constant 0 : index
    %482 = vector.load %arg3[%c0_435, %c96_436, %c0_437] : memref<1x192x128xf32, #tpu.memory_space<vmem>>, vector<1x1x128xf32>
    %483 = vector.shape_cast %482 : vector<1x1x128xf32> to vector<1x128xf32>
    %484 = vector.shape_cast %481 : vector<1x128xf32> to vector<1x1x128xf32>
    tpu.vector_store %arg3[%c0_435, %c96_436, %c0_437], %484 {strides = array<i32>} : memref<1x192x128xf32, #tpu.memory_space<vmem>>, vector<1x1x128xf32>,
    %c0_438 = arith.constant 0 : index
    %c72_439 = arith.constant 72 : index
    %c0_440 = arith.constant 0 : index
    %485 = vector.load %arg2[%c0_438, %c72_439, %c0_440] : memref<1x192x128xf32, #tpu.memory_space<vmem>>, vector<1x1x128xf32>
    %486 = vector.shape_cast %485 : vector<1x1x128xf32> to vector<1x128xf32>
    %c0_441 = arith.constant 0 : index
    %c97_442 = arith.constant 97 : index
    %c0_443 = arith.constant 0 : index
    %487 = vector.load %arg3[%c0_441, %c97_442, %c0_443] : memref<1x192x128xf32, #tpu.memory_space<vmem>>, vector<1x1x128xf32>
    %488 = vector.shape_cast %487 : vector<1x1x128xf32> to vector<1x128xf32>
    %489 = vector.shape_cast %486 : vector<1x128xf32> to vector<1x1x128xf32>
    tpu.vector_store %arg3[%c0_441, %c97_442, %c0_443], %489 {strides = array<i32>} : memref<1x192x128xf32, #tpu.memory_space<vmem>>, vector<1x1x128xf32>,
    %c0_444 = arith.constant 0 : index
    %c120 = arith.constant 120 : index
    %c0_445 = arith.constant 0 : index
    %490 = vector.load %arg2[%c0_444, %c120, %c0_445] : memref<1x192x128xf32, #tpu.memory_space<vmem>>, vector<1x1x128xf32>
    %491 = vector.shape_cast %490 : vector<1x1x128xf32> to vector<1x128xf32>
    %c0_446 = arith.constant 0 : index
    %c98_447 = arith.constant 98 : index
    %c0_448 = arith.constant 0 : index
    %492 = vector.load %arg3[%c0_446, %c98_447, %c0_448] : memref<1x192x128xf32, #tpu.memory_space<vmem>>, vector<1x1x128xf32>
    %493 = vector.shape_cast %492 : vector<1x1x128xf32> to vector<1x128xf32>
    %494 = vector.shape_cast %491 : vector<1x128xf32> to vector<1x1x128xf32>
    tpu.vector_store %arg3[%c0_446, %c98_447, %c0_448], %494 {strides = array<i32>} : memref<1x192x128xf32, #tpu.memory_space<vmem>>, vector<1x1x128xf32>,
    %c0_449 = arith.constant 0 : index
    %c168 = arith.constant 168 : index
    %c0_450 = arith.constant 0 : index
    %495 = vector.load %arg2[%c0_449, %c168, %c0_450] : memref<1x192x128xf32, #tpu.memory_space<vmem>>, vector<1x1x128xf32>
    %496 = vector.shape_cast %495 : vector<1x1x128xf32> to vector<1x128xf32>
    %c0_451 = arith.constant 0 : index
    %c99_452 = arith.constant 99 : index
    %c0_453 = arith.constant 0 : index
    %497 = vector.load %arg3[%c0_451, %c99_452, %c0_453] : memref<1x192x128xf32, #tpu.memory_space<vmem>>, vector<1x1x128xf32>
    %498 = vector.shape_cast %497 : vector<1x1x128xf32> to vector<1x128xf32>
    %499 = vector.shape_cast %496 : vector<1x128xf32> to vector<1x1x128xf32>
    tpu.vector_store %arg3[%c0_451, %c99_452, %c0_453], %499 {strides = array<i32>} : memref<1x192x128xf32, #tpu.memory_space<vmem>>, vector<1x1x128xf32>,
    %c0_454 = arith.constant 0 : index
    %c25_455 = arith.constant 25 : index
    %c0_456 = arith.constant 0 : index
    %500 = vector.load %arg2[%c0_454, %c25_455, %c0_456] : memref<1x192x128xf32, #tpu.memory_space<vmem>>, vector<1x1x128xf32>
    %501 = vector.shape_cast %500 : vector<1x1x128xf32> to vector<1x128xf32>
    %c0_457 = arith.constant 0 : index
    %c100_458 = arith.constant 100 : index
    %c0_459 = arith.constant 0 : index
    %502 = vector.load %arg3[%c0_457, %c100_458, %c0_459] : memref<1x192x128xf32, #tpu.memory_space<vmem>>, vector<1x1x128xf32>
    %503 = vector.shape_cast %502 : vector<1x1x128xf32> to vector<1x128xf32>
    %504 = vector.shape_cast %501 : vector<1x128xf32> to vector<1x1x128xf32>
    tpu.vector_store %arg3[%c0_457, %c100_458, %c0_459], %504 {strides = array<i32>} : memref<1x192x128xf32, #tpu.memory_space<vmem>>, vector<1x1x128xf32>,
    %c0_460 = arith.constant 0 : index
    %c73_461 = arith.constant 73 : index
    %c0_462 = arith.constant 0 : index
    %505 = vector.load %arg2[%c0_460, %c73_461, %c0_462] : memref<1x192x128xf32, #tpu.memory_space<vmem>>, vector<1x1x128xf32>
    %506 = vector.shape_cast %505 : vector<1x1x128xf32> to vector<1x128xf32>
    %c0_463 = arith.constant 0 : index
    %c101_464 = arith.constant 101 : index
    %c0_465 = arith.constant 0 : index
    %507 = vector.load %arg3[%c0_463, %c101_464, %c0_465] : memref<1x192x128xf32, #tpu.memory_space<vmem>>, vector<1x1x128xf32>
    %508 = vector.shape_cast %507 : vector<1x1x128xf32> to vector<1x128xf32>
    %509 = vector.shape_cast %506 : vector<1x128xf32> to vector<1x1x128xf32>
    tpu.vector_store %arg3[%c0_463, %c101_464, %c0_465], %509 {strides = array<i32>} : memref<1x192x128xf32, #tpu.memory_space<vmem>>, vector<1x1x128xf32>,
    %c0_466 = arith.constant 0 : index
    %c121 = arith.constant 121 : index
    %c0_467 = arith.constant 0 : index
    %510 = vector.load %arg2[%c0_466, %c121, %c0_467] : memref<1x192x128xf32, #tpu.memory_space<vmem>>, vector<1x1x128xf32>
    %511 = vector.shape_cast %510 : vector<1x1x128xf32> to vector<1x128xf32>
    %c0_468 = arith.constant 0 : index
    %c102_469 = arith.constant 102 : index
    %c0_470 = arith.constant 0 : index
    %512 = vector.load %arg3[%c0_468, %c102_469, %c0_470] : memref<1x192x128xf32, #tpu.memory_space<vmem>>, vector<1x1x128xf32>
    %513 = vector.shape_cast %512 : vector<1x1x128xf32> to vector<1x128xf32>
    %514 = vector.shape_cast %511 : vector<1x128xf32> to vector<1x1x128xf32>
    tpu.vector_store %arg3[%c0_468, %c102_469, %c0_470], %514 {strides = array<i32>} : memref<1x192x128xf32, #tpu.memory_space<vmem>>, vector<1x1x128xf32>,
    %c0_471 = arith.constant 0 : index
    %c169 = arith.constant 169 : index
    %c0_472 = arith.constant 0 : index
    %515 = vector.load %arg2[%c0_471, %c169, %c0_472] : memref<1x192x128xf32, #tpu.memory_space<vmem>>, vector<1x1x128xf32>
    %516 = vector.shape_cast %515 : vector<1x1x128xf32> to vector<1x128xf32>
    %c0_473 = arith.constant 0 : index
    %c103_474 = arith.constant 103 : index
    %c0_475 = arith.constant 0 : index
    %517 = vector.load %arg3[%c0_473, %c103_474, %c0_475] : memref<1x192x128xf32, #tpu.memory_space<vmem>>, vector<1x1x128xf32>
    %518 = vector.shape_cast %517 : vector<1x1x128xf32> to vector<1x128xf32>
    %519 = vector.shape_cast %516 : vector<1x128xf32> to vector<1x1x128xf32>
    tpu.vector_store %arg3[%c0_473, %c103_474, %c0_475], %519 {strides = array<i32>} : memref<1x192x128xf32, #tpu.memory_space<vmem>>, vector<1x1x128xf32>,
    %c0_476 = arith.constant 0 : index
    %c26_477 = arith.constant 26 : index
    %c0_478 = arith.constant 0 : index
    %520 = vector.load %arg2[%c0_476, %c26_477, %c0_478] : memref<1x192x128xf32, #tpu.memory_space<vmem>>, vector<1x1x128xf32>
    %521 = vector.shape_cast %520 : vector<1x1x128xf32> to vector<1x128xf32>
    %c0_479 = arith.constant 0 : index
    %c104_480 = arith.constant 104 : index
    %c0_481 = arith.constant 0 : index
    %522 = vector.load %arg3[%c0_479, %c104_480, %c0_481] : memref<1x192x128xf32, #tpu.memory_space<vmem>>, vector<1x1x128xf32>
    %523 = vector.shape_cast %522 : vector<1x1x128xf32> to vector<1x128xf32>
    %524 = vector.shape_cast %521 : vector<1x128xf32> to vector<1x1x128xf32>
    tpu.vector_store %arg3[%c0_479, %c104_480, %c0_481], %524 {strides = array<i32>} : memref<1x192x128xf32, #tpu.memory_space<vmem>>, vector<1x1x128xf32>,
    %c0_482 = arith.constant 0 : index
    %c74_483 = arith.constant 74 : index
    %c0_484 = arith.constant 0 : index
    %525 = vector.load %arg2[%c0_482, %c74_483, %c0_484] : memref<1x192x128xf32, #tpu.memory_space<vmem>>, vector<1x1x128xf32>
    %526 = vector.shape_cast %525 : vector<1x1x128xf32> to vector<1x128xf32>
    %c0_485 = arith.constant 0 : index
    %c105_486 = arith.constant 105 : index
    %c0_487 = arith.constant 0 : index
    %527 = vector.load %arg3[%c0_485, %c105_486, %c0_487] : memref<1x192x128xf32, #tpu.memory_space<vmem>>, vector<1x1x128xf32>
    %528 = vector.shape_cast %527 : vector<1x1x128xf32> to vector<1x128xf32>
    %529 = vector.shape_cast %526 : vector<1x128xf32> to vector<1x1x128xf32>
    tpu.vector_store %arg3[%c0_485, %c105_486, %c0_487], %529 {strides = array<i32>} : memref<1x192x128xf32, #tpu.memory_space<vmem>>, vector<1x1x128xf32>,
    %c0_488 = arith.constant 0 : index
    %c122 = arith.constant 122 : index
    %c0_489 = arith.constant 0 : index
    %530 = vector.load %arg2[%c0_488, %c122, %c0_489] : memref<1x192x128xf32, #tpu.memory_space<vmem>>, vector<1x1x128xf32>
    %531 = vector.shape_cast %530 : vector<1x1x128xf32> to vector<1x128xf32>
    %c0_490 = arith.constant 0 : index
    %c106_491 = arith.constant 106 : index
    %c0_492 = arith.constant 0 : index
    %532 = vector.load %arg3[%c0_490, %c106_491, %c0_492] : memref<1x192x128xf32, #tpu.memory_space<vmem>>, vector<1x1x128xf32>
    %533 = vector.shape_cast %532 : vector<1x1x128xf32> to vector<1x128xf32>
    %534 = vector.shape_cast %531 : vector<1x128xf32> to vector<1x1x128xf32>
    tpu.vector_store %arg3[%c0_490, %c106_491, %c0_492], %534 {strides = array<i32>} : memref<1x192x128xf32, #tpu.memory_space<vmem>>, vector<1x1x128xf32>,
    %c0_493 = arith.constant 0 : index
    %c170 = arith.constant 170 : index
    %c0_494 = arith.constant 0 : index
    %535 = vector.load %arg2[%c0_493, %c170, %c0_494] : memref<1x192x128xf32, #tpu.memory_space<vmem>>, vector<1x1x128xf32>
    %536 = vector.shape_cast %535 : vector<1x1x128xf32> to vector<1x128xf32>
    %c0_495 = arith.constant 0 : index
    %c107_496 = arith.constant 107 : index
    %c0_497 = arith.constant 0 : index
    %537 = vector.load %arg3[%c0_495, %c107_496, %c0_497] : memref<1x192x128xf32, #tpu.memory_space<vmem>>, vector<1x1x128xf32>
    %538 = vector.shape_cast %537 : vector<1x1x128xf32> to vector<1x128xf32>
    %539 = vector.shape_cast %536 : vector<1x128xf32> to vector<1x1x128xf32>
    tpu.vector_store %arg3[%c0_495, %c107_496, %c0_497], %539 {strides = array<i32>} : memref<1x192x128xf32, #tpu.memory_space<vmem>>, vector<1x1x128xf32>,
    %c0_498 = arith.constant 0 : index
    %c27_499 = arith.constant 27 : index
    %c0_500 = arith.constant 0 : index
    %540 = vector.load %arg2[%c0_498, %c27_499, %c0_500] : memref<1x192x128xf32, #tpu.memory_space<vmem>>, vector<1x1x128xf32>
    %541 = vector.shape_cast %540 : vector<1x1x128xf32> to vector<1x128xf32>
    %c0_501 = arith.constant 0 : index
    %c108_502 = arith.constant 108 : index
    %c0_503 = arith.constant 0 : index
    %542 = vector.load %arg3[%c0_501, %c108_502, %c0_503] : memref<1x192x128xf32, #tpu.memory_space<vmem>>, vector<1x1x128xf32>
    %543 = vector.shape_cast %542 : vector<1x1x128xf32> to vector<1x128xf32>
    %544 = vector.shape_cast %541 : vector<1x128xf32> to vector<1x1x128xf32>
    tpu.vector_store %arg3[%c0_501, %c108_502, %c0_503], %544 {strides = array<i32>} : memref<1x192x128xf32, #tpu.memory_space<vmem>>, vector<1x1x128xf32>,
    %c0_504 = arith.constant 0 : index
    %c75_505 = arith.constant 75 : index
    %c0_506 = arith.constant 0 : index
    %545 = vector.load %arg2[%c0_504, %c75_505, %c0_506] : memref<1x192x128xf32, #tpu.memory_space<vmem>>, vector<1x1x128xf32>
    %546 = vector.shape_cast %545 : vector<1x1x128xf32> to vector<1x128xf32>
    %c0_507 = arith.constant 0 : index
    %c109_508 = arith.constant 109 : index
    %c0_509 = arith.constant 0 : index
    %547 = vector.load %arg3[%c0_507, %c109_508, %c0_509] : memref<1x192x128xf32, #tpu.memory_space<vmem>>, vector<1x1x128xf32>
    %548 = vector.shape_cast %547 : vector<1x1x128xf32> to vector<1x128xf32>
    %549 = vector.shape_cast %546 : vector<1x128xf32> to vector<1x1x128xf32>
    tpu.vector_store %arg3[%c0_507, %c109_508, %c0_509], %549 {strides = array<i32>} : memref<1x192x128xf32, #tpu.memory_space<vmem>>, vector<1x1x128xf32>,
    %c0_510 = arith.constant 0 : index
    %c123 = arith.constant 123 : index
    %c0_511 = arith.constant 0 : index
    %550 = vector.load %arg2[%c0_510, %c123, %c0_511] : memref<1x192x128xf32, #tpu.memory_space<vmem>>, vector<1x1x128xf32>
    %551 = vector.shape_cast %550 : vector<1x1x128xf32> to vector<1x128xf32>
    %c0_512 = arith.constant 0 : index
    %c110_513 = arith.constant 110 : index
    %c0_514 = arith.constant 0 : index
    %552 = vector.load %arg3[%c0_512, %c110_513, %c0_514] : memref<1x192x128xf32, #tpu.memory_space<vmem>>, vector<1x1x128xf32>
    %553 = vector.shape_cast %552 : vector<1x1x128xf32> to vector<1x128xf32>
    %554 = vector.shape_cast %551 : vector<1x128xf32> to vector<1x1x128xf32>
    tpu.vector_store %arg3[%c0_512, %c110_513, %c0_514], %554 {strides = array<i32>} : memref<1x192x128xf32, #tpu.memory_space<vmem>>, vector<1x1x128xf32>,
    %c0_515 = arith.constant 0 : index
    %c171 = arith.constant 171 : index
    %c0_516 = arith.constant 0 : index
    %555 = vector.load %arg2[%c0_515, %c171, %c0_516] : memref<1x192x128xf32, #tpu.memory_space<vmem>>, vector<1x1x128xf32>
    %556 = vector.shape_cast %555 : vector<1x1x128xf32> to vector<1x128xf32>
    %c0_517 = arith.constant 0 : index
    %c111_518 = arith.constant 111 : index
    %c0_519 = arith.constant 0 : index
    %557 = vector.load %arg3[%c0_517, %c111_518, %c0_519] : memref<1x192x128xf32, #tpu.memory_space<vmem>>, vector<1x1x128xf32>
    %558 = vector.shape_cast %557 : vector<1x1x128xf32> to vector<1x128xf32>
    %559 = vector.shape_cast %556 : vector<1x128xf32> to vector<1x1x128xf32>
    tpu.vector_store %arg3[%c0_517, %c111_518, %c0_519], %559 {strides = array<i32>} : memref<1x192x128xf32, #tpu.memory_space<vmem>>, vector<1x1x128xf32>,
    %c0_520 = arith.constant 0 : index
    %c28_521 = arith.constant 28 : index
    %c0_522 = arith.constant 0 : index
    %560 = vector.load %arg2[%c0_520, %c28_521, %c0_522] : memref<1x192x128xf32, #tpu.memory_space<vmem>>, vector<1x1x128xf32>
    %561 = vector.shape_cast %560 : vector<1x1x128xf32> to vector<1x128xf32>
    %c0_523 = arith.constant 0 : index
    %c112_524 = arith.constant 112 : index
    %c0_525 = arith.constant 0 : index
    %562 = vector.load %arg3[%c0_523, %c112_524, %c0_525] : memref<1x192x128xf32, #tpu.memory_space<vmem>>, vector<1x1x128xf32>
    %563 = vector.shape_cast %562 : vector<1x1x128xf32> to vector<1x128xf32>
    %564 = vector.shape_cast %561 : vector<1x128xf32> to vector<1x1x128xf32>
    tpu.vector_store %arg3[%c0_523, %c112_524, %c0_525], %564 {strides = array<i32>} : memref<1x192x128xf32, #tpu.memory_space<vmem>>, vector<1x1x128xf32>,
    %c0_526 = arith.constant 0 : index
    %c76_527 = arith.constant 76 : index
    %c0_528 = arith.constant 0 : index
    %565 = vector.load %arg2[%c0_526, %c76_527, %c0_528] : memref<1x192x128xf32, #tpu.memory_space<vmem>>, vector<1x1x128xf32>
    %566 = vector.shape_cast %565 : vector<1x1x128xf32> to vector<1x128xf32>
    %c0_529 = arith.constant 0 : index
    %c113_530 = arith.constant 113 : index
    %c0_531 = arith.constant 0 : index
    %567 = vector.load %arg3[%c0_529, %c113_530, %c0_531] : memref<1x192x128xf32, #tpu.memory_space<vmem>>, vector<1x1x128xf32>
    %568 = vector.shape_cast %567 : vector<1x1x128xf32> to vector<1x128xf32>
    %569 = vector.shape_cast %566 : vector<1x128xf32> to vector<1x1x128xf32>
    tpu.vector_store %arg3[%c0_529, %c113_530, %c0_531], %569 {strides = array<i32>} : memref<1x192x128xf32, #tpu.memory_space<vmem>>, vector<1x1x128xf32>,
    %c0_532 = arith.constant 0 : index
    %c124 = arith.constant 124 : index
    %c0_533 = arith.constant 0 : index
    %570 = vector.load %arg2[%c0_532, %c124, %c0_533] : memref<1x192x128xf32, #tpu.memory_space<vmem>>, vector<1x1x128xf32>
    %571 = vector.shape_cast %570 : vector<1x1x128xf32> to vector<1x128xf32>
    %c0_534 = arith.constant 0 : index
    %c114_535 = arith.constant 114 : index
    %c0_536 = arith.constant 0 : index
    %572 = vector.load %arg3[%c0_534, %c114_535, %c0_536] : memref<1x192x128xf32, #tpu.memory_space<vmem>>, vector<1x1x128xf32>
    %573 = vector.shape_cast %572 : vector<1x1x128xf32> to vector<1x128xf32>
    %574 = vector.shape_cast %571 : vector<1x128xf32> to vector<1x1x128xf32>
    tpu.vector_store %arg3[%c0_534, %c114_535, %c0_536], %574 {strides = array<i32>} : memref<1x192x128xf32, #tpu.memory_space<vmem>>, vector<1x1x128xf32>,
    %c0_537 = arith.constant 0 : index
    %c172 = arith.constant 172 : index
    %c0_538 = arith.constant 0 : index
    %575 = vector.load %arg2[%c0_537, %c172, %c0_538] : memref<1x192x128xf32, #tpu.memory_space<vmem>>, vector<1x1x128xf32>
    %576 = vector.shape_cast %575 : vector<1x1x128xf32> to vector<1x128xf32>
    %c0_539 = arith.constant 0 : index
    %c115_540 = arith.constant 115 : index
    %c0_541 = arith.constant 0 : index
    %577 = vector.load %arg3[%c0_539, %c115_540, %c0_541] : memref<1x192x128xf32, #tpu.memory_space<vmem>>, vector<1x1x128xf32>
    %578 = vector.shape_cast %577 : vector<1x1x128xf32> to vector<1x128xf32>
    %579 = vector.shape_cast %576 : vector<1x128xf32> to vector<1x1x128xf32>
    tpu.vector_store %arg3[%c0_539, %c115_540, %c0_541], %579 {strides = array<i32>} : memref<1x192x128xf32, #tpu.memory_space<vmem>>, vector<1x1x128xf32>,
    %c0_542 = arith.constant 0 : index
    %c29_543 = arith.constant 29 : index
    %c0_544 = arith.constant 0 : index
    %580 = vector.load %arg2[%c0_542, %c29_543, %c0_544] : memref<1x192x128xf32, #tpu.memory_space<vmem>>, vector<1x1x128xf32>
    %581 = vector.shape_cast %580 : vector<1x1x128xf32> to vector<1x128xf32>
    %c0_545 = arith.constant 0 : index
    %c116_546 = arith.constant 116 : index
    %c0_547 = arith.constant 0 : index
    %582 = vector.load %arg3[%c0_545, %c116_546, %c0_547] : memref<1x192x128xf32, #tpu.memory_space<vmem>>, vector<1x1x128xf32>
    %583 = vector.shape_cast %582 : vector<1x1x128xf32> to vector<1x128xf32>
    %584 = vector.shape_cast %581 : vector<1x128xf32> to vector<1x1x128xf32>
    tpu.vector_store %arg3[%c0_545, %c116_546, %c0_547], %584 {strides = array<i32>} : memref<1x192x128xf32, #tpu.memory_space<vmem>>, vector<1x1x128xf32>,
    %c0_548 = arith.constant 0 : index
    %c77_549 = arith.constant 77 : index
    %c0_550 = arith.constant 0 : index
    %585 = vector.load %arg2[%c0_548, %c77_549, %c0_550] : memref<1x192x128xf32, #tpu.memory_space<vmem>>, vector<1x1x128xf32>
    %586 = vector.shape_cast %585 : vector<1x1x128xf32> to vector<1x128xf32>
    %c0_551 = arith.constant 0 : index
    %c117_552 = arith.constant 117 : index
    %c0_553 = arith.constant 0 : index
    %587 = vector.load %arg3[%c0_551, %c117_552, %c0_553] : memref<1x192x128xf32, #tpu.memory_space<vmem>>, vector<1x1x128xf32>
    %588 = vector.shape_cast %587 : vector<1x1x128xf32> to vector<1x128xf32>
    %589 = vector.shape_cast %586 : vector<1x128xf32> to vector<1x1x128xf32>
    tpu.vector_store %arg3[%c0_551, %c117_552, %c0_553], %589 {strides = array<i32>} : memref<1x192x128xf32, #tpu.memory_space<vmem>>, vector<1x1x128xf32>,
    %c0_554 = arith.constant 0 : index
    %c125 = arith.constant 125 : index
    %c0_555 = arith.constant 0 : index
    %590 = vector.load %arg2[%c0_554, %c125, %c0_555] : memref<1x192x128xf32, #tpu.memory_space<vmem>>, vector<1x1x128xf32>
    %591 = vector.shape_cast %590 : vector<1x1x128xf32> to vector<1x128xf32>
    %c0_556 = arith.constant 0 : index
    %c118_557 = arith.constant 118 : index
    %c0_558 = arith.constant 0 : index
    %592 = vector.load %arg3[%c0_556, %c118_557, %c0_558] : memref<1x192x128xf32, #tpu.memory_space<vmem>>, vector<1x1x128xf32>
    %593 = vector.shape_cast %592 : vector<1x1x128xf32> to vector<1x128xf32>
    %594 = vector.shape_cast %591 : vector<1x128xf32> to vector<1x1x128xf32>
    tpu.vector_store %arg3[%c0_556, %c118_557, %c0_558], %594 {strides = array<i32>} : memref<1x192x128xf32, #tpu.memory_space<vmem>>, vector<1x1x128xf32>,
    %c0_559 = arith.constant 0 : index
    %c173 = arith.constant 173 : index
    %c0_560 = arith.constant 0 : index
    %595 = vector.load %arg2[%c0_559, %c173, %c0_560] : memref<1x192x128xf32, #tpu.memory_space<vmem>>, vector<1x1x128xf32>
    %596 = vector.shape_cast %595 : vector<1x1x128xf32> to vector<1x128xf32>
    %c0_561 = arith.constant 0 : index
    %c119_562 = arith.constant 119 : index
    %c0_563 = arith.constant 0 : index
    %597 = vector.load %arg3[%c0_561, %c119_562, %c0_563] : memref<1x192x128xf32, #tpu.memory_space<vmem>>, vector<1x1x128xf32>
    %598 = vector.shape_cast %597 : vector<1x1x128xf32> to vector<1x128xf32>
    %599 = vector.shape_cast %596 : vector<1x128xf32> to vector<1x1x128xf32>
    tpu.vector_store %arg3[%c0_561, %c119_562, %c0_563], %599 {strides = array<i32>} : memref<1x192x128xf32, #tpu.memory_space<vmem>>, vector<1x1x128xf32>,
    %c0_564 = arith.constant 0 : index
    %c30_565 = arith.constant 30 : index
    %c0_566 = arith.constant 0 : index
    %600 = vector.load %arg2[%c0_564, %c30_565, %c0_566] : memref<1x192x128xf32, #tpu.memory_space<vmem>>, vector<1x1x128xf32>
    %601 = vector.shape_cast %600 : vector<1x1x128xf32> to vector<1x128xf32>
    %c0_567 = arith.constant 0 : index
    %c120_568 = arith.constant 120 : index
    %c0_569 = arith.constant 0 : index
    %602 = vector.load %arg3[%c0_567, %c120_568, %c0_569] : memref<1x192x128xf32, #tpu.memory_space<vmem>>, vector<1x1x128xf32>
    %603 = vector.shape_cast %602 : vector<1x1x128xf32> to vector<1x128xf32>
    %604 = vector.shape_cast %601 : vector<1x128xf32> to vector<1x1x128xf32>
    tpu.vector_store %arg3[%c0_567, %c120_568, %c0_569], %604 {strides = array<i32>} : memref<1x192x128xf32, #tpu.memory_space<vmem>>, vector<1x1x128xf32>,
    %c0_570 = arith.constant 0 : index
    %c78_571 = arith.constant 78 : index
    %c0_572 = arith.constant 0 : index
    %605 = vector.load %arg2[%c0_570, %c78_571, %c0_572] : memref<1x192x128xf32, #tpu.memory_space<vmem>>, vector<1x1x128xf32>
    %606 = vector.shape_cast %605 : vector<1x1x128xf32> to vector<1x128xf32>
    %c0_573 = arith.constant 0 : index
    %c121_574 = arith.constant 121 : index
    %c0_575 = arith.constant 0 : index
    %607 = vector.load %arg3[%c0_573, %c121_574, %c0_575] : memref<1x192x128xf32, #tpu.memory_space<vmem>>, vector<1x1x128xf32>
    %608 = vector.shape_cast %607 : vector<1x1x128xf32> to vector<1x128xf32>
    %609 = vector.shape_cast %606 : vector<1x128xf32> to vector<1x1x128xf32>
    tpu.vector_store %arg3[%c0_573, %c121_574, %c0_575], %609 {strides = array<i32>} : memref<1x192x128xf32, #tpu.memory_space<vmem>>, vector<1x1x128xf32>,
    %c0_576 = arith.constant 0 : index
    %c126 = arith.constant 126 : index
    %c0_577 = arith.constant 0 : index
    %610 = vector.load %arg2[%c0_576, %c126, %c0_577] : memref<1x192x128xf32, #tpu.memory_space<vmem>>, vector<1x1x128xf32>
    %611 = vector.shape_cast %610 : vector<1x1x128xf32> to vector<1x128xf32>
    %c0_578 = arith.constant 0 : index
    %c122_579 = arith.constant 122 : index
    %c0_580 = arith.constant 0 : index
    %612 = vector.load %arg3[%c0_578, %c122_579, %c0_580] : memref<1x192x128xf32, #tpu.memory_space<vmem>>, vector<1x1x128xf32>
    %613 = vector.shape_cast %612 : vector<1x1x128xf32> to vector<1x128xf32>
    %614 = vector.shape_cast %611 : vector<1x128xf32> to vector<1x1x128xf32>
    tpu.vector_store %arg3[%c0_578, %c122_579, %c0_580], %614 {strides = array<i32>} : memref<1x192x128xf32, #tpu.memory_space<vmem>>, vector<1x1x128xf32>,
    %c0_581 = arith.constant 0 : index
    %c174 = arith.constant 174 : index
    %c0_582 = arith.constant 0 : index
    %615 = vector.load %arg2[%c0_581, %c174, %c0_582] : memref<1x192x128xf32, #tpu.memory_space<vmem>>, vector<1x1x128xf32>
    %616 = vector.shape_cast %615 : vector<1x1x128xf32> to vector<1x128xf32>
    %c0_583 = arith.constant 0 : index
    %c123_584 = arith.constant 123 : index
    %c0_585 = arith.constant 0 : index
    %617 = vector.load %arg3[%c0_583, %c123_584, %c0_585] : memref<1x192x128xf32, #tpu.memory_space<vmem>>, vector<1x1x128xf32>
    %618 = vector.shape_cast %617 : vector<1x1x128xf32> to vector<1x128xf32>
    %619 = vector.shape_cast %616 : vector<1x128xf32> to vector<1x1x128xf32>
    tpu.vector_store %arg3[%c0_583, %c123_584, %c0_585], %619 {strides = array<i32>} : memref<1x192x128xf32, #tpu.memory_space<vmem>>, vector<1x1x128xf32>,
    %c0_586 = arith.constant 0 : index
    %c31_587 = arith.constant 31 : index
    %c0_588 = arith.constant 0 : index
    %620 = vector.load %arg2[%c0_586, %c31_587, %c0_588] : memref<1x192x128xf32, #tpu.memory_space<vmem>>, vector<1x1x128xf32>
    %621 = vector.shape_cast %620 : vector<1x1x128xf32> to vector<1x128xf32>
    %c0_589 = arith.constant 0 : index
    %c124_590 = arith.constant 124 : index
    %c0_591 = arith.constant 0 : index
    %622 = vector.load %arg3[%c0_589, %c124_590, %c0_591] : memref<1x192x128xf32, #tpu.memory_space<vmem>>, vector<1x1x128xf32>
    %623 = vector.shape_cast %622 : vector<1x1x128xf32> to vector<1x128xf32>
    %624 = vector.shape_cast %621 : vector<1x128xf32> to vector<1x1x128xf32>
    tpu.vector_store %arg3[%c0_589, %c124_590, %c0_591], %624 {strides = array<i32>} : memref<1x192x128xf32, #tpu.memory_space<vmem>>, vector<1x1x128xf32>,
    %c0_592 = arith.constant 0 : index
    %c79_593 = arith.constant 79 : index
    %c0_594 = arith.constant 0 : index
    %625 = vector.load %arg2[%c0_592, %c79_593, %c0_594] : memref<1x192x128xf32, #tpu.memory_space<vmem>>, vector<1x1x128xf32>
    %626 = vector.shape_cast %625 : vector<1x1x128xf32> to vector<1x128xf32>
    %c0_595 = arith.constant 0 : index
    %c125_596 = arith.constant 125 : index
    %c0_597 = arith.constant 0 : index
    %627 = vector.load %arg3[%c0_595, %c125_596, %c0_597] : memref<1x192x128xf32, #tpu.memory_space<vmem>>, vector<1x1x128xf32>
    %628 = vector.shape_cast %627 : vector<1x1x128xf32> to vector<1x128xf32>
    %629 = vector.shape_cast %626 : vector<1x128xf32> to vector<1x1x128xf32>
    tpu.vector_store %arg3[%c0_595, %c125_596, %c0_597], %629 {strides = array<i32>} : memref<1x192x128xf32, #tpu.memory_space<vmem>>, vector<1x1x128xf32>,
    %c0_598 = arith.constant 0 : index
    %c127 = arith.constant 127 : index
    %c0_599 = arith.constant 0 : index
    %630 = vector.load %arg2[%c0_598, %c127, %c0_599] : memref<1x192x128xf32, #tpu.memory_space<vmem>>, vector<1x1x128xf32>
    %631 = vector.shape_cast %630 : vector<1x1x128xf32> to vector<1x128xf32>
    %c0_600 = arith.constant 0 : index
    %c126_601 = arith.constant 126 : index
    %c0_602 = arith.constant 0 : index
    %632 = vector.load %arg3[%c0_600, %c126_601, %c0_602] : memref<1x192x128xf32, #tpu.memory_space<vmem>>, vector<1x1x128xf32>
    %633 = vector.shape_cast %632 : vector<1x1x128xf32> to vector<1x128xf32>
    %634 = vector.shape_cast %631 : vector<1x128xf32> to vector<1x1x128xf32>
    tpu.vector_store %arg3[%c0_600, %c126_601, %c0_602], %634 {strides = array<i32>} : memref<1x192x128xf32, #tpu.memory_space<vmem>>, vector<1x1x128xf32>,
    %c0_603 = arith.constant 0 : index
    %c175 = arith.constant 175 : index
    %c0_604 = arith.constant 0 : index
    %635 = vector.load %arg2[%c0_603, %c175, %c0_604] : memref<1x192x128xf32, #tpu.memory_space<vmem>>, vector<1x1x128xf32>
    %636 = vector.shape_cast %635 : vector<1x1x128xf32> to vector<1x128xf32>
    %c0_605 = arith.constant 0 : index
    %c127_606 = arith.constant 127 : index
    %c0_607 = arith.constant 0 : index
    %637 = vector.load %arg3[%c0_605, %c127_606, %c0_607] : memref<1x192x128xf32, #tpu.memory_space<vmem>>, vector<1x1x128xf32>
    %638 = vector.shape_cast %637 : vector<1x1x128xf32> to vector<1x128xf32>
    %639 = vector.shape_cast %636 : vector<1x128xf32> to vector<1x1x128xf32>
    tpu.vector_store %arg3[%c0_605, %c127_606, %c0_607], %639 {strides = array<i32>} : memref<1x192x128xf32, #tpu.memory_space<vmem>>, vector<1x1x128xf32>,
    %c0_608 = arith.constant 0 : index
    %c32_609 = arith.constant 32 : index
    %c0_610 = arith.constant 0 : index
    %640 = vector.load %arg2[%c0_608, %c32_609, %c0_610] : memref<1x192x128xf32, #tpu.memory_space<vmem>>, vector<1x1x128xf32>
    %641 = vector.shape_cast %640 : vector<1x1x128xf32> to vector<1x128xf32>
    %c0_611 = arith.constant 0 : index
    %c128 = arith.constant 128 : index
    %c0_612 = arith.constant 0 : index
    %642 = vector.load %arg3[%c0_611, %c128, %c0_612] : memref<1x192x128xf32, #tpu.memory_space<vmem>>, vector<1x1x128xf32>
    %643 = vector.shape_cast %642 : vector<1x1x128xf32> to vector<1x128xf32>
    %644 = vector.shape_cast %641 : vector<1x128xf32> to vector<1x1x128xf32>
    tpu.vector_store %arg3[%c0_611, %c128, %c0_612], %644 {strides = array<i32>} : memref<1x192x128xf32, #tpu.memory_space<vmem>>, vector<1x1x128xf32>,
    %c0_613 = arith.constant 0 : index
    %c80_614 = arith.constant 80 : index
    %c0_615 = arith.constant 0 : index
    %645 = vector.load %arg2[%c0_613, %c80_614, %c0_615] : memref<1x192x128xf32, #tpu.memory_space<vmem>>, vector<1x1x128xf32>
    %646 = vector.shape_cast %645 : vector<1x1x128xf32> to vector<1x128xf32>
    %c0_616 = arith.constant 0 : index
    %c129 = arith.constant 129 : index
    %c0_617 = arith.constant 0 : index
    %647 = vector.load %arg3[%c0_616, %c129, %c0_617] : memref<1x192x128xf32, #tpu.memory_space<vmem>>, vector<1x1x128xf32>
    %648 = vector.shape_cast %647 : vector<1x1x128xf32> to vector<1x128xf32>
    %649 = vector.shape_cast %646 : vector<1x128xf32> to vector<1x1x128xf32>
    tpu.vector_store %arg3[%c0_616, %c129, %c0_617], %649 {strides = array<i32>} : memref<1x192x128xf32, #tpu.memory_space<vmem>>, vector<1x1x128xf32>,
    %c0_618 = arith.constant 0 : index
    %c128_619 = arith.constant 128 : index
    %c0_620 = arith.constant 0 : index
    %650 = vector.load %arg2[%c0_618, %c128_619, %c0_620] : memref<1x192x128xf32, #tpu.memory_space<vmem>>, vector<1x1x128xf32>
    %651 = vector.shape_cast %650 : vector<1x1x128xf32> to vector<1x128xf32>
    %c0_621 = arith.constant 0 : index
    %c130 = arith.constant 130 : index
    %c0_622 = arith.constant 0 : index
    %652 = vector.load %arg3[%c0_621, %c130, %c0_622] : memref<1x192x128xf32, #tpu.memory_space<vmem>>, vector<1x1x128xf32>
    %653 = vector.shape_cast %652 : vector<1x1x128xf32> to vector<1x128xf32>
    %654 = vector.shape_cast %651 : vector<1x128xf32> to vector<1x1x128xf32>
    tpu.vector_store %arg3[%c0_621, %c130, %c0_622], %654 {strides = array<i32>} : memref<1x192x128xf32, #tpu.memory_space<vmem>>, vector<1x1x128xf32>,
    %c0_623 = arith.constant 0 : index
    %c176 = arith.constant 176 : index
    %c0_624 = arith.constant 0 : index
    %655 = vector.load %arg2[%c0_623, %c176, %c0_624] : memref<1x192x128xf32, #tpu.memory_space<vmem>>, vector<1x1x128xf32>
    %656 = vector.shape_cast %655 : vector<1x1x128xf32> to vector<1x128xf32>
    %c0_625 = arith.constant 0 : index
    %c131 = arith.constant 131 : index
    %c0_626 = arith.constant 0 : index
    %657 = vector.load %arg3[%c0_625, %c131, %c0_626] : memref<1x192x128xf32, #tpu.memory_space<vmem>>, vector<1x1x128xf32>
    %658 = vector.shape_cast %657 : vector<1x1x128xf32> to vector<1x128xf32>
    %659 = vector.shape_cast %656 : vector<1x128xf32> to vector<1x1x128xf32>
    tpu.vector_store %arg3[%c0_625, %c131, %c0_626], %659 {strides = array<i32>} : memref<1x192x128xf32, #tpu.memory_space<vmem>>, vector<1x1x128xf32>,
    %c0_627 = arith.constant 0 : index
    %c33_628 = arith.constant 33 : index
    %c0_629 = arith.constant 0 : index
    %660 = vector.load %arg2[%c0_627, %c33_628, %c0_629] : memref<1x192x128xf32, #tpu.memory_space<vmem>>, vector<1x1x128xf32>
    %661 = vector.shape_cast %660 : vector<1x1x128xf32> to vector<1x128xf32>
    %c0_630 = arith.constant 0 : index
    %c132 = arith.constant 132 : index
    %c0_631 = arith.constant 0 : index
    %662 = vector.load %arg3[%c0_630, %c132, %c0_631] : memref<1x192x128xf32, #tpu.memory_space<vmem>>, vector<1x1x128xf32>
    %663 = vector.shape_cast %662 : vector<1x1x128xf32> to vector<1x128xf32>
    %664 = vector.shape_cast %661 : vector<1x128xf32> to vector<1x1x128xf32>
    tpu.vector_store %arg3[%c0_630, %c132, %c0_631], %664 {strides = array<i32>} : memref<1x192x128xf32, #tpu.memory_space<vmem>>, vector<1x1x128xf32>,
    %c0_632 = arith.constant 0 : index
    %c81_633 = arith.constant 81 : index
    %c0_634 = arith.constant 0 : index
    %665 = vector.load %arg2[%c0_632, %c81_633, %c0_634] : memref<1x192x128xf32, #tpu.memory_space<vmem>>, vector<1x1x128xf32>
    %666 = vector.shape_cast %665 : vector<1x1x128xf32> to vector<1x128xf32>
    %c0_635 = arith.constant 0 : index
    %c133 = arith.constant 133 : index
    %c0_636 = arith.constant 0 : index
    %667 = vector.load %arg3[%c0_635, %c133, %c0_636] : memref<1x192x128xf32, #tpu.memory_space<vmem>>, vector<1x1x128xf32>
    %668 = vector.shape_cast %667 : vector<1x1x128xf32> to vector<1x128xf32>
    %669 = vector.shape_cast %666 : vector<1x128xf32> to vector<1x1x128xf32>
    tpu.vector_store %arg3[%c0_635, %c133, %c0_636], %669 {strides = array<i32>} : memref<1x192x128xf32, #tpu.memory_space<vmem>>, vector<1x1x128xf32>,
    %c0_637 = arith.constant 0 : index
    %c129_638 = arith.constant 129 : index
    %c0_639 = arith.constant 0 : index
    %670 = vector.load %arg2[%c0_637, %c129_638, %c0_639] : memref<1x192x128xf32, #tpu.memory_space<vmem>>, vector<1x1x128xf32>
    %671 = vector.shape_cast %670 : vector<1x1x128xf32> to vector<1x128xf32>
    %c0_640 = arith.constant 0 : index
    %c134 = arith.constant 134 : index
    %c0_641 = arith.constant 0 : index
    %672 = vector.load %arg3[%c0_640, %c134, %c0_641] : memref<1x192x128xf32, #tpu.memory_space<vmem>>, vector<1x1x128xf32>
    %673 = vector.shape_cast %672 : vector<1x1x128xf32> to vector<1x128xf32>
    %674 = vector.shape_cast %671 : vector<1x128xf32> to vector<1x1x128xf32>
    tpu.vector_store %arg3[%c0_640, %c134, %c0_641], %674 {strides = array<i32>} : memref<1x192x128xf32, #tpu.memory_space<vmem>>, vector<1x1x128xf32>,
    %c0_642 = arith.constant 0 : index
    %c177 = arith.constant 177 : index
    %c0_643 = arith.constant 0 : index
    %675 = vector.load %arg2[%c0_642, %c177, %c0_643] : memref<1x192x128xf32, #tpu.memory_space<vmem>>, vector<1x1x128xf32>
    %676 = vector.shape_cast %675 : vector<1x1x128xf32> to vector<1x128xf32>
    %c0_644 = arith.constant 0 : index
    %c135 = arith.constant 135 : index
    %c0_645 = arith.constant 0 : index
    %677 = vector.load %arg3[%c0_644, %c135, %c0_645] : memref<1x192x128xf32, #tpu.memory_space<vmem>>, vector<1x1x128xf32>
    %678 = vector.shape_cast %677 : vector<1x1x128xf32> to vector<1x128xf32>
    %679 = vector.shape_cast %676 : vector<1x128xf32> to vector<1x1x128xf32>
    tpu.vector_store %arg3[%c0_644, %c135, %c0_645], %679 {strides = array<i32>} : memref<1x192x128xf32, #tpu.memory_space<vmem>>, vector<1x1x128xf32>,
    %c0_646 = arith.constant 0 : index
    %c34_647 = arith.constant 34 : index
    %c0_648 = arith.constant 0 : index
    %680 = vector.load %arg2[%c0_646, %c34_647, %c0_648] : memref<1x192x128xf32, #tpu.memory_space<vmem>>, vector<1x1x128xf32>
    %681 = vector.shape_cast %680 : vector<1x1x128xf32> to vector<1x128xf32>
    %c0_649 = arith.constant 0 : index
    %c136 = arith.constant 136 : index
    %c0_650 = arith.constant 0 : index
    %682 = vector.load %arg3[%c0_649, %c136, %c0_650] : memref<1x192x128xf32, #tpu.memory_space<vmem>>, vector<1x1x128xf32>
    %683 = vector.shape_cast %682 : vector<1x1x128xf32> to vector<1x128xf32>
    %684 = vector.shape_cast %681 : vector<1x128xf32> to vector<1x1x128xf32>
    tpu.vector_store %arg3[%c0_649, %c136, %c0_650], %684 {strides = array<i32>} : memref<1x192x128xf32, #tpu.memory_space<vmem>>, vector<1x1x128xf32>,
    %c0_651 = arith.constant 0 : index
    %c82_652 = arith.constant 82 : index
    %c0_653 = arith.constant 0 : index
    %685 = vector.load %arg2[%c0_651, %c82_652, %c0_653] : memref<1x192x128xf32, #tpu.memory_space<vmem>>, vector<1x1x128xf32>
    %686 = vector.shape_cast %685 : vector<1x1x128xf32> to vector<1x128xf32>
    %c0_654 = arith.constant 0 : index
    %c137 = arith.constant 137 : index
    %c0_655 = arith.constant 0 : index
    %687 = vector.load %arg3[%c0_654, %c137, %c0_655] : memref<1x192x128xf32, #tpu.memory_space<vmem>>, vector<1x1x128xf32>
    %688 = vector.shape_cast %687 : vector<1x1x128xf32> to vector<1x128xf32>
    %689 = vector.shape_cast %686 : vector<1x128xf32> to vector<1x1x128xf32>
    tpu.vector_store %arg3[%c0_654, %c137, %c0_655], %689 {strides = array<i32>} : memref<1x192x128xf32, #tpu.memory_space<vmem>>, vector<1x1x128xf32>,
    %c0_656 = arith.constant 0 : index
    %c130_657 = arith.constant 130 : index
    %c0_658 = arith.constant 0 : index
    %690 = vector.load %arg2[%c0_656, %c130_657, %c0_658] : memref<1x192x128xf32, #tpu.memory_space<vmem>>, vector<1x1x128xf32>
    %691 = vector.shape_cast %690 : vector<1x1x128xf32> to vector<1x128xf32>
    %c0_659 = arith.constant 0 : index
    %c138 = arith.constant 138 : index
    %c0_660 = arith.constant 0 : index
    %692 = vector.load %arg3[%c0_659, %c138, %c0_660] : memref<1x192x128xf32, #tpu.memory_space<vmem>>, vector<1x1x128xf32>
    %693 = vector.shape_cast %692 : vector<1x1x128xf32> to vector<1x128xf32>
    %694 = vector.shape_cast %691 : vector<1x128xf32> to vector<1x1x128xf32>
    tpu.vector_store %arg3[%c0_659, %c138, %c0_660], %694 {strides = array<i32>} : memref<1x192x128xf32, #tpu.memory_space<vmem>>, vector<1x1x128xf32>,
    %c0_661 = arith.constant 0 : index
    %c178 = arith.constant 178 : index
    %c0_662 = arith.constant 0 : index
    %695 = vector.load %arg2[%c0_661, %c178, %c0_662] : memref<1x192x128xf32, #tpu.memory_space<vmem>>, vector<1x1x128xf32>
    %696 = vector.shape_cast %695 : vector<1x1x128xf32> to vector<1x128xf32>
    %c0_663 = arith.constant 0 : index
    %c139 = arith.constant 139 : index
    %c0_664 = arith.constant 0 : index
    %697 = vector.load %arg3[%c0_663, %c139, %c0_664] : memref<1x192x128xf32, #tpu.memory_space<vmem>>, vector<1x1x128xf32>
    %698 = vector.shape_cast %697 : vector<1x1x128xf32> to vector<1x128xf32>
    %699 = vector.shape_cast %696 : vector<1x128xf32> to vector<1x1x128xf32>
    tpu.vector_store %arg3[%c0_663, %c139, %c0_664], %699 {strides = array<i32>} : memref<1x192x128xf32, #tpu.memory_space<vmem>>, vector<1x1x128xf32>,
    %c0_665 = arith.constant 0 : index
    %c35_666 = arith.constant 35 : index
    %c0_667 = arith.constant 0 : index
    %700 = vector.load %arg2[%c0_665, %c35_666, %c0_667] : memref<1x192x128xf32, #tpu.memory_space<vmem>>, vector<1x1x128xf32>
    %701 = vector.shape_cast %700 : vector<1x1x128xf32> to vector<1x128xf32>
    %c0_668 = arith.constant 0 : index
    %c140 = arith.constant 140 : index
    %c0_669 = arith.constant 0 : index
    %702 = vector.load %arg3[%c0_668, %c140, %c0_669] : memref<1x192x128xf32, #tpu.memory_space<vmem>>, vector<1x1x128xf32>
    %703 = vector.shape_cast %702 : vector<1x1x128xf32> to vector<1x128xf32>
    %704 = vector.shape_cast %701 : vector<1x128xf32> to vector<1x1x128xf32>
    tpu.vector_store %arg3[%c0_668, %c140, %c0_669], %704 {strides = array<i32>} : memref<1x192x128xf32, #tpu.memory_space<vmem>>, vector<1x1x128xf32>,
    %c0_670 = arith.constant 0 : index
    %c83_671 = arith.constant 83 : index
    %c0_672 = arith.constant 0 : index
    %705 = vector.load %arg2[%c0_670, %c83_671, %c0_672] : memref<1x192x128xf32, #tpu.memory_space<vmem>>, vector<1x1x128xf32>
    %706 = vector.shape_cast %705 : vector<1x1x128xf32> to vector<1x128xf32>
    %c0_673 = arith.constant 0 : index
    %c141 = arith.constant 141 : index
    %c0_674 = arith.constant 0 : index
    %707 = vector.load %arg3[%c0_673, %c141, %c0_674] : memref<1x192x128xf32, #tpu.memory_space<vmem>>, vector<1x1x128xf32>
    %708 = vector.shape_cast %707 : vector<1x1x128xf32> to vector<1x128xf32>
    %709 = vector.shape_cast %706 : vector<1x128xf32> to vector<1x1x128xf32>
    tpu.vector_store %arg3[%c0_673, %c141, %c0_674], %709 {strides = array<i32>} : memref<1x192x128xf32, #tpu.memory_space<vmem>>, vector<1x1x128xf32>,
    %c0_675 = arith.constant 0 : index
    %c131_676 = arith.constant 131 : index
    %c0_677 = arith.constant 0 : index
    %710 = vector.load %arg2[%c0_675, %c131_676, %c0_677] : memref<1x192x128xf32, #tpu.memory_space<vmem>>, vector<1x1x128xf32>
    %711 = vector.shape_cast %710 : vector<1x1x128xf32> to vector<1x128xf32>
    %c0_678 = arith.constant 0 : index
    %c142 = arith.constant 142 : index
    %c0_679 = arith.constant 0 : index
    %712 = vector.load %arg3[%c0_678, %c142, %c0_679] : memref<1x192x128xf32, #tpu.memory_space<vmem>>, vector<1x1x128xf32>
    %713 = vector.shape_cast %712 : vector<1x1x128xf32> to vector<1x128xf32>
    %714 = vector.shape_cast %711 : vector<1x128xf32> to vector<1x1x128xf32>
    tpu.vector_store %arg3[%c0_678, %c142, %c0_679], %714 {strides = array<i32>} : memref<1x192x128xf32, #tpu.memory_space<vmem>>, vector<1x1x128xf32>,
    %c0_680 = arith.constant 0 : index
    %c179 = arith.constant 179 : index
    %c0_681 = arith.constant 0 : index
    %715 = vector.load %arg2[%c0_680, %c179, %c0_681] : memref<1x192x128xf32, #tpu.memory_space<vmem>>, vector<1x1x128xf32>
    %716 = vector.shape_cast %715 : vector<1x1x128xf32> to vector<1x128xf32>
    %c0_682 = arith.constant 0 : index
    %c143 = arith.constant 143 : index
    %c0_683 = arith.constant 0 : index
    %717 = vector.load %arg3[%c0_682, %c143, %c0_683] : memref<1x192x128xf32, #tpu.memory_space<vmem>>, vector<1x1x128xf32>
    %718 = vector.shape_cast %717 : vector<1x1x128xf32> to vector<1x128xf32>
    %719 = vector.shape_cast %716 : vector<1x128xf32> to vector<1x1x128xf32>
    tpu.vector_store %arg3[%c0_682, %c143, %c0_683], %719 {strides = array<i32>} : memref<1x192x128xf32, #tpu.memory_space<vmem>>, vector<1x1x128xf32>,
    %c0_684 = arith.constant 0 : index
    %c36_685 = arith.constant 36 : index
    %c0_686 = arith.constant 0 : index
    %720 = vector.load %arg2[%c0_684, %c36_685, %c0_686] : memref<1x192x128xf32, #tpu.memory_space<vmem>>, vector<1x1x128xf32>
    %721 = vector.shape_cast %720 : vector<1x1x128xf32> to vector<1x128xf32>
    %c0_687 = arith.constant 0 : index
    %c144_688 = arith.constant 144 : index
    %c0_689 = arith.constant 0 : index
    %722 = vector.load %arg3[%c0_687, %c144_688, %c0_689] : memref<1x192x128xf32, #tpu.memory_space<vmem>>, vector<1x1x128xf32>
    %723 = vector.shape_cast %722 : vector<1x1x128xf32> to vector<1x128xf32>
    %724 = vector.shape_cast %721 : vector<1x128xf32> to vector<1x1x128xf32>
    tpu.vector_store %arg3[%c0_687, %c144_688, %c0_689], %724 {strides = array<i32>} : memref<1x192x128xf32, #tpu.memory_space<vmem>>, vector<1x1x128xf32>,
    %c0_690 = arith.constant 0 : index
    %c84_691 = arith.constant 84 : index
    %c0_692 = arith.constant 0 : index
    %725 = vector.load %arg2[%c0_690, %c84_691, %c0_692] : memref<1x192x128xf32, #tpu.memory_space<vmem>>, vector<1x1x128xf32>
    %726 = vector.shape_cast %725 : vector<1x1x128xf32> to vector<1x128xf32>
    %c0_693 = arith.constant 0 : index
    %c145_694 = arith.constant 145 : index
    %c0_695 = arith.constant 0 : index
    %727 = vector.load %arg3[%c0_693, %c145_694, %c0_695] : memref<1x192x128xf32, #tpu.memory_space<vmem>>, vector<1x1x128xf32>
    %728 = vector.shape_cast %727 : vector<1x1x128xf32> to vector<1x128xf32>
    %729 = vector.shape_cast %726 : vector<1x128xf32> to vector<1x1x128xf32>
    tpu.vector_store %arg3[%c0_693, %c145_694, %c0_695], %729 {strides = array<i32>} : memref<1x192x128xf32, #tpu.memory_space<vmem>>, vector<1x1x128xf32>,
    %c0_696 = arith.constant 0 : index
    %c132_697 = arith.constant 132 : index
    %c0_698 = arith.constant 0 : index
    %730 = vector.load %arg2[%c0_696, %c132_697, %c0_698] : memref<1x192x128xf32, #tpu.memory_space<vmem>>, vector<1x1x128xf32>
    %731 = vector.shape_cast %730 : vector<1x1x128xf32> to vector<1x128xf32>
    %c0_699 = arith.constant 0 : index
    %c146_700 = arith.constant 146 : index
    %c0_701 = arith.constant 0 : index
    %732 = vector.load %arg3[%c0_699, %c146_700, %c0_701] : memref<1x192x128xf32, #tpu.memory_space<vmem>>, vector<1x1x128xf32>
    %733 = vector.shape_cast %732 : vector<1x1x128xf32> to vector<1x128xf32>
    %734 = vector.shape_cast %731 : vector<1x128xf32> to vector<1x1x128xf32>
    tpu.vector_store %arg3[%c0_699, %c146_700, %c0_701], %734 {strides = array<i32>} : memref<1x192x128xf32, #tpu.memory_space<vmem>>, vector<1x1x128xf32>,
    %c0_702 = arith.constant 0 : index
    %c180 = arith.constant 180 : index
    %c0_703 = arith.constant 0 : index
    %735 = vector.load %arg2[%c0_702, %c180, %c0_703] : memref<1x192x128xf32, #tpu.memory_space<vmem>>, vector<1x1x128xf32>
    %736 = vector.shape_cast %735 : vector<1x1x128xf32> to vector<1x128xf32>
    %c0_704 = arith.constant 0 : index
    %c147_705 = arith.constant 147 : index
    %c0_706 = arith.constant 0 : index
    %737 = vector.load %arg3[%c0_704, %c147_705, %c0_706] : memref<1x192x128xf32, #tpu.memory_space<vmem>>, vector<1x1x128xf32>
    %738 = vector.shape_cast %737 : vector<1x1x128xf32> to vector<1x128xf32>
    %739 = vector.shape_cast %736 : vector<1x128xf32> to vector<1x1x128xf32>
    tpu.vector_store %arg3[%c0_704, %c147_705, %c0_706], %739 {strides = array<i32>} : memref<1x192x128xf32, #tpu.memory_space<vmem>>, vector<1x1x128xf32>,
    %c0_707 = arith.constant 0 : index
    %c37_708 = arith.constant 37 : index
    %c0_709 = arith.constant 0 : index
    %740 = vector.load %arg2[%c0_707, %c37_708, %c0_709] : memref<1x192x128xf32, #tpu.memory_space<vmem>>, vector<1x1x128xf32>
    %741 = vector.shape_cast %740 : vector<1x1x128xf32> to vector<1x128xf32>
    %c0_710 = arith.constant 0 : index
    %c148_711 = arith.constant 148 : index
    %c0_712 = arith.constant 0 : index
    %742 = vector.load %arg3[%c0_710, %c148_711, %c0_712] : memref<1x192x128xf32, #tpu.memory_space<vmem>>, vector<1x1x128xf32>
    %743 = vector.shape_cast %742 : vector<1x1x128xf32> to vector<1x128xf32>
    %744 = vector.shape_cast %741 : vector<1x128xf32> to vector<1x1x128xf32>
    tpu.vector_store %arg3[%c0_710, %c148_711, %c0_712], %744 {strides = array<i32>} : memref<1x192x128xf32, #tpu.memory_space<vmem>>, vector<1x1x128xf32>,
    %c0_713 = arith.constant 0 : index
    %c85_714 = arith.constant 85 : index
    %c0_715 = arith.constant 0 : index
    %745 = vector.load %arg2[%c0_713, %c85_714, %c0_715] : memref<1x192x128xf32, #tpu.memory_space<vmem>>, vector<1x1x128xf32>
    %746 = vector.shape_cast %745 : vector<1x1x128xf32> to vector<1x128xf32>
    %c0_716 = arith.constant 0 : index
    %c149_717 = arith.constant 149 : index
    %c0_718 = arith.constant 0 : index
    %747 = vector.load %arg3[%c0_716, %c149_717, %c0_718] : memref<1x192x128xf32, #tpu.memory_space<vmem>>, vector<1x1x128xf32>
    %748 = vector.shape_cast %747 : vector<1x1x128xf32> to vector<1x128xf32>
    %749 = vector.shape_cast %746 : vector<1x128xf32> to vector<1x1x128xf32>
    tpu.vector_store %arg3[%c0_716, %c149_717, %c0_718], %749 {strides = array<i32>} : memref<1x192x128xf32, #tpu.memory_space<vmem>>, vector<1x1x128xf32>,
    %c0_719 = arith.constant 0 : index
    %c133_720 = arith.constant 133 : index
    %c0_721 = arith.constant 0 : index
    %750 = vector.load %arg2[%c0_719, %c133_720, %c0_721] : memref<1x192x128xf32, #tpu.memory_space<vmem>>, vector<1x1x128xf32>
    %751 = vector.shape_cast %750 : vector<1x1x128xf32> to vector<1x128xf32>
    %c0_722 = arith.constant 0 : index
    %c150_723 = arith.constant 150 : index
    %c0_724 = arith.constant 0 : index
    %752 = vector.load %arg3[%c0_722, %c150_723, %c0_724] : memref<1x192x128xf32, #tpu.memory_space<vmem>>, vector<1x1x128xf32>
    %753 = vector.shape_cast %752 : vector<1x1x128xf32> to vector<1x128xf32>
    %754 = vector.shape_cast %751 : vector<1x128xf32> to vector<1x1x128xf32>
    tpu.vector_store %arg3[%c0_722, %c150_723, %c0_724], %754 {strides = array<i32>} : memref<1x192x128xf32, #tpu.memory_space<vmem>>, vector<1x1x128xf32>,
    %c0_725 = arith.constant 0 : index
    %c181 = arith.constant 181 : index
    %c0_726 = arith.constant 0 : index
    %755 = vector.load %arg2[%c0_725, %c181, %c0_726] : memref<1x192x128xf32, #tpu.memory_space<vmem>>, vector<1x1x128xf32>
    %756 = vector.shape_cast %755 : vector<1x1x128xf32> to vector<1x128xf32>
    %c0_727 = arith.constant 0 : index
    %c151_728 = arith.constant 151 : index
    %c0_729 = arith.constant 0 : index
    %757 = vector.load %arg3[%c0_727, %c151_728, %c0_729] : memref<1x192x128xf32, #tpu.memory_space<vmem>>, vector<1x1x128xf32>
    %758 = vector.shape_cast %757 : vector<1x1x128xf32> to vector<1x128xf32>
    %759 = vector.shape_cast %756 : vector<1x128xf32> to vector<1x1x128xf32>
    tpu.vector_store %arg3[%c0_727, %c151_728, %c0_729], %759 {strides = array<i32>} : memref<1x192x128xf32, #tpu.memory_space<vmem>>, vector<1x1x128xf32>,
    %c0_730 = arith.constant 0 : index
    %c38_731 = arith.constant 38 : index
    %c0_732 = arith.constant 0 : index
    %760 = vector.load %arg2[%c0_730, %c38_731, %c0_732] : memref<1x192x128xf32, #tpu.memory_space<vmem>>, vector<1x1x128xf32>
    %761 = vector.shape_cast %760 : vector<1x1x128xf32> to vector<1x128xf32>
    %c0_733 = arith.constant 0 : index
    %c152_734 = arith.constant 152 : index
    %c0_735 = arith.constant 0 : index
    %762 = vector.load %arg3[%c0_733, %c152_734, %c0_735] : memref<1x192x128xf32, #tpu.memory_space<vmem>>, vector<1x1x128xf32>
    %763 = vector.shape_cast %762 : vector<1x1x128xf32> to vector<1x128xf32>
    %764 = vector.shape_cast %761 : vector<1x128xf32> to vector<1x1x128xf32>
    tpu.vector_store %arg3[%c0_733, %c152_734, %c0_735], %764 {strides = array<i32>} : memref<1x192x128xf32, #tpu.memory_space<vmem>>, vector<1x1x128xf32>,
    %c0_736 = arith.constant 0 : index
    %c86_737 = arith.constant 86 : index
    %c0_738 = arith.constant 0 : index
    %765 = vector.load %arg2[%c0_736, %c86_737, %c0_738] : memref<1x192x128xf32, #tpu.memory_space<vmem>>, vector<1x1x128xf32>
    %766 = vector.shape_cast %765 : vector<1x1x128xf32> to vector<1x128xf32>
    %c0_739 = arith.constant 0 : index
    %c153_740 = arith.constant 153 : index
    %c0_741 = arith.constant 0 : index
    %767 = vector.load %arg3[%c0_739, %c153_740, %c0_741] : memref<1x192x128xf32, #tpu.memory_space<vmem>>, vector<1x1x128xf32>
    %768 = vector.shape_cast %767 : vector<1x1x128xf32> to vector<1x128xf32>
    %769 = vector.shape_cast %766 : vector<1x128xf32> to vector<1x1x128xf32>
    tpu.vector_store %arg3[%c0_739, %c153_740, %c0_741], %769 {strides = array<i32>} : memref<1x192x128xf32, #tpu.memory_space<vmem>>, vector<1x1x128xf32>,
    %c0_742 = arith.constant 0 : index
    %c134_743 = arith.constant 134 : index
    %c0_744 = arith.constant 0 : index
    %770 = vector.load %arg2[%c0_742, %c134_743, %c0_744] : memref<1x192x128xf32, #tpu.memory_space<vmem>>, vector<1x1x128xf32>
    %771 = vector.shape_cast %770 : vector<1x1x128xf32> to vector<1x128xf32>
    %c0_745 = arith.constant 0 : index
    %c154_746 = arith.constant 154 : index
    %c0_747 = arith.constant 0 : index
    %772 = vector.load %arg3[%c0_745, %c154_746, %c0_747] : memref<1x192x128xf32, #tpu.memory_space<vmem>>, vector<1x1x128xf32>
    %773 = vector.shape_cast %772 : vector<1x1x128xf32> to vector<1x128xf32>
    %774 = vector.shape_cast %771 : vector<1x128xf32> to vector<1x1x128xf32>
    tpu.vector_store %arg3[%c0_745, %c154_746, %c0_747], %774 {strides = array<i32>} : memref<1x192x128xf32, #tpu.memory_space<vmem>>, vector<1x1x128xf32>,
    %c0_748 = arith.constant 0 : index
    %c182 = arith.constant 182 : index
    %c0_749 = arith.constant 0 : index
    %775 = vector.load %arg2[%c0_748, %c182, %c0_749] : memref<1x192x128xf32, #tpu.memory_space<vmem>>, vector<1x1x128xf32>
    %776 = vector.shape_cast %775 : vector<1x1x128xf32> to vector<1x128xf32>
    %c0_750 = arith.constant 0 : index
    %c155_751 = arith.constant 155 : index
    %c0_752 = arith.constant 0 : index
    %777 = vector.load %arg3[%c0_750, %c155_751, %c0_752] : memref<1x192x128xf32, #tpu.memory_space<vmem>>, vector<1x1x128xf32>
    %778 = vector.shape_cast %777 : vector<1x1x128xf32> to vector<1x128xf32>
    %779 = vector.shape_cast %776 : vector<1x128xf32> to vector<1x1x128xf32>
    tpu.vector_store %arg3[%c0_750, %c155_751, %c0_752], %779 {strides = array<i32>} : memref<1x192x128xf32, #tpu.memory_space<vmem>>, vector<1x1x128xf32>,
    %c0_753 = arith.constant 0 : index
    %c39_754 = arith.constant 39 : index
    %c0_755 = arith.constant 0 : index
    %780 = vector.load %arg2[%c0_753, %c39_754, %c0_755] : memref<1x192x128xf32, #tpu.memory_space<vmem>>, vector<1x1x128xf32>
    %781 = vector.shape_cast %780 : vector<1x1x128xf32> to vector<1x128xf32>
    %c0_756 = arith.constant 0 : index
    %c156_757 = arith.constant 156 : index
    %c0_758 = arith.constant 0 : index
    %782 = vector.load %arg3[%c0_756, %c156_757, %c0_758] : memref<1x192x128xf32, #tpu.memory_space<vmem>>, vector<1x1x128xf32>
    %783 = vector.shape_cast %782 : vector<1x1x128xf32> to vector<1x128xf32>
    %784 = vector.shape_cast %781 : vector<1x128xf32> to vector<1x1x128xf32>
    tpu.vector_store %arg3[%c0_756, %c156_757, %c0_758], %784 {strides = array<i32>} : memref<1x192x128xf32, #tpu.memory_space<vmem>>, vector<1x1x128xf32>,
    %c0_759 = arith.constant 0 : index
    %c87_760 = arith.constant 87 : index
    %c0_761 = arith.constant 0 : index
    %785 = vector.load %arg2[%c0_759, %c87_760, %c0_761] : memref<1x192x128xf32, #tpu.memory_space<vmem>>, vector<1x1x128xf32>
    %786 = vector.shape_cast %785 : vector<1x1x128xf32> to vector<1x128xf32>
    %c0_762 = arith.constant 0 : index
    %c157_763 = arith.constant 157 : index
    %c0_764 = arith.constant 0 : index
    %787 = vector.load %arg3[%c0_762, %c157_763, %c0_764] : memref<1x192x128xf32, #tpu.memory_space<vmem>>, vector<1x1x128xf32>
    %788 = vector.shape_cast %787 : vector<1x1x128xf32> to vector<1x128xf32>
    %789 = vector.shape_cast %786 : vector<1x128xf32> to vector<1x1x128xf32>
    tpu.vector_store %arg3[%c0_762, %c157_763, %c0_764], %789 {strides = array<i32>} : memref<1x192x128xf32, #tpu.memory_space<vmem>>, vector<1x1x128xf32>,
    %c0_765 = arith.constant 0 : index
    %c135_766 = arith.constant 135 : index
    %c0_767 = arith.constant 0 : index
    %790 = vector.load %arg2[%c0_765, %c135_766, %c0_767] : memref<1x192x128xf32, #tpu.memory_space<vmem>>, vector<1x1x128xf32>
    %791 = vector.shape_cast %790 : vector<1x1x128xf32> to vector<1x128xf32>
    %c0_768 = arith.constant 0 : index
    %c158_769 = arith.constant 158 : index
    %c0_770 = arith.constant 0 : index
    %792 = vector.load %arg3[%c0_768, %c158_769, %c0_770] : memref<1x192x128xf32, #tpu.memory_space<vmem>>, vector<1x1x128xf32>
    %793 = vector.shape_cast %792 : vector<1x1x128xf32> to vector<1x128xf32>
    %794 = vector.shape_cast %791 : vector<1x128xf32> to vector<1x1x128xf32>
    tpu.vector_store %arg3[%c0_768, %c158_769, %c0_770], %794 {strides = array<i32>} : memref<1x192x128xf32, #tpu.memory_space<vmem>>, vector<1x1x128xf32>,
    %c0_771 = arith.constant 0 : index
    %c183 = arith.constant 183 : index
    %c0_772 = arith.constant 0 : index
    %795 = vector.load %arg2[%c0_771, %c183, %c0_772] : memref<1x192x128xf32, #tpu.memory_space<vmem>>, vector<1x1x128xf32>
    %796 = vector.shape_cast %795 : vector<1x1x128xf32> to vector<1x128xf32>
    %c0_773 = arith.constant 0 : index
    %c159_774 = arith.constant 159 : index
    %c0_775 = arith.constant 0 : index
    %797 = vector.load %arg3[%c0_773, %c159_774, %c0_775] : memref<1x192x128xf32, #tpu.memory_space<vmem>>, vector<1x1x128xf32>
    %798 = vector.shape_cast %797 : vector<1x1x128xf32> to vector<1x128xf32>
    %799 = vector.shape_cast %796 : vector<1x128xf32> to vector<1x1x128xf32>
    tpu.vector_store %arg3[%c0_773, %c159_774, %c0_775], %799 {strides = array<i32>} : memref<1x192x128xf32, #tpu.memory_space<vmem>>, vector<1x1x128xf32>,
    %c0_776 = arith.constant 0 : index
    %c40_777 = arith.constant 40 : index
    %c0_778 = arith.constant 0 : index
    %800 = vector.load %arg2[%c0_776, %c40_777, %c0_778] : memref<1x192x128xf32, #tpu.memory_space<vmem>>, vector<1x1x128xf32>
    %801 = vector.shape_cast %800 : vector<1x1x128xf32> to vector<1x128xf32>
    %c0_779 = arith.constant 0 : index
    %c160_780 = arith.constant 160 : index
    %c0_781 = arith.constant 0 : index
    %802 = vector.load %arg3[%c0_779, %c160_780, %c0_781] : memref<1x192x128xf32, #tpu.memory_space<vmem>>, vector<1x1x128xf32>
    %803 = vector.shape_cast %802 : vector<1x1x128xf32> to vector<1x128xf32>
    %804 = vector.shape_cast %801 : vector<1x128xf32> to vector<1x1x128xf32>
    tpu.vector_store %arg3[%c0_779, %c160_780, %c0_781], %804 {strides = array<i32>} : memref<1x192x128xf32, #tpu.memory_space<vmem>>, vector<1x1x128xf32>,
    %c0_782 = arith.constant 0 : index
    %c88_783 = arith.constant 88 : index
    %c0_784 = arith.constant 0 : index
    %805 = vector.load %arg2[%c0_782, %c88_783, %c0_784] : memref<1x192x128xf32, #tpu.memory_space<vmem>>, vector<1x1x128xf32>
    %806 = vector.shape_cast %805 : vector<1x1x128xf32> to vector<1x128xf32>
    %c0_785 = arith.constant 0 : index
    %c161_786 = arith.constant 161 : index
    %c0_787 = arith.constant 0 : index
    %807 = vector.load %arg3[%c0_785, %c161_786, %c0_787] : memref<1x192x128xf32, #tpu.memory_space<vmem>>, vector<1x1x128xf32>
    %808 = vector.shape_cast %807 : vector<1x1x128xf32> to vector<1x128xf32>
    %809 = vector.shape_cast %806 : vector<1x128xf32> to vector<1x1x128xf32>
    tpu.vector_store %arg3[%c0_785, %c161_786, %c0_787], %809 {strides = array<i32>} : memref<1x192x128xf32, #tpu.memory_space<vmem>>, vector<1x1x128xf32>,
    %c0_788 = arith.constant 0 : index
    %c136_789 = arith.constant 136 : index
    %c0_790 = arith.constant 0 : index
    %810 = vector.load %arg2[%c0_788, %c136_789, %c0_790] : memref<1x192x128xf32, #tpu.memory_space<vmem>>, vector<1x1x128xf32>
    %811 = vector.shape_cast %810 : vector<1x1x128xf32> to vector<1x128xf32>
    %c0_791 = arith.constant 0 : index
    %c162_792 = arith.constant 162 : index
    %c0_793 = arith.constant 0 : index
    %812 = vector.load %arg3[%c0_791, %c162_792, %c0_793] : memref<1x192x128xf32, #tpu.memory_space<vmem>>, vector<1x1x128xf32>
    %813 = vector.shape_cast %812 : vector<1x1x128xf32> to vector<1x128xf32>
    %814 = vector.shape_cast %811 : vector<1x128xf32> to vector<1x1x128xf32>
    tpu.vector_store %arg3[%c0_791, %c162_792, %c0_793], %814 {strides = array<i32>} : memref<1x192x128xf32, #tpu.memory_space<vmem>>, vector<1x1x128xf32>,
    %c0_794 = arith.constant 0 : index
    %c184 = arith.constant 184 : index
    %c0_795 = arith.constant 0 : index
    %815 = vector.load %arg2[%c0_794, %c184, %c0_795] : memref<1x192x128xf32, #tpu.memory_space<vmem>>, vector<1x1x128xf32>
    %816 = vector.shape_cast %815 : vector<1x1x128xf32> to vector<1x128xf32>
    %c0_796 = arith.constant 0 : index
    %c163_797 = arith.constant 163 : index
    %c0_798 = arith.constant 0 : index
    %817 = vector.load %arg3[%c0_796, %c163_797, %c0_798] : memref<1x192x128xf32, #tpu.memory_space<vmem>>, vector<1x1x128xf32>
    %818 = vector.shape_cast %817 : vector<1x1x128xf32> to vector<1x128xf32>
    %819 = vector.shape_cast %816 : vector<1x128xf32> to vector<1x1x128xf32>
    tpu.vector_store %arg3[%c0_796, %c163_797, %c0_798], %819 {strides = array<i32>} : memref<1x192x128xf32, #tpu.memory_space<vmem>>, vector<1x1x128xf32>,
    %c0_799 = arith.constant 0 : index
    %c41_800 = arith.constant 41 : index
    %c0_801 = arith.constant 0 : index
    %820 = vector.load %arg2[%c0_799, %c41_800, %c0_801] : memref<1x192x128xf32, #tpu.memory_space<vmem>>, vector<1x1x128xf32>
    %821 = vector.shape_cast %820 : vector<1x1x128xf32> to vector<1x128xf32>
    %c0_802 = arith.constant 0 : index
    %c164_803 = arith.constant 164 : index
    %c0_804 = arith.constant 0 : index
    %822 = vector.load %arg3[%c0_802, %c164_803, %c0_804] : memref<1x192x128xf32, #tpu.memory_space<vmem>>, vector<1x1x128xf32>
    %823 = vector.shape_cast %822 : vector<1x1x128xf32> to vector<1x128xf32>
    %824 = vector.shape_cast %821 : vector<1x128xf32> to vector<1x1x128xf32>
    tpu.vector_store %arg3[%c0_802, %c164_803, %c0_804], %824 {strides = array<i32>} : memref<1x192x128xf32, #tpu.memory_space<vmem>>, vector<1x1x128xf32>,
    %c0_805 = arith.constant 0 : index
    %c89_806 = arith.constant 89 : index
    %c0_807 = arith.constant 0 : index
    %825 = vector.load %arg2[%c0_805, %c89_806, %c0_807] : memref<1x192x128xf32, #tpu.memory_space<vmem>>, vector<1x1x128xf32>
    %826 = vector.shape_cast %825 : vector<1x1x128xf32> to vector<1x128xf32>
    %c0_808 = arith.constant 0 : index
    %c165_809 = arith.constant 165 : index
    %c0_810 = arith.constant 0 : index
    %827 = vector.load %arg3[%c0_808, %c165_809, %c0_810] : memref<1x192x128xf32, #tpu.memory_space<vmem>>, vector<1x1x128xf32>
    %828 = vector.shape_cast %827 : vector<1x1x128xf32> to vector<1x128xf32>
    %829 = vector.shape_cast %826 : vector<1x128xf32> to vector<1x1x128xf32>
    tpu.vector_store %arg3[%c0_808, %c165_809, %c0_810], %829 {strides = array<i32>} : memref<1x192x128xf32, #tpu.memory_space<vmem>>, vector<1x1x128xf32>,
    %c0_811 = arith.constant 0 : index
    %c137_812 = arith.constant 137 : index
    %c0_813 = arith.constant 0 : index
    %830 = vector.load %arg2[%c0_811, %c137_812, %c0_813] : memref<1x192x128xf32, #tpu.memory_space<vmem>>, vector<1x1x128xf32>
    %831 = vector.shape_cast %830 : vector<1x1x128xf32> to vector<1x128xf32>
    %c0_814 = arith.constant 0 : index
    %c166_815 = arith.constant 166 : index
    %c0_816 = arith.constant 0 : index
    %832 = vector.load %arg3[%c0_814, %c166_815, %c0_816] : memref<1x192x128xf32, #tpu.memory_space<vmem>>, vector<1x1x128xf32>
    %833 = vector.shape_cast %832 : vector<1x1x128xf32> to vector<1x128xf32>
    %834 = vector.shape_cast %831 : vector<1x128xf32> to vector<1x1x128xf32>
    tpu.vector_store %arg3[%c0_814, %c166_815, %c0_816], %834 {strides = array<i32>} : memref<1x192x128xf32, #tpu.memory_space<vmem>>, vector<1x1x128xf32>,
    %c0_817 = arith.constant 0 : index
    %c185 = arith.constant 185 : index
    %c0_818 = arith.constant 0 : index
    %835 = vector.load %arg2[%c0_817, %c185, %c0_818] : memref<1x192x128xf32, #tpu.memory_space<vmem>>, vector<1x1x128xf32>
    %836 = vector.shape_cast %835 : vector<1x1x128xf32> to vector<1x128xf32>
    %c0_819 = arith.constant 0 : index
    %c167_820 = arith.constant 167 : index
    %c0_821 = arith.constant 0 : index
    %837 = vector.load %arg3[%c0_819, %c167_820, %c0_821] : memref<1x192x128xf32, #tpu.memory_space<vmem>>, vector<1x1x128xf32>
    %838 = vector.shape_cast %837 : vector<1x1x128xf32> to vector<1x128xf32>
    %839 = vector.shape_cast %836 : vector<1x128xf32> to vector<1x1x128xf32>
    tpu.vector_store %arg3[%c0_819, %c167_820, %c0_821], %839 {strides = array<i32>} : memref<1x192x128xf32, #tpu.memory_space<vmem>>, vector<1x1x128xf32>,
    %c0_822 = arith.constant 0 : index
    %c42_823 = arith.constant 42 : index
    %c0_824 = arith.constant 0 : index
    %840 = vector.load %arg2[%c0_822, %c42_823, %c0_824] : memref<1x192x128xf32, #tpu.memory_space<vmem>>, vector<1x1x128xf32>
    %841 = vector.shape_cast %840 : vector<1x1x128xf32> to vector<1x128xf32>
    %c0_825 = arith.constant 0 : index
    %c168_826 = arith.constant 168 : index
    %c0_827 = arith.constant 0 : index
    %842 = vector.load %arg3[%c0_825, %c168_826, %c0_827] : memref<1x192x128xf32, #tpu.memory_space<vmem>>, vector<1x1x128xf32>
    %843 = vector.shape_cast %842 : vector<1x1x128xf32> to vector<1x128xf32>
    %844 = vector.shape_cast %841 : vector<1x128xf32> to vector<1x1x128xf32>
    tpu.vector_store %arg3[%c0_825, %c168_826, %c0_827], %844 {strides = array<i32>} : memref<1x192x128xf32, #tpu.memory_space<vmem>>, vector<1x1x128xf32>,
    %c0_828 = arith.constant 0 : index
    %c90_829 = arith.constant 90 : index
    %c0_830 = arith.constant 0 : index
    %845 = vector.load %arg2[%c0_828, %c90_829, %c0_830] : memref<1x192x128xf32, #tpu.memory_space<vmem>>, vector<1x1x128xf32>
    %846 = vector.shape_cast %845 : vector<1x1x128xf32> to vector<1x128xf32>
    %c0_831 = arith.constant 0 : index
    %c169_832 = arith.constant 169 : index
    %c0_833 = arith.constant 0 : index
    %847 = vector.load %arg3[%c0_831, %c169_832, %c0_833] : memref<1x192x128xf32, #tpu.memory_space<vmem>>, vector<1x1x128xf32>
    %848 = vector.shape_cast %847 : vector<1x1x128xf32> to vector<1x128xf32>
    %849 = vector.shape_cast %846 : vector<1x128xf32> to vector<1x1x128xf32>
    tpu.vector_store %arg3[%c0_831, %c169_832, %c0_833], %849 {strides = array<i32>} : memref<1x192x128xf32, #tpu.memory_space<vmem>>, vector<1x1x128xf32>,
    %c0_834 = arith.constant 0 : index
    %c138_835 = arith.constant 138 : index
    %c0_836 = arith.constant 0 : index
    %850 = vector.load %arg2[%c0_834, %c138_835, %c0_836] : memref<1x192x128xf32, #tpu.memory_space<vmem>>, vector<1x1x128xf32>
    %851 = vector.shape_cast %850 : vector<1x1x128xf32> to vector<1x128xf32>
    %c0_837 = arith.constant 0 : index
    %c170_838 = arith.constant 170 : index
    %c0_839 = arith.constant 0 : index
    %852 = vector.load %arg3[%c0_837, %c170_838, %c0_839] : memref<1x192x128xf32, #tpu.memory_space<vmem>>, vector<1x1x128xf32>
    %853 = vector.shape_cast %852 : vector<1x1x128xf32> to vector<1x128xf32>
    %854 = vector.shape_cast %851 : vector<1x128xf32> to vector<1x1x128xf32>
    tpu.vector_store %arg3[%c0_837, %c170_838, %c0_839], %854 {strides = array<i32>} : memref<1x192x128xf32, #tpu.memory_space<vmem>>, vector<1x1x128xf32>,
    %c0_840 = arith.constant 0 : index
    %c186 = arith.constant 186 : index
    %c0_841 = arith.constant 0 : index
    %855 = vector.load %arg2[%c0_840, %c186, %c0_841] : memref<1x192x128xf32, #tpu.memory_space<vmem>>, vector<1x1x128xf32>
    %856 = vector.shape_cast %855 : vector<1x1x128xf32> to vector<1x128xf32>
    %c0_842 = arith.constant 0 : index
    %c171_843 = arith.constant 171 : index
    %c0_844 = arith.constant 0 : index
    %857 = vector.load %arg3[%c0_842, %c171_843, %c0_844] : memref<1x192x128xf32, #tpu.memory_space<vmem>>, vector<1x1x128xf32>
    %858 = vector.shape_cast %857 : vector<1x1x128xf32> to vector<1x128xf32>
    %859 = vector.shape_cast %856 : vector<1x128xf32> to vector<1x1x128xf32>
    tpu.vector_store %arg3[%c0_842, %c171_843, %c0_844], %859 {strides = array<i32>} : memref<1x192x128xf32, #tpu.memory_space<vmem>>, vector<1x1x128xf32>,
    %c0_845 = arith.constant 0 : index
    %c43_846 = arith.constant 43 : index
    %c0_847 = arith.constant 0 : index
    %860 = vector.load %arg2[%c0_845, %c43_846, %c0_847] : memref<1x192x128xf32, #tpu.memory_space<vmem>>, vector<1x1x128xf32>
    %861 = vector.shape_cast %860 : vector<1x1x128xf32> to vector<1x128xf32>
    %c0_848 = arith.constant 0 : index
    %c172_849 = arith.constant 172 : index
    %c0_850 = arith.constant 0 : index
    %862 = vector.load %arg3[%c0_848, %c172_849, %c0_850] : memref<1x192x128xf32, #tpu.memory_space<vmem>>, vector<1x1x128xf32>
    %863 = vector.shape_cast %862 : vector<1x1x128xf32> to vector<1x128xf32>
    %864 = vector.shape_cast %861 : vector<1x128xf32> to vector<1x1x128xf32>
    tpu.vector_store %arg3[%c0_848, %c172_849, %c0_850], %864 {strides = array<i32>} : memref<1x192x128xf32, #tpu.memory_space<vmem>>, vector<1x1x128xf32>,
    %c0_851 = arith.constant 0 : index
    %c91_852 = arith.constant 91 : index
    %c0_853 = arith.constant 0 : index
    %865 = vector.load %arg2[%c0_851, %c91_852, %c0_853] : memref<1x192x128xf32, #tpu.memory_space<vmem>>, vector<1x1x128xf32>
    %866 = vector.shape_cast %865 : vector<1x1x128xf32> to vector<1x128xf32>
    %c0_854 = arith.constant 0 : index
    %c173_855 = arith.constant 173 : index
    %c0_856 = arith.constant 0 : index
    %867 = vector.load %arg3[%c0_854, %c173_855, %c0_856] : memref<1x192x128xf32, #tpu.memory_space<vmem>>, vector<1x1x128xf32>
    %868 = vector.shape_cast %867 : vector<1x1x128xf32> to vector<1x128xf32>
    %869 = vector.shape_cast %866 : vector<1x128xf32> to vector<1x1x128xf32>
    tpu.vector_store %arg3[%c0_854, %c173_855, %c0_856], %869 {strides = array<i32>} : memref<1x192x128xf32, #tpu.memory_space<vmem>>, vector<1x1x128xf32>,
    %c0_857 = arith.constant 0 : index
    %c139_858 = arith.constant 139 : index
    %c0_859 = arith.constant 0 : index
    %870 = vector.load %arg2[%c0_857, %c139_858, %c0_859] : memref<1x192x128xf32, #tpu.memory_space<vmem>>, vector<1x1x128xf32>
    %871 = vector.shape_cast %870 : vector<1x1x128xf32> to vector<1x128xf32>
    %c0_860 = arith.constant 0 : index
    %c174_861 = arith.constant 174 : index
    %c0_862 = arith.constant 0 : index
    %872 = vector.load %arg3[%c0_860, %c174_861, %c0_862] : memref<1x192x128xf32, #tpu.memory_space<vmem>>, vector<1x1x128xf32>
    %873 = vector.shape_cast %872 : vector<1x1x128xf32> to vector<1x128xf32>
    %874 = vector.shape_cast %871 : vector<1x128xf32> to vector<1x1x128xf32>
    tpu.vector_store %arg3[%c0_860, %c174_861, %c0_862], %874 {strides = array<i32>} : memref<1x192x128xf32, #tpu.memory_space<vmem>>, vector<1x1x128xf32>,
    %c0_863 = arith.constant 0 : index
    %c187 = arith.constant 187 : index
    %c0_864 = arith.constant 0 : index
    %875 = vector.load %arg2[%c0_863, %c187, %c0_864] : memref<1x192x128xf32, #tpu.memory_space<vmem>>, vector<1x1x128xf32>
    %876 = vector.shape_cast %875 : vector<1x1x128xf32> to vector<1x128xf32>
    %c0_865 = arith.constant 0 : index
    %c175_866 = arith.constant 175 : index
    %c0_867 = arith.constant 0 : index
    %877 = vector.load %arg3[%c0_865, %c175_866, %c0_867] : memref<1x192x128xf32, #tpu.memory_space<vmem>>, vector<1x1x128xf32>
    %878 = vector.shape_cast %877 : vector<1x1x128xf32> to vector<1x128xf32>
    %879 = vector.shape_cast %876 : vector<1x128xf32> to vector<1x1x128xf32>
    tpu.vector_store %arg3[%c0_865, %c175_866, %c0_867], %879 {strides = array<i32>} : memref<1x192x128xf32, #tpu.memory_space<vmem>>, vector<1x1x128xf32>,
    %c0_868 = arith.constant 0 : index
    %c44_869 = arith.constant 44 : index
    %c0_870 = arith.constant 0 : index
    %880 = vector.load %arg2[%c0_868, %c44_869, %c0_870] : memref<1x192x128xf32, #tpu.memory_space<vmem>>, vector<1x1x128xf32>
    %881 = vector.shape_cast %880 : vector<1x1x128xf32> to vector<1x128xf32>
    %c0_871 = arith.constant 0 : index
    %c176_872 = arith.constant 176 : index
    %c0_873 = arith.constant 0 : index
    %882 = vector.load %arg3[%c0_871, %c176_872, %c0_873] : memref<1x192x128xf32, #tpu.memory_space<vmem>>, vector<1x1x128xf32>
    %883 = vector.shape_cast %882 : vector<1x1x128xf32> to vector<1x128xf32>
    %884 = vector.shape_cast %881 : vector<1x128xf32> to vector<1x1x128xf32>
    tpu.vector_store %arg3[%c0_871, %c176_872, %c0_873], %884 {strides = array<i32>} : memref<1x192x128xf32, #tpu.memory_space<vmem>>, vector<1x1x128xf32>,
    %c0_874 = arith.constant 0 : index
    %c92_875 = arith.constant 92 : index
    %c0_876 = arith.constant 0 : index
    %885 = vector.load %arg2[%c0_874, %c92_875, %c0_876] : memref<1x192x128xf32, #tpu.memory_space<vmem>>, vector<1x1x128xf32>
    %886 = vector.shape_cast %885 : vector<1x1x128xf32> to vector<1x128xf32>
    %c0_877 = arith.constant 0 : index
    %c177_878 = arith.constant 177 : index
    %c0_879 = arith.constant 0 : index
    %887 = vector.load %arg3[%c0_877, %c177_878, %c0_879] : memref<1x192x128xf32, #tpu.memory_space<vmem>>, vector<1x1x128xf32>
    %888 = vector.shape_cast %887 : vector<1x1x128xf32> to vector<1x128xf32>
    %889 = vector.shape_cast %886 : vector<1x128xf32> to vector<1x1x128xf32>
    tpu.vector_store %arg3[%c0_877, %c177_878, %c0_879], %889 {strides = array<i32>} : memref<1x192x128xf32, #tpu.memory_space<vmem>>, vector<1x1x128xf32>,
    %c0_880 = arith.constant 0 : index
    %c140_881 = arith.constant 140 : index
    %c0_882 = arith.constant 0 : index
    %890 = vector.load %arg2[%c0_880, %c140_881, %c0_882] : memref<1x192x128xf32, #tpu.memory_space<vmem>>, vector<1x1x128xf32>
    %891 = vector.shape_cast %890 : vector<1x1x128xf32> to vector<1x128xf32>
    %c0_883 = arith.constant 0 : index
    %c178_884 = arith.constant 178 : index
    %c0_885 = arith.constant 0 : index
    %892 = vector.load %arg3[%c0_883, %c178_884, %c0_885] : memref<1x192x128xf32, #tpu.memory_space<vmem>>, vector<1x1x128xf32>
    %893 = vector.shape_cast %892 : vector<1x1x128xf32> to vector<1x128xf32>
    %894 = vector.shape_cast %891 : vector<1x128xf32> to vector<1x1x128xf32>
    tpu.vector_store %arg3[%c0_883, %c178_884, %c0_885], %894 {strides = array<i32>} : memref<1x192x128xf32, #tpu.memory_space<vmem>>, vector<1x1x128xf32>,
    %c0_886 = arith.constant 0 : index
    %c188 = arith.constant 188 : index
    %c0_887 = arith.constant 0 : index
    %895 = vector.load %arg2[%c0_886, %c188, %c0_887] : memref<1x192x128xf32, #tpu.memory_space<vmem>>, vector<1x1x128xf32>
    %896 = vector.shape_cast %895 : vector<1x1x128xf32> to vector<1x128xf32>
    %c0_888 = arith.constant 0 : index
    %c179_889 = arith.constant 179 : index
    %c0_890 = arith.constant 0 : index
    %897 = vector.load %arg3[%c0_888, %c179_889, %c0_890] : memref<1x192x128xf32, #tpu.memory_space<vmem>>, vector<1x1x128xf32>
    %898 = vector.shape_cast %897 : vector<1x1x128xf32> to vector<1x128xf32>
    %899 = vector.shape_cast %896 : vector<1x128xf32> to vector<1x1x128xf32>
    tpu.vector_store %arg3[%c0_888, %c179_889, %c0_890], %899 {strides = array<i32>} : memref<1x192x128xf32, #tpu.memory_space<vmem>>, vector<1x1x128xf32>,
    %c0_891 = arith.constant 0 : index
    %c45_892 = arith.constant 45 : index
    %c0_893 = arith.constant 0 : index
    %900 = vector.load %arg2[%c0_891, %c45_892, %c0_893] : memref<1x192x128xf32, #tpu.memory_space<vmem>>, vector<1x1x128xf32>
    %901 = vector.shape_cast %900 : vector<1x1x128xf32> to vector<1x128xf32>
    %c0_894 = arith.constant 0 : index
    %c180_895 = arith.constant 180 : index
    %c0_896 = arith.constant 0 : index
    %902 = vector.load %arg3[%c0_894, %c180_895, %c0_896] : memref<1x192x128xf32, #tpu.memory_space<vmem>>, vector<1x1x128xf32>
    %903 = vector.shape_cast %902 : vector<1x1x128xf32> to vector<1x128xf32>
    %904 = vector.shape_cast %901 : vector<1x128xf32> to vector<1x1x128xf32>
    tpu.vector_store %arg3[%c0_894, %c180_895, %c0_896], %904 {strides = array<i32>} : memref<1x192x128xf32, #tpu.memory_space<vmem>>, vector<1x1x128xf32>,
    %c0_897 = arith.constant 0 : index
    %c93_898 = arith.constant 93 : index
    %c0_899 = arith.constant 0 : index
    %905 = vector.load %arg2[%c0_897, %c93_898, %c0_899] : memref<1x192x128xf32, #tpu.memory_space<vmem>>, vector<1x1x128xf32>
    %906 = vector.shape_cast %905 : vector<1x1x128xf32> to vector<1x128xf32>
    %c0_900 = arith.constant 0 : index
    %c181_901 = arith.constant 181 : index
    %c0_902 = arith.constant 0 : index
    %907 = vector.load %arg3[%c0_900, %c181_901, %c0_902] : memref<1x192x128xf32, #tpu.memory_space<vmem>>, vector<1x1x128xf32>
    %908 = vector.shape_cast %907 : vector<1x1x128xf32> to vector<1x128xf32>
    %909 = vector.shape_cast %906 : vector<1x128xf32> to vector<1x1x128xf32>
    tpu.vector_store %arg3[%c0_900, %c181_901, %c0_902], %909 {strides = array<i32>} : memref<1x192x128xf32, #tpu.memory_space<vmem>>, vector<1x1x128xf32>,
    %c0_903 = arith.constant 0 : index
    %c141_904 = arith.constant 141 : index
    %c0_905 = arith.constant 0 : index
    %910 = vector.load %arg2[%c0_903, %c141_904, %c0_905] : memref<1x192x128xf32, #tpu.memory_space<vmem>>, vector<1x1x128xf32>
    %911 = vector.shape_cast %910 : vector<1x1x128xf32> to vector<1x128xf32>
    %c0_906 = arith.constant 0 : index
    %c182_907 = arith.constant 182 : index
    %c0_908 = arith.constant 0 : index
    %912 = vector.load %arg3[%c0_906, %c182_907, %c0_908] : memref<1x192x128xf32, #tpu.memory_space<vmem>>, vector<1x1x128xf32>
    %913 = vector.shape_cast %912 : vector<1x1x128xf32> to vector<1x128xf32>
    %914 = vector.shape_cast %911 : vector<1x128xf32> to vector<1x1x128xf32>
    tpu.vector_store %arg3[%c0_906, %c182_907, %c0_908], %914 {strides = array<i32>} : memref<1x192x128xf32, #tpu.memory_space<vmem>>, vector<1x1x128xf32>,
    %c0_909 = arith.constant 0 : index
    %c189 = arith.constant 189 : index
    %c0_910 = arith.constant 0 : index
    %915 = vector.load %arg2[%c0_909, %c189, %c0_910] : memref<1x192x128xf32, #tpu.memory_space<vmem>>, vector<1x1x128xf32>
    %916 = vector.shape_cast %915 : vector<1x1x128xf32> to vector<1x128xf32>
    %c0_911 = arith.constant 0 : index
    %c183_912 = arith.constant 183 : index
    %c0_913 = arith.constant 0 : index
    %917 = vector.load %arg3[%c0_911, %c183_912, %c0_913] : memref<1x192x128xf32, #tpu.memory_space<vmem>>, vector<1x1x128xf32>
    %918 = vector.shape_cast %917 : vector<1x1x128xf32> to vector<1x128xf32>
    %919 = vector.shape_cast %916 : vector<1x128xf32> to vector<1x1x128xf32>
    tpu.vector_store %arg3[%c0_911, %c183_912, %c0_913], %919 {strides = array<i32>} : memref<1x192x128xf32, #tpu.memory_space<vmem>>, vector<1x1x128xf32>,
    %c0_914 = arith.constant 0 : index
    %c46_915 = arith.constant 46 : index
    %c0_916 = arith.constant 0 : index
    %920 = vector.load %arg2[%c0_914, %c46_915, %c0_916] : memref<1x192x128xf32, #tpu.memory_space<vmem>>, vector<1x1x128xf32>
    %921 = vector.shape_cast %920 : vector<1x1x128xf32> to vector<1x128xf32>
    %c0_917 = arith.constant 0 : index
    %c184_918 = arith.constant 184 : index
    %c0_919 = arith.constant 0 : index
    %922 = vector.load %arg3[%c0_917, %c184_918, %c0_919] : memref<1x192x128xf32, #tpu.memory_space<vmem>>, vector<1x1x128xf32>
    %923 = vector.shape_cast %922 : vector<1x1x128xf32> to vector<1x128xf32>
    %924 = vector.shape_cast %921 : vector<1x128xf32> to vector<1x1x128xf32>
    tpu.vector_store %arg3[%c0_917, %c184_918, %c0_919], %924 {strides = array<i32>} : memref<1x192x128xf32, #tpu.memory_space<vmem>>, vector<1x1x128xf32>,
    %c0_920 = arith.constant 0 : index
    %c94_921 = arith.constant 94 : index
    %c0_922 = arith.constant 0 : index
    %925 = vector.load %arg2[%c0_920, %c94_921, %c0_922] : memref<1x192x128xf32, #tpu.memory_space<vmem>>, vector<1x1x128xf32>
    %926 = vector.shape_cast %925 : vector<1x1x128xf32> to vector<1x128xf32>
    %c0_923 = arith.constant 0 : index
    %c185_924 = arith.constant 185 : index
    %c0_925 = arith.constant 0 : index
    %927 = vector.load %arg3[%c0_923, %c185_924, %c0_925] : memref<1x192x128xf32, #tpu.memory_space<vmem>>, vector<1x1x128xf32>
    %928 = vector.shape_cast %927 : vector<1x1x128xf32> to vector<1x128xf32>
    %929 = vector.shape_cast %926 : vector<1x128xf32> to vector<1x1x128xf32>
    tpu.vector_store %arg3[%c0_923, %c185_924, %c0_925], %929 {strides = array<i32>} : memref<1x192x128xf32, #tpu.memory_space<vmem>>, vector<1x1x128xf32>,
    %c0_926 = arith.constant 0 : index
    %c142_927 = arith.constant 142 : index
    %c0_928 = arith.constant 0 : index
    %930 = vector.load %arg2[%c0_926, %c142_927, %c0_928] : memref<1x192x128xf32, #tpu.memory_space<vmem>>, vector<1x1x128xf32>
    %931 = vector.shape_cast %930 : vector<1x1x128xf32> to vector<1x128xf32>
    %c0_929 = arith.constant 0 : index
    %c186_930 = arith.constant 186 : index
    %c0_931 = arith.constant 0 : index
    %932 = vector.load %arg3[%c0_929, %c186_930, %c0_931] : memref<1x192x128xf32, #tpu.memory_space<vmem>>, vector<1x1x128xf32>
    %933 = vector.shape_cast %932 : vector<1x1x128xf32> to vector<1x128xf32>
    %934 = vector.shape_cast %931 : vector<1x128xf32> to vector<1x1x128xf32>
    tpu.vector_store %arg3[%c0_929, %c186_930, %c0_931], %934 {strides = array<i32>} : memref<1x192x128xf32, #tpu.memory_space<vmem>>, vector<1x1x128xf32>,
    %c0_932 = arith.constant 0 : index
    %c190 = arith.constant 190 : index
    %c0_933 = arith.constant 0 : index
    %935 = vector.load %arg2[%c0_932, %c190, %c0_933] : memref<1x192x128xf32, #tpu.memory_space<vmem>>, vector<1x1x128xf32>
    %936 = vector.shape_cast %935 : vector<1x1x128xf32> to vector<1x128xf32>
    %c0_934 = arith.constant 0 : index
    %c187_935 = arith.constant 187 : index
    %c0_936 = arith.constant 0 : index
    %937 = vector.load %arg3[%c0_934, %c187_935, %c0_936] : memref<1x192x128xf32, #tpu.memory_space<vmem>>, vector<1x1x128xf32>
    %938 = vector.shape_cast %937 : vector<1x1x128xf32> to vector<1x128xf32>
    %939 = vector.shape_cast %936 : vector<1x128xf32> to vector<1x1x128xf32>
    tpu.vector_store %arg3[%c0_934, %c187_935, %c0_936], %939 {strides = array<i32>} : memref<1x192x128xf32, #tpu.memory_space<vmem>>, vector<1x1x128xf32>,
    %c0_937 = arith.constant 0 : index
    %c47_938 = arith.constant 47 : index
    %c0_939 = arith.constant 0 : index
    %940 = vector.load %arg2[%c0_937, %c47_938, %c0_939] : memref<1x192x128xf32, #tpu.memory_space<vmem>>, vector<1x1x128xf32>
    %941 = vector.shape_cast %940 : vector<1x1x128xf32> to vector<1x128xf32>
    %c0_940 = arith.constant 0 : index
    %c188_941 = arith.constant 188 : index
    %c0_942 = arith.constant 0 : index
    %942 = vector.load %arg3[%c0_940, %c188_941, %c0_942] : memref<1x192x128xf32, #tpu.memory_space<vmem>>, vector<1x1x128xf32>
    %943 = vector.shape_cast %942 : vector<1x1x128xf32> to vector<1x128xf32>
    %944 = vector.shape_cast %941 : vector<1x128xf32> to vector<1x1x128xf32>
    tpu.vector_store %arg3[%c0_940, %c188_941, %c0_942], %944 {strides = array<i32>} : memref<1x192x128xf32, #tpu.memory_space<vmem>>, vector<1x1x128xf32>,
    %c0_943 = arith.constant 0 : index
    %c95_944 = arith.constant 95 : index
    %c0_945 = arith.constant 0 : index
    %945 = vector.load %arg2[%c0_943, %c95_944, %c0_945] : memref<1x192x128xf32, #tpu.memory_space<vmem>>, vector<1x1x128xf32>
    %946 = vector.shape_cast %945 : vector<1x1x128xf32> to vector<1x128xf32>
    %c0_946 = arith.constant 0 : index
    %c189_947 = arith.constant 189 : index
    %c0_948 = arith.constant 0 : index
    %947 = vector.load %arg3[%c0_946, %c189_947, %c0_948] : memref<1x192x128xf32, #tpu.memory_space<vmem>>, vector<1x1x128xf32>
    %948 = vector.shape_cast %947 : vector<1x1x128xf32> to vector<1x128xf32>
    %949 = vector.shape_cast %946 : vector<1x128xf32> to vector<1x1x128xf32>
    tpu.vector_store %arg3[%c0_946, %c189_947, %c0_948], %949 {strides = array<i32>} : memref<1x192x128xf32, #tpu.memory_space<vmem>>, vector<1x1x128xf32>,
    %c0_949 = arith.constant 0 : index
    %c143_950 = arith.constant 143 : index
    %c0_951 = arith.constant 0 : index
    %950 = vector.load %arg2[%c0_949, %c143_950, %c0_951] : memref<1x192x128xf32, #tpu.memory_space<vmem>>, vector<1x1x128xf32>
    %951 = vector.shape_cast %950 : vector<1x1x128xf32> to vector<1x128xf32>
    %c0_952 = arith.constant 0 : index
    %c190_953 = arith.constant 190 : index
    %c0_954 = arith.constant 0 : index
    %952 = vector.load %arg3[%c0_952, %c190_953, %c0_954] : memref<1x192x128xf32, #tpu.memory_space<vmem>>, vector<1x1x128xf32>
    %953 = vector.shape_cast %952 : vector<1x1x128xf32> to vector<1x128xf32>
    %954 = vector.shape_cast %951 : vector<1x128xf32> to vector<1x1x128xf32>
    tpu.vector_store %arg3[%c0_952, %c190_953, %c0_954], %954 {strides = array<i32>} : memref<1x192x128xf32, #tpu.memory_space<vmem>>, vector<1x1x128xf32>,
    %c0_955 = arith.constant 0 : index
    %c191 = arith.constant 191 : index
    %c0_956 = arith.constant 0 : index
    %955 = vector.load %arg2[%c0_955, %c191, %c0_956] : memref<1x192x128xf32, #tpu.memory_space<vmem>>, vector<1x1x128xf32>
    %956 = vector.shape_cast %955 : vector<1x1x128xf32> to vector<1x128xf32>
    %c0_957 = arith.constant 0 : index
    %c191_958 = arith.constant 191 : index
    %c0_959 = arith.constant 0 : index
    %957 = vector.load %arg3[%c0_957, %c191_958, %c0_959] : memref<1x192x128xf32, #tpu.memory_space<vmem>>, vector<1x1x128xf32>
    %958 = vector.shape_cast %957 : vector<1x1x128xf32> to vector<1x128xf32>
    %959 = vector.shape_cast %956 : vector<1x128xf32> to vector<1x1x128xf32>
    tpu.vector_store %arg3[%c0_957, %c191_958, %c0_959], %959 {strides = array<i32>} : memref<1x192x128xf32, #tpu.memory_space<vmem>>, vector<1x1x128xf32>,
    return
  }
  func.func @transform_0(%arg0: i32, %arg1: i32) -> (i32, i32, i32) {
    %c0_i32 = arith.constant 0 : i32
    %c0_i32_0 = arith.constant 0 : i32
    return %arg0, %c0_i32, %arg1 : i32, i32, i32
  }
  func.func @transform_1(%arg0: i32, %arg1: i32) -> (i32, i32, i32) {
    %c0_i32 = arith.constant 0 : i32
    %c0_i32_0 = arith.constant 0 : i32
    return %arg0, %c0_i32, %arg1 : i32, i32, i32
  }
}

</mosaic_0001>

<llo_original>
// kernel: channel_shuffle_pallas.1
$region0: #{channel_shuffle_pallas.1}
  #allocation0 [shape = 'u32[]', space=smem, size = 0x4, offset = 0x4, fixed_abs, tag = 'smem constant byte address 0x4 - core index']
  #allocation1 [shape = 'u32[144,128]{1,0:T(1,128)}', space=vmem, size = 0x12000, scoped, tag = 'internal scratch']
  %s0 = inlined_call_operand.vmem [shape: f32[2,192,128], index: 0, kind: input, shape index: {}]
  %s1 = inlined_call_operand.vmem [shape: f32[2,192,128], index: 1, kind: output, shape index: {}]
  %s2 = sld [smem:[#allocation0]]
  $region37: #{channel_shuffle_pallas.1} parent=0
    _
  %s4 = ssub.s32 1, %s2
  %s5 = scalar_select 0, %s4, %s2
  loop: start=0, step=1, limit=4
  $region2: #{channel_shuffle_pallas.1} parent=0 // loop_pre_header
    _
  $region3: #{channel_shuffle_pallas.1} parent=0 // loop_header
    %s7 = sphi 0, %s11
    %p8 = scmp.ge.s32.totalorder %s7, 4
    %s14 = sphi 0, %s26
    %s15 = sphi 0, %s22
    %s16 = sphi 0, %s14
    %s17 = sphi 0, %s15
    %s18 = sphi 0, %s16
    %s19 = sphi 0, %s17
    %s31 = sphi 0, %s33
    %s34 = sphi 0, %s31
    %s35 = sphi 0, %s34
    %s51 = sphi 0, %s35
    %s59 = sphi 0, %s61
    %s62 = sphi 0, %s59
    %s63 = sphi 0, %s62
    %s79 = sphi 0, %s63
  $region4: #{channel_shuffle_pallas.1} parent=0 // loop_header_branch
    %10 = sbr.rel (%p8) target = $region8
  $region5: #{channel_shuffle_pallas.1} parent=0 // loop_body
    %s12 = ssub.s32 %s7, 1
    %s13 = ssub.s32 %s7, 2
    %s20 = sadd.s32 1, %s15
    %p21 = scmp.ge.s32.totalorder %s20, 1
    %s22 = scalar_select %p21, 0, %s20
    %s23 = sadd.s32 1, %s14
    %s24 = scalar_select %p21, %s23, %s14
    %p25 = scmp.ge.s32.totalorder %s24, 2
    %s26 = scalar_select %p25, 0, %s24
    %s27 = ssub.s32 %s14, %s26
    %s28 = ssub.s32 %s15, %s22
    %s29 = sor.u32 %s27, %s28
    %p30 = scmp.eq.s32.totalorder %s29, 0
    %s32 = sadd.s32 %s31, 1
    %s33 = scalar_select %p30, %s31, %s32
    %p36 = pneg %p30
    %p37 = scmp.eq.s32.totalorder %s7, 1
    %p38 = por %p36, %p37
    %p39 = scmp.ne.s32.totalorder %s31, %s34
    %p40 = scmp.eq.s32.totalorder %s7, 0
    %p41 = por %p39, %p40
    %p42 = scmp.ne.s32.totalorder %s31, %s34
    %p43 = scmp.eq.s32.totalorder %s12, 1
    %p44 = por %p42, %p43
    %p45 = scmp.ne.s32.totalorder %s34, %s35
    %p46 = scmp.eq.s32.totalorder %s12, 0
    %p47 = por %p45, %p46
    %p48 = scmp.ne.s32.totalorder %s34, %s35
    %p49 = scmp.eq.s32.totalorder %s13, 1
    %p50 = por %p48, %p49
    %p52 = scmp.ne.s32.totalorder %s35, %s51
    %p53 = scmp.eq.s32.totalorder %s13, 0
    %p54 = por %p52, %p53
    %s55 = ssub.s32 %s14, %s26
    %s56 = ssub.s32 %s15, %s22
    %s57 = sor.u32 %s55, %s56
    %p58 = scmp.eq.s32.totalorder %s57, 0
    %s60 = sadd.s32 %s59, 1
    %s61 = scalar_select %p58, %s59, %s60
    %p64 = pneg %p58
    %p65 = scmp.eq.s32.totalorder %s7, 1
    %p66 = por %p64, %p65
    %p67 = scmp.ne.s32.totalorder %s59, %s62
    %p68 = scmp.eq.s32.totalorder %s7, 0
    %p69 = por %p67, %p68
    %p70 = scmp.ne.s32.totalorder %s59, %s62
    %p71 = scmp.eq.s32.totalorder %s12, 1
    %p72 = por %p70, %p71
    %p73 = scmp.ne.s32.totalorder %s62, %s63
    %p74 = scmp.eq.s32.totalorder %s12, 0
    %p75 = por %p73, %p74
    %p76 = scmp.ne.s32.totalorder %s62, %s63
    %p77 = scmp.eq.s32.totalorder %s13, 1
    %p78 = por %p76, %p77
    %p80 = scmp.ne.s32.totalorder %s63, %s79
    %p81 = scmp.eq.s32.totalorder %s13, 0
    %p82 = por %p80, %p81
    %p83 = scmp.le.s32.totalorder 1, %s7
    %p84 = scmp.lt.s32.totalorder %s7, 3
    %p85 = pnand %p83, %p84
    %p86 = pneg %p85
    // Predicated region
    $region9: #{channel_shuffle_pallas.1} parent=5 // pred_check
      _
    $region10: #{channel_shuffle_pallas.1} parent=5 // pred_check_branch
      %88 = sbr.rel (%p85) target = $region12
    $region11: #{channel_shuffle_pallas.1} parent=5 // pred_region
      %s89 = ssub.s32 %s7, 1
    $region12: #{channel_shuffle_pallas.1} parent=5 // pred_fallthru
      _
    %p90 = scmp.lt.s32.totalorder %s7, 2
    // Predicated region
    $region13: #{channel_shuffle_pallas.1} parent=5 // pred_check
      %p91 = pneg %p90
    $region14: #{channel_shuffle_pallas.1} parent=5 // pred_check_branch
      %93 = sbr.rel (%p91) target = $region16
    $region15: #{channel_shuffle_pallas.1} parent=5 // pred_region
      // Predicated region
      $region17: #{channel_shuffle_pallas.1} parent=15 // pred_check
        %p94 = pneg %p41
      $region18: #{channel_shuffle_pallas.1} parent=15 // pred_check_branch
        %96 = sbr.rel (%p94) target = $region20
      $region19: #{channel_shuffle_pallas.1} parent=15 // pred_region
        %p97 = scmp.lt.s32.totalorder %s14, 1
        %s98 = scalar_select %p97, %s14, 1
        %p99 = scmp.lt.s32.totalorder %s15, 0
        %s100 = scalar_select %p99, %s15, 0
        %s101 = smul.addr %s98, 24
        %s102 = sadd.s32 %s100, %s101
        %s103 = smul.addr %s102, 8
        %s104 = scalar_lea.vmem %s0, %s103
      $region20: #{channel_shuffle_pallas.1} parent=15 // pred_fallthru
        _
    $region16: #{channel_shuffle_pallas.1} parent=5 // pred_fallthru
      _
    %p105 = scmp.le.s32.totalorder 1, %s7
    %p106 = scmp.lt.s32.totalorder %s7, 3
    %p107 = pnand %p105, %p106
    %p108 = pneg %p107
    // Predicated region
    $region21: #{channel_shuffle_pallas.1} parent=5 // pred_check
      _
    $region22: #{channel_shuffle_pallas.1} parent=5 // pred_check_branch
      %110 = sbr.rel (%p107) target = $region24
    $region23: #{channel_shuffle_pallas.1} parent=5 // pred_region
      %s111 = ssub.s32 %s7, 1
      %p112 = scmp.lt.s32.totalorder %s16, 1
      %s113 = scalar_select %p112, %s16, 1
      %p114 = scmp.lt.s32.totalorder %s17, 0
      %s115 = scalar_select %p114, %s17, 0
      %s116 = smul.addr %s113, 24
      %s117 = sadd.s32 %s115, %s116
      %s118 = smul.addr %s117, 8
      %s119 = scalar_lea.vmem %s0, %s118
      %p120 = pneg %p47
      %p121 = pneg %p44
      %p122 = pneg %p75
      %p123 = pneg %p72
      %p124 = scmp.lt.s32.totalorder %s16, 1
      %s125 = scalar_select %p124, %s16, 1
      %p126 = scmp.lt.s32.totalorder %s17, 0
      %s127 = scalar_select %p126, %s17, 0
      %s128 = smul.addr %s125, 24
      %s129 = sadd.s32 %s127, %s128
      %s130 = smul.addr %s129, 8
      %s131 = scalar_lea.vmem %s1, %s130
      %p132 = scmp.lt.s32.totalorder %s16, 1
      %s133 = scalar_select %p132, %s16, 1
      %p134 = scmp.lt.s32.totalorder %s17, 0
      %s135 = scalar_select %p134, %s17, 0
      %s136 = smul.addr %s133, 24
      %s137 = sadd.s32 %s135, %s136
      %s138 = smul.addr %s137, 8
      %s139 = scalar_lea.vmem %s0, %s138
      %p140 = scmp.lt.s32.totalorder %s16, 1
      %s141 = scalar_select %p140, %s16, 1
      %p142 = scmp.lt.s32.totalorder %s17, 0
      %s143 = scalar_select %p142, %s17, 0
      %s144 = smul.addr %s141, 24
      %s145 = sadd.s32 %s143, %s144
      %s146 = smul.addr %s145, 8
      %s147 = scalar_lea.vmem %s1, %s146
      %v148 = vld [vmem:[%s139] sm:$0x1]
      %149 = vst [vmem:[%s147] sm:$0x1] %v148
      %v150 = vld [vmem:[%s139 + $0x30] sm:$0x1]
      %151 = vst [vmem:[%s147 + $0x1] sm:$0x1] %v150
      %v152 = vld [vmem:[%s139 + $0x60] sm:$0x1]
      %153 = vst [vmem:[%s147 + $0x2] sm:$0x1] %v152
      %v154 = vld [vmem:[%s139 + $0x90] sm:$0x1]
      %155 = vst [vmem:[%s147 + $0x3] sm:$0x1] %v154
      %v156 = vld [vmem:[%s139 + $0x1] sm:$0x1]
      %157 = vst [vmem:[%s147 + $0x4] sm:$0x1] %v156
      %v158 = vld [vmem:[%s139 + $0x31] sm:$0x1]
      %159 = vst [vmem:[%s147 + $0x5] sm:$0x1] %v158
      %v160 = vld [vmem:[%s139 + $0x61] sm:$0x1]
      %161 = vst [vmem:[%s147 + $0x6] sm:$0x1] %v160
      %v162 = vld [vmem:[%s139 + $0x91] sm:$0x1]
      %163 = vst [vmem:[%s147 + $0x7] sm:$0x1] %v162
      %v164 = vld [vmem:[%s139 + $0x2] sm:$0x1]
      %165 = vst [vmem:[%s147 + $0x8] sm:$0x1] %v164
      %v166 = vld [vmem:[%s139 + $0x32] sm:$0x1]
      %167 = vst [vmem:[%s147 + $0x9] sm:$0x1] %v166
      %v168 = vld [vmem:[%s139 + $0x62] sm:$0x1]
      %169 = vst [vmem:[%s147 + $0xa] sm:$0x1] %v168
      %v170 = vld [vmem:[%s139 + $0x92] sm:$0x1]
      %171 = vst [vmem:[%s147 + $0xb] sm:$0x1] %v170
      %v172 = vld [vmem:[%s139 + $0x3] sm:$0x1]
      %173 = vst [vmem:[%s147 + $0xc] sm:$0x1] %v172
      %v174 = vld [vmem:[%s139 + $0x33] sm:$0x1]
      %175 = vst [vmem:[%s147 + $0xd] sm:$0x1] %v174
      %v176 = vld [vmem:[%s139 + $0x63] sm:$0x1]
      %177 = vst [vmem:[%s147 + $0xe] sm:$0x1] %v176
      %v178 = vld [vmem:[%s139 + $0x93] sm:$0x1]
      %179 = vst [vmem:[%s147 + $0xf] sm:$0x1] %v178
      %v180 = vld [vmem:[%s139 + $0x4] sm:$0x1]
      %181 = vst [vmem:[%s147 + $0x10] sm:$0x1] %v180
      %v182 = vld [vmem:[%s139 + $0x34] sm:$0x1]
      %183 = vst [vmem:[%s147 + $0x11] sm:$0x1] %v182
      %v184 = vld [vmem:[%s139 + $0x64] sm:$0x1]
      %185 = vst [vmem:[%s147 + $0x12] sm:$0x1] %v184
      %v186 = vld [vmem:[%s139 + $0x94] sm:$0x1]
      %187 = vst [vmem:[%s147 + $0x13] sm:$0x1] %v186
      %v188 = vld [vmem:[%s139 + $0x5] sm:$0x1]
      %189 = vst [vmem:[%s147 + $0x14] sm:$0x1] %v188
      %v190 = vld [vmem:[%s139 + $0x35] sm:$0x1]
      %191 = vst [vmem:[%s147 + $0x15] sm:$0x1] %v190
      %v192 = vld [vmem:[%s139 + $0x65] sm:$0x1]
      %193 = vst [vmem:[%s147 + $0x16] sm:$0x1] %v192
      %v194 = vld [vmem:[%s139 + $0x95] sm:$0x1]
      %195 = vst [vmem:[%s147 + $0x17] sm:$0x1] %v194
      %v196 = vld [vmem:[%s139 + $0x6] sm:$0x1]
      %197 = vst [vmem:[%s147 + $0x18] sm:$0x1] %v196
      %v198 = vld [vmem:[%s139 + $0x36] sm:$0x1]
      %199 = vst [vmem:[%s147 + $0x19] sm:$0x1] %v198
      %v200 = vld [vmem:[%s139 + $0x66] sm:$0x1]
      %201 = vst [vmem:[%s147 + $0x1a] sm:$0x1] %v200
      %v202 = vld [vmem:[%s139 + $0x96] sm:$0x1]
      %203 = vst [vmem:[%s147 + $0x1b] sm:$0x1] %v202
      %v204 = vld [vmem:[%s139 + $0x7] sm:$0x1]
      %205 = vst [vmem:[%s147 + $0x1c] sm:$0x1] %v204
      %v206 = vld [vmem:[%s139 + $0x37] sm:$0x1]
      %207 = vst [vmem:[%s147 + $0x1d] sm:$0x1] %v206
      %v208 = vld [vmem:[%s139 + $0x67] sm:$0x1]
      %209 = vst [vmem:[%s147 + $0x1e] sm:$0x1] %v208
      %v210 = vld [vmem:[%s139 + $0x97] sm:$0x1]
      %211 = vst [vmem:[%s147 + $0x1f] sm:$0x1] %v210
      %v212 = vld [vmem:[%s139 + $0x8] sm:$0x1]
      %213 = vst [vmem:[%s147 + $0x20] sm:$0x1] %v212
      %v214 = vld [vmem:[%s139 + $0x38] sm:$0x1]
      %215 = vst [vmem:[%s147 + $0x21] sm:$0x1] %v214
      %v216 = vld [vmem:[%s139 + $0x68] sm:$0x1]
      %217 = vst [vmem:[%s147 + $0x22] sm:$0x1] %v216
      %v218 = vld [vmem:[%s139 + $0x98] sm:$0x1]
      %219 = vst [vmem:[%s147 + $0x23] sm:$0x1] %v218
      %v220 = vld [vmem:[%s139 + $0x9] sm:$0x1]
      %221 = vst [vmem:[%s147 + $0x24] sm:$0x1] %v220
      %v222 = vld [vmem:[%s139 + $0x39] sm:$0x1]
      %223 = vst [vmem:[%s147 + $0x25] sm:$0x1] %v222
      %v224 = vld [vmem:[%s139 + $0x69] sm:$0x1]
      %225 = vst [vmem:[%s147 + $0x26] sm:$0x1] %v224
      %v226 = vld [vmem:[%s139 + $0x99] sm:$0x1]
      %227 = vst [vmem:[%s147 + $0x27] sm:$0x1] %v226
      %v228 = vld [vmem:[%s139 + $0xa] sm:$0x1]
      %229 = vst [vmem:[%s147 + $0x28] sm:$0x1] %v228
      %v230 = vld [vmem:[%s139 + $0x3a] sm:$0x1]
      %231 = vst [vmem:[%s147 + $0x29] sm:$0x1] %v230
      %v232 = vld [vmem:[%s139 + $0x6a] sm:$0x1]
      %233 = vst [vmem:[%s147 + $0x2a] sm:$0x1] %v232
      %v234 = vld [vmem:[%s139 + $0x9a] sm:$0x1]
      %235 = vst [vmem:[%s147 + $0x2b] sm:$0x1] %v234
      %v236 = vld [vmem:[%s139 + $0xb] sm:$0x1]
      %237 = vst [vmem:[%s147 + $0x2c] sm:$0x1] %v236
      %v238 = vld [vmem:[%s139 + $0x3b] sm:$0x1]
      %239 = vst [vmem:[%s147 + $0x2d] sm:$0x1] %v238
      %v240 = vld [vmem:[%s139 + $0x6b] sm:$0x1]
      %241 = vst [vmem:[%s147 + $0x2e] sm:$0x1] %v240
      %v242 = vld [vmem:[%s139 + $0x9b] sm:$0x1]
      %243 = vst [vmem:[%s147 + $0x2f] sm:$0x1] %v242
      %v244 = vld [vmem:[%s139 + $0xc] sm:$0x1]
      %245 = vst [vmem:[%s147 + $0x30] sm:$0x1] %v244
      %v246 = vld [vmem:[%s139 + $0x3c] sm:$0x1]
      %247 = vst [vmem:[%s147 + $0x31] sm:$0x1] %v246
      %v248 = vld [vmem:[%s139 + $0x6c] sm:$0x1]
      %249 = vst [vmem:[%s147 + $0x32] sm:$0x1] %v248
      %v250 = vld [vmem:[%s139 + $0x9c] sm:$0x1]
      %251 = vst [vmem:[%s147 + $0x33] sm:$0x1] %v250
      %v252 = vld [vmem:[%s139 + $0xd] sm:$0x1]
      %253 = vst [vmem:[%s147 + $0x34] sm:$0x1] %v252
      %v254 = vld [vmem:[%s139 + $0x3d] sm:$0x1]
      %255 = vst [vmem:[%s147 + $0x35] sm:$0x1] %v254
      %v256 = vld [vmem:[%s139 + $0x6d] sm:$0x1]
      %257 = vst [vmem:[%s147 + $0x36] sm:$0x1] %v256
      %v258 = vld [vmem:[%s139 + $0x9d] sm:$0x1]
      %259 = vst [vmem:[%s147 + $0x37] sm:$0x1] %v258
      %v260 = vld [vmem:[%s139 + $0xe] sm:$0x1]
      %261 = vst [vmem:[%s147 + $0x38] sm:$0x1] %v260
      %v262 = vld [vmem:[%s139 + $0x3e] sm:$0x1]
      %263 = vst [vmem:[%s147 + $0x39] sm:$0x1] %v262
      %v264 = vld [vmem:[%s139 + $0x6e] sm:$0x1]
      %265 = vst [vmem:[%s147 + $0x3a] sm:$0x1] %v264
      %v266 = vld [vmem:[%s139 + $0x9e] sm:$0x1]
      %267 = vst [vmem:[%s147 + $0x3b] sm:$0x1] %v266
      %v268 = vld [vmem:[%s139 + $0xf] sm:$0x1]
      %269 = vst [vmem:[%s147 + $0x3c] sm:$0x1] %v268
      %v270 = vld [vmem:[%s139 + $0x3f] sm:$0x1]
      %271 = vst [vmem:[%s147 + $0x3d] sm:$0x1] %v270
      %v272 = vld [vmem:[%s139 + $0x6f] sm:$0x1]
      %273 = vst [vmem:[%s147 + $0x3e] sm:$0x1] %v272
      %v274 = vld [vmem:[%s139 + $0x9f] sm:$0x1]
      %275 = vst [vmem:[%s147 + $0x3f] sm:$0x1] %v274
      %v276 = vld [vmem:[%s139 + $0x10] sm:$0x1]
      %277 = vst [vmem:[%s147 + $0x40] sm:$0x1] %v276
      %v278 = vld [vmem:[%s139 + $0x40] sm:$0x1]
      %279 = vst [vmem:[%s147 + $0x41] sm:$0x1] %v278
      %v280 = vld [vmem:[%s139 + $0x70] sm:$0x1]
      %281 = vst [vmem:[%s147 + $0x42] sm:$0x1] %v280
      %v282 = vld [vmem:[%s139 + $0xa0] sm:$0x1]
      %283 = vst [vmem:[%s147 + $0x43] sm:$0x1] %v282
      %v284 = vld [vmem:[%s139 + $0x11] sm:$0x1]
      %285 = vst [vmem:[%s147 + $0x44] sm:$0x1] %v284
      %v286 = vld [vmem:[%s139 + $0x41] sm:$0x1]
      %287 = vst [vmem:[%s147 + $0x45] sm:$0x1] %v286
      %v288 = vld [vmem:[%s139 + $0x71] sm:$0x1]
      %289 = vst [vmem:[%s147 + $0x46] sm:$0x1] %v288
      %v290 = vld [vmem:[%s139 + $0xa1] sm:$0x1]
      %291 = vst [vmem:[%s147 + $0x47] sm:$0x1] %v290
      %v292 = vld [vmem:[%s139 + $0x12] sm:$0x1]
      %293 = vst [vmem:[%s147 + $0x48] sm:$0x1] %v292
      %v294 = vld [vmem:[%s139 + $0x42] sm:$0x1]
      %295 = vst [vmem:[%s147 + $0x49] sm:$0x1] %v294
      %v296 = vld [vmem:[%s139 + $0x72] sm:$0x1]
      %297 = vst [vmem:[%s147 + $0x4a] sm:$0x1] %v296
      %v298 = vld [vmem:[%s139 + $0xa2] sm:$0x1]
      %299 = vst [vmem:[%s147 + $0x4b] sm:$0x1] %v298
      %v300 = vld [vmem:[%s139 + $0x13] sm:$0x1]
      %301 = vst [vmem:[%s147 + $0x4c] sm:$0x1] %v300
      %v302 = vld [vmem:[%s139 + $0x43] sm:$0x1]
      %303 = vst [vmem:[%s147 + $0x4d] sm:$0x1] %v302
      %v304 = vld [vmem:[%s139 + $0x73] sm:$0x1]
      %305 = vst [vmem:[%s147 + $0x4e] sm:$0x1] %v304
      %v306 = vld [vmem:[%s139 + $0xa3] sm:$0x1]
      %307 = vst [vmem:[%s147 + $0x4f] sm:$0x1] %v306
      %v308 = vld [vmem:[%s139 + $0x14] sm:$0x1]
      %309 = vst [vmem:[%s147 + $0x50] sm:$0x1] %v308
      %v310 = vld [vmem:[%s139 + $0x44] sm:$0x1]
      %311 = vst [vmem:[%s147 + $0x51] sm:$0x1] %v310
      %v312 = vld [vmem:[%s139 + $0x74] sm:$0x1]
      %313 = vst [vmem:[%s147 + $0x52] sm:$0x1] %v312
      %v314 = vld [vmem:[%s139 + $0xa4] sm:$0x1]
      %315 = vst [vmem:[%s147 + $0x53] sm:$0x1] %v314
      %v316 = vld [vmem:[%s139 + $0x15] sm:$0x1]
      %317 = vst [vmem:[%s147 + $0x54] sm:$0x1] %v316
      %v318 = vld [vmem:[%s139 + $0x45] sm:$0x1]
      %319 = vst [vmem:[%s147 + $0x55] sm:$0x1] %v318
      %v320 = vld [vmem:[%s139 + $0x75] sm:$0x1]
      %321 = vst [vmem:[%s147 + $0x56] sm:$0x1] %v320
      %v322 = vld [vmem:[%s139 + $0xa5] sm:$0x1]
      %323 = vst [vmem:[%s147 + $0x57] sm:$0x1] %v322
      %v324 = vld [vmem:[%s139 + $0x16] sm:$0x1]
      %325 = vst [vmem:[%s147 + $0x58] sm:$0x1] %v324
      %v326 = vld [vmem:[%s139 + $0x46] sm:$0x1]
      %327 = vst [vmem:[%s147 + $0x59] sm:$0x1] %v326
      %v328 = vld [vmem:[%s139 + $0x76] sm:$0x1]
      %329 = vst [vmem:[%s147 + $0x5a] sm:$0x1] %v328
      %v330 = vld [vmem:[%s139 + $0xa6] sm:$0x1]
      %331 = vst [vmem:[%s147 + $0x5b] sm:$0x1] %v330
      %v332 = vld [vmem:[%s139 + $0x17] sm:$0x1]
      %333 = vst [vmem:[%s147 + $0x5c] sm:$0x1] %v332
      %v334 = vld [vmem:[%s139 + $0x47] sm:$0x1]
      %335 = vst [vmem:[%s147 + $0x5d] sm:$0x1] %v334
      %v336 = vld [vmem:[%s139 + $0x77] sm:$0x1]
      %337 = vst [vmem:[%s147 + $0x5e] sm:$0x1] %v336
      %v338 = vld [vmem:[%s139 + $0xa7] sm:$0x1]
      %339 = vst [vmem:[%s147 + $0x5f] sm:$0x1] %v338
      %v340 = vld [vmem:[%s139 + $0x18] sm:$0x1]
      %341 = vst [vmem:[%s147 + $0x60] sm:$0x1] %v340
      %v342 = vld [vmem:[%s139 + $0x48] sm:$0x1]
      %343 = vst [vmem:[%s147 + $0x61] sm:$0x1] %v342
      %v344 = vld [vmem:[%s139 + $0x78] sm:$0x1]
      %345 = vst [vmem:[%s147 + $0x62] sm:$0x1] %v344
      %v346 = vld [vmem:[%s139 + $0xa8] sm:$0x1]
      %347 = vst [vmem:[%s147 + $0x63] sm:$0x1] %v346
      %v348 = vld [vmem:[%s139 + $0x19] sm:$0x1]
      %349 = vst [vmem:[%s147 + $0x64] sm:$0x1] %v348
      %v350 = vld [vmem:[%s139 + $0x49] sm:$0x1]
      %351 = vst [vmem:[%s147 + $0x65] sm:$0x1] %v350
      %v352 = vld [vmem:[%s139 + $0x79] sm:$0x1]
      %353 = vst [vmem:[%s147 + $0x66] sm:$0x1] %v352
      %v354 = vld [vmem:[%s139 + $0xa9] sm:$0x1]
      %355 = vst [vmem:[%s147 + $0x67] sm:$0x1] %v354
      %v356 = vld [vmem:[%s139 + $0x1a] sm:$0x1]
      %357 = vst [vmem:[%s147 + $0x68] sm:$0x1] %v356
      %v358 = vld [vmem:[%s139 + $0x4a] sm:$0x1]
      %359 = vst [vmem:[%s147 + $0x69] sm:$0x1] %v358
      %v360 = vld [vmem:[%s139 + $0x7a] sm:$0x1]
      %361 = vst [vmem:[%s147 + $0x6a] sm:$0x1] %v360
      %v362 = vld [vmem:[%s139 + $0xaa] sm:$0x1]
      %363 = vst [vmem:[%s147 + $0x6b] sm:$0x1] %v362
      %v364 = vld [vmem:[%s139 + $0x1b] sm:$0x1]
      %365 = vst [vmem:[%s147 + $0x6c] sm:$0x1] %v364
      %v366 = vld [vmem:[%s139 + $0x4b] sm:$0x1]
      %367 = vst [vmem:[%s147 + $0x6d] sm:$0x1] %v366
      %v368 = vld [vmem:[%s139 + $0x7b] sm:$0x1]
      %369 = vst [vmem:[%s147 + $0x6e] sm:$0x1] %v368
      %v370 = vld [vmem:[%s139 + $0xab] sm:$0x1]
      %371 = vst [vmem:[%s147 + $0x6f] sm:$0x1] %v370
      %v372 = vld [vmem:[%s139 + $0x1c] sm:$0x1]
      %373 = vst [vmem:[%s147 + $0x70] sm:$0x1] %v372
      %v374 = vld [vmem:[%s139 + $0x4c] sm:$0x1]
      %375 = vst [vmem:[%s147 + $0x71] sm:$0x1] %v374
      %v376 = vld [vmem:[%s139 + $0x7c] sm:$0x1]
      %377 = vst [vmem:[%s147 + $0x72] sm:$0x1] %v376
      %v378 = vld [vmem:[%s139 + $0xac] sm:$0x1]
      %379 = vst [vmem:[%s147 + $0x73] sm:$0x1] %v378
      %v380 = vld [vmem:[%s139 + $0x1d] sm:$0x1]
      %381 = vst [vmem:[%s147 + $0x74] sm:$0x1] %v380
      %v382 = vld [vmem:[%s139 + $0x4d] sm:$0x1]
      %383 = vst [vmem:[%s147 + $0x75] sm:$0x1] %v382
      %v384 = vld [vmem:[%s139 + $0x7d] sm:$0x1]
      %385 = vst [vmem:[%s147 + $0x76] sm:$0x1] %v384
      %v386 = vld [vmem:[%s139 + $0xad] sm:$0x1]
      %387 = vst [vmem:[%s147 + $0x77] sm:$0x1] %v386
      %v388 = vld [vmem:[%s139 + $0x1e] sm:$0x1]
      %389 = vst [vmem:[%s147 + $0x78] sm:$0x1] %v388
      %v390 = vld [vmem:[%s139 + $0x4e] sm:$0x1]
      %391 = vst [vmem:[%s147 + $0x79] sm:$0x1] %v390
      %v392 = vld [vmem:[%s139 + $0x7e] sm:$0x1]
      %393 = vst [vmem:[%s147 + $0x7a] sm:$0x1] %v392
      %v394 = vld [vmem:[%s139 + $0xae] sm:$0x1]
      %395 = vst [vmem:[%s147 + $0x7b] sm:$0x1] %v394
      %v396 = vld [vmem:[%s139 + $0x1f] sm:$0x1]
      %397 = vst [vmem:[%s147 + $0x7c] sm:$0x1] %v396
      %v398 = vld [vmem:[%s139 + $0x4f] sm:$0x1]
      %399 = vst [vmem:[%s147 + $0x7d] sm:$0x1] %v398
      %v400 = vld [vmem:[%s139 + $0x7f] sm:$0x1]
      %401 = vst [vmem:[%s147 + $0x7e] sm:$0x1] %v400
      %v402 = vld [vmem:[%s139 + $0xaf] sm:$0x1]
      %403 = vst [vmem:[%s147 + $0x7f] sm:$0x1] %v402
      %v404 = vld [vmem:[%s139 + $0x20] sm:$0x1]
      %405 = vst [vmem:[%s147 + $0x80] sm:$0x1] %v404
      %v406 = vld [vmem:[%s139 + $0x50] sm:$0x1]
      %407 = vst [vmem:[%s147 + $0x81] sm:$0x1] %v406
      %v408 = vld [vmem:[%s139 + $0x80] sm:$0x1]
      %409 = vst [vmem:[%s147 + $0x82] sm:$0x1] %v408
      %v410 = vld [vmem:[%s139 + $0xb0] sm:$0x1]
      %411 = vst [vmem:[%s147 + $0x83] sm:$0x1] %v410
      %v412 = vld [vmem:[%s139 + $0x21] sm:$0x1]
      %413 = vst [vmem:[%s147 + $0x84] sm:$0x1] %v412
      %v414 = vld [vmem:[%s139 + $0x51] sm:$0x1]
      %415 = vst [vmem:[%s147 + $0x85] sm:$0x1] %v414
      %v416 = vld [vmem:[%s139 + $0x81] sm:$0x1]
      %417 = vst [vmem:[%s147 + $0x86] sm:$0x1] %v416
      %v418 = vld [vmem:[%s139 + $0xb1] sm:$0x1]
      %419 = vst [vmem:[%s147 + $0x87] sm:$0x1] %v418
      %v420 = vld [vmem:[%s139 + $0x22] sm:$0x1]
      %421 = vst [vmem:[%s147 + $0x88] sm:$0x1] %v420
      %v422 = vld [vmem:[%s139 + $0x52] sm:$0x1]
      %423 = vst [vmem:[%s147 + $0x89] sm:$0x1] %v422
      %v424 = vld [vmem:[%s139 + $0x82] sm:$0x1]
      %425 = vst [vmem:[%s147 + $0x8a] sm:$0x1] %v424
      %v426 = vld [vmem:[%s139 + $0xb2] sm:$0x1]
      %427 = vst [vmem:[%s147 + $0x8b] sm:$0x1] %v426
      %v428 = vld [vmem:[%s139 + $0x23] sm:$0x1]
      %429 = vst [vmem:[%s147 + $0x8c] sm:$0x1] %v428
      %v430 = vld [vmem:[%s139 + $0x53] sm:$0x1]
      %431 = vst [vmem:[%s147 + $0x8d] sm:$0x1] %v430
      %v432 = vld [vmem:[%s139 + $0x83] sm:$0x1]
      %433 = vst [vmem:[%s147 + $0x8e] sm:$0x1] %v432
      %v434 = vld [vmem:[%s139 + $0xb3] sm:$0x1]
      %435 = vst [vmem:[%s147 + $0x8f] sm:$0x1] %v434
      %v436 = vld [vmem:[%s139 + $0x24] sm:$0x1]
      %437 = vst [vmem:[%s147 + $0x90] sm:$0x1] %v436
      %v438 = vld [vmem:[%s139 + $0x54] sm:$0x1]
      %439 = vst [vmem:[%s147 + $0x91] sm:$0x1] %v438
      %v440 = vld [vmem:[%s139 + $0x84] sm:$0x1]
      %441 = vst [vmem:[%s147 + $0x92] sm:$0x1] %v440
      %v442 = vld [vmem:[%s139 + $0xb4] sm:$0x1]
      %443 = vst [vmem:[%s147 + $0x93] sm:$0x1] %v442
      %v444 = vld [vmem:[%s139 + $0x25] sm:$0x1]
      %445 = vst [vmem:[%s147 + $0x94] sm:$0x1] %v444
      %v446 = vld [vmem:[%s139 + $0x55] sm:$0x1]
      %447 = vst [vmem:[%s147 + $0x95] sm:$0x1] %v446
      %v448 = vld [vmem:[%s139 + $0x85] sm:$0x1]
      %449 = vst [vmem:[%s147 + $0x96] sm:$0x1] %v448
      %v450 = vld [vmem:[%s139 + $0xb5] sm:$0x1]
      %451 = vst [vmem:[%s147 + $0x97] sm:$0x1] %v450
      %v452 = vld [vmem:[%s139 + $0x26] sm:$0x1]
      %453 = vst [vmem:[%s147 + $0x98] sm:$0x1] %v452
      %v454 = vld [vmem:[%s139 + $0x56] sm:$0x1]
      %455 = vst [vmem:[%s147 + $0x99] sm:$0x1] %v454
      %v456 = vld [vmem:[%s139 + $0x86] sm:$0x1]
      %457 = vst [vmem:[%s147 + $0x9a] sm:$0x1] %v456
      %v458 = vld [vmem:[%s139 + $0xb6] sm:$0x1]
      %459 = vst [vmem:[%s147 + $0x9b] sm:$0x1] %v458
      %v460 = vld [vmem:[%s139 + $0x27] sm:$0x1]
      %461 = vst [vmem:[%s147 + $0x9c] sm:$0x1] %v460
      %v462 = vld [vmem:[%s139 + $0x57] sm:$0x1]
      %463 = vst [vmem:[%s147 + $0x9d] sm:$0x1] %v462
      %v464 = vld [vmem:[%s139 + $0x87] sm:$0x1]
      %465 = vst [vmem:[%s147 + $0x9e] sm:$0x1] %v464
      %v466 = vld [vmem:[%s139 + $0xb7] sm:$0x1]
      %467 = vst [vmem:[%s147 + $0x9f] sm:$0x1] %v466
      %v468 = vld [vmem:[%s139 + $0x28] sm:$0x1]
      %469 = vst [vmem:[%s147 + $0xa0] sm:$0x1] %v468
      %v470 = vld [vmem:[%s139 + $0x58] sm:$0x1]
      %471 = vst [vmem:[%s147 + $0xa1] sm:$0x1] %v470
      %v472 = vld [vmem:[%s139 + $0x88] sm:$0x1]
      %473 = vst [vmem:[%s147 + $0xa2] sm:$0x1] %v472
      %v474 = vld [vmem:[%s139 + $0xb8] sm:$0x1]
      %475 = vst [vmem:[%s147 + $0xa3] sm:$0x1] %v474
      %v476 = vld [vmem:[%s139 + $0x29] sm:$0x1]
      %477 = vst [vmem:[%s147 + $0xa4] sm:$0x1] %v476
      %v478 = vld [vmem:[%s139 + $0x59] sm:$0x1]
      %479 = vst [vmem:[%s147 + $0xa5] sm:$0x1] %v478
      %v480 = vld [vmem:[%s139 + $0x89] sm:$0x1]
      %481 = vst [vmem:[%s147 + $0xa6] sm:$0x1] %v480
      %v482 = vld [vmem:[%s139 + $0xb9] sm:$0x1]
      %483 = vst [vmem:[%s147 + $0xa7] sm:$0x1] %v482
      %v484 = vld [vmem:[%s139 + $0x2a] sm:$0x1]
      %485 = vst [vmem:[%s147 + $0xa8] sm:$0x1] %v484
      %v486 = vld [vmem:[%s139 + $0x5a] sm:$0x1]
      %487 = vst [vmem:[%s147 + $0xa9] sm:$0x1] %v486
      %v488 = vld [vmem:[%s139 + $0x8a] sm:$0x1]
      %489 = vst [vmem:[%s147 + $0xaa] sm:$0x1] %v488
      %v490 = vld [vmem:[%s139 + $0xba] sm:$0x1]
      %491 = vst [vmem:[%s147 + $0xab] sm:$0x1] %v490
      %v492 = vld [vmem:[%s139 + $0x2b] sm:$0x1]
      %493 = vst [vmem:[%s147 + $0xac] sm:$0x1] %v492
      %v494 = vld [vmem:[%s139 + $0x5b] sm:$0x1]
      %495 = vst [vmem:[%s147 + $0xad] sm:$0x1] %v494
      %v496 = vld [vmem:[%s139 + $0x8b] sm:$0x1]
      %497 = vst [vmem:[%s147 + $0xae] sm:$0x1] %v496
      %v498 = vld [vmem:[%s139 + $0xbb] sm:$0x1]
      %499 = vst [vmem:[%s147 + $0xaf] sm:$0x1] %v498
      %v500 = vld [vmem:[%s139 + $0x2c] sm:$0x1]
      %501 = vst [vmem:[%s147 + $0xb0] sm:$0x1] %v500
      %v502 = vld [vmem:[%s139 + $0x5c] sm:$0x1]
      %503 = vst [vmem:[%s147 + $0xb1] sm:$0x1] %v502
      %v504 = vld [vmem:[%s139 + $0x8c] sm:$0x1]
      %505 = vst [vmem:[%s147 + $0xb2] sm:$0x1] %v504
      %v506 = vld [vmem:[%s139 + $0xbc] sm:$0x1]
      %507 = vst [vmem:[%s147 + $0xb3] sm:$0x1] %v506
      %v508 = vld [vmem:[%s139 + $0x2d] sm:$0x1]
      %509 = vst [vmem:[%s147 + $0xb4] sm:$0x1] %v508
      %v510 = vld [vmem:[%s139 + $0x5d] sm:$0x1]
      %511 = vst [vmem:[%s147 + $0xb5] sm:$0x1] %v510
      %v512 = vld [vmem:[%s139 + $0x8d] sm:$0x1]
      %513 = vst [vmem:[%s147 + $0xb6] sm:$0x1] %v512
      %v514 = vld [vmem:[%s139 + $0xbd] sm:$0x1]
      %515 = vst [vmem:[%s147 + $0xb7] sm:$0x1] %v514
      %v516 = vld [vmem:[%s139 + $0x2e] sm:$0x1]
      %517 = vst [vmem:[%s147 + $0xb8] sm:$0x1] %v516
      %v518 = vld [vmem:[%s139 + $0x5e] sm:$0x1]
      %519 = vst [vmem:[%s147 + $0xb9] sm:$0x1] %v518
      %v520 = vld [vmem:[%s139 + $0x8e] sm:$0x1]
      %521 = vst [vmem:[%s147 + $0xba] sm:$0x1] %v520
      %v522 = vld [vmem:[%s139 + $0xbe] sm:$0x1]
      %523 = vst [vmem:[%s147 + $0xbb] sm:$0x1] %v522
      %v524 = vld [vmem:[%s139 + $0x2f] sm:$0x1]
      %525 = vst [vmem:[%s147 + $0xbc] sm:$0x1] %v524
      %v526 = vld [vmem:[%s139 + $0x5f] sm:$0x1]
      %527 = vst [vmem:[%s147 + $0xbd] sm:$0x1] %v526
      %v528 = vld [vmem:[%s139 + $0x8f] sm:$0x1]
      %529 = vst [vmem:[%s147 + $0xbe] sm:$0x1] %v528
      %v530 = vld [vmem:[%s139 + $0xbf] sm:$0x1]
      %531 = vst [vmem:[%s147 + $0xbf] sm:$0x1] %v530
      %p532 = scmp.lt.s32.totalorder %s16, 1
      %s533 = scalar_select %p532, %s16, 1
      %p534 = scmp.lt.s32.totalorder %s17, 0
      %s535 = scalar_select %p534, %s17, 0
      %s536 = smul.addr %s533, 24
      %s537 = sadd.s32 %s535, %s536
      %s538 = smul.addr %s537, 8
      %s539 = scalar_lea.vmem %s1, %s538
      // Predicated region
      $region25: #{channel_shuffle_pallas.1} parent=23 // pred_check
        %p540 = pneg %p72
      $region26: #{channel_shuffle_pallas.1} parent=23 // pred_check_branch
        %542 = sbr.rel (%p540) target = $region28
      $region27: #{channel_shuffle_pallas.1} parent=23 // pred_region
        _
      $region28: #{channel_shuffle_pallas.1} parent=23 // pred_fallthru
        _
    $region24: #{channel_shuffle_pallas.1} parent=5 // pred_fallthru
      _
    %p543 = scmp.le.s32.totalorder 2, %s7
    // Predicated region
    $region29: #{channel_shuffle_pallas.1} parent=5 // pred_check
      %p544 = pneg %p543
    $region30: #{channel_shuffle_pallas.1} parent=5 // pred_check_branch
      %546 = sbr.rel (%p544) target = $region32
    $region31: #{channel_shuffle_pallas.1} parent=5 // pred_region
      %s547 = ssub.s32 %s7, 2
      // Predicated region
      $region33: #{channel_shuffle_pallas.1} parent=31 // pred_check
        %p548 = pneg %p78
      $region34: #{channel_shuffle_pallas.1} parent=31 // pred_check_branch
        %550 = sbr.rel (%p548) target = $region36
      $region35: #{channel_shuffle_pallas.1} parent=31 // pred_region
        %p551 = scmp.lt.s32.totalorder %s18, 1
        %s552 = scalar_select %p551, %s18, 1
        %p553 = scmp.lt.s32.totalorder %s19, 0
        %s554 = scalar_select %p553, %s19, 0
        %s555 = smul.addr %s552, 24
        %s556 = sadd.s32 %s554, %s555
        %s557 = smul.addr %s556, 8
        %s558 = scalar_lea.vmem %s1, %s557
      $region36: #{channel_shuffle_pallas.1} parent=31 // pred_fallthru
        _
    $region32: #{channel_shuffle_pallas.1} parent=5 // pred_fallthru
      _
  $region6: #{channel_shuffle_pallas.1} parent=0 // loop_footer
    %s11 = sadd.s32 1, %s7
  $region7: #{channel_shuffle_pallas.1} parent=0 // loop_footer_branch
    %6 = sbr.rel target = $region3
  $region8: #{channel_shuffle_pallas.1} parent=0 // loop_exit
    _

</llo_original>
